<compile_context>
chip_gen: v7x
topology: tpu7x:2x2x1
jax: 0.10.0
libtpu: 0.0.40
codegen_flags: <defaults>
</compile_context>

<pallas_src>
import math

import jax
import jax.numpy as jnp
from jax import lax
from jax.experimental import pallas as pl
from jax.experimental.pallas import tpu as pltpu


# ----------------------------- helpers ---------------------------------------

def _round_up(x, m):
    return ((x + m - 1) // m) * m


def _vmem_limit(entries, *, slack_bytes=2 << 20, floor_bytes=12 << 20):
    """Right-sized scoped-VMEM budget.

    `entries` is a list of (shape, dtype, n_buffers); streamed blocks are counted with
    their pipelining depth, resident blocks with <=2 buffers, scratch once.
    """
    total = slack_bytes
    for shape, dtype, n_bufs in entries:
        total += n_bufs * math.prod(int(d) for d in shape) * jnp.dtype(dtype).itemsize
    return int(max(total, floor_bytes))


def _normalized_adj(adj):
    """A_hat = D^-1/2 A D^-1/2 (in-degree = row sum of adj[dst, src]); folded once."""
    degs = jnp.sum(adj, axis=1, keepdims=True)
    norm = jnp.where(degs > 0, lax.rsqrt(jnp.maximum(degs, 1e-12)), 0.0)
    return norm * adj * norm.T


# ----------------------------- Pallas kernels --------------------------------

def _make_mlp_kernel(n_valid):
    """Fused 2-layer MLP (Linear+ReLU, Linear) + hop-0 sigmoid gate, per row tile.

    Outputs: h as bf16 (MXU operand for the propagation hops) and the gated hop-0
    term in f32. Padded rows (>= n_valid) are zeroed explicitly.
    """
    def mlp_kernel(x_ref, w1_ref, b1_ref, w2_ref, b2_ref, s_ref, h_bf_ref, acc0_ref):
        # layer 1: Linear + ReLU   (dropout p=0 -> identity)
        h = jnp.dot(x_ref[...], w1_ref[...], preferred_element_type=jnp.float32)
        h = jnp.maximum(h + b1_ref[...], 0.0)
        # layer 2: Linear
        h = jnp.dot(h, w2_ref[...], preferred_element_type=jnp.float32) + b2_ref[...]

        # zero padded rows (bias broadcast would otherwise make them nonzero)
        tm = h_bf_ref.shape[0]
        rows = pl.program_id(0) * tm + lax.broadcasted_iota(jnp.int32, (tm, 1), 0)
        h = jnp.where(rows < n_valid, h, 0.0)

        # hop-0 gate: sigmoid(<h, s>) * h   (XLU reduce + EUP sigmoid, f32 epilogue)
        score = jax.nn.sigmoid(jnp.sum(h * s_ref[...], axis=-1, keepdims=True))
        h_bf_ref[...] = h.astype(h_bf_ref.dtype)
        acc0_ref[...] = score * h

    return mlp_kernel


def _make_hops_kernel(*, tm, tk, n_pad, a_resident):
    """All K propagation hops fused into one kernel.

    grid = (hop t, row tile i, contraction tile k).  h lives in a VMEM ping-pong buffer
    (bf16, 2 * n_pad rows); the DAGNN running sum lives in the VMEM-resident output
    block and is written back to HBM once at the very end.
    """
    def hops_kernel(a_ref, h0_ref, acc0_ref, s_ref, out_ref, h_buf, acc_tile):
        t = pl.program_id(0)
        i = pl.program_id(1)
        k = pl.program_id(2)
        n_hops = pl.num_programs(0)
        nk = pl.num_programs(2)

        # one-time init at the very first grid step: stage h0 (bf16) into slot 0 of
        # the ping-pong buffer and seed the resident output with the hop-0 term.
        @pl.when((t == 0) & (i == 0) & (k == 0))
        def _():
            h_buf[pl.ds(0, n_pad), :] = h0_ref[...]
            out_ref[...] = acc0_ref[...]

        @pl.when(k == 0)
        def _():
            acc_tile[...] = jnp.zeros_like(acc_tile)

        cur = lax.rem(t, 2)                      # read slot; (1 - cur) is the write slot
        read_row = pl.multiple_of(cur * n_pad + k * tk, tk)
        h_panel = h_buf[pl.ds(read_row, tk), :]  # bf16 MXU operand

        if a_resident:
            a_tile = a_ref[pl.ds(pl.multiple_of(i * tm, tm), tm),
                           pl.ds(pl.multiple_of(k * tk, tk), tk)]
        else:
            a_tile = a_ref[...]

        acc_tile[...] += jnp.dot(a_tile, h_panel, preferred_element_type=jnp.float32)

        @pl.when(k == nk - 1)
        def _():
            h_new = acc_tile[...]                 # f32 epilogue
            score = jax.nn.sigmoid(
                jnp.sum(h_new * s_ref[...], axis=-1, keepdims=True))
            rows = pl.ds(pl.multiple_of(i * tm, tm), tm)
            out_ref[rows, :] += score * h_new     # running DAGNN sum (VMEM-resident)

            # stage h for the next hop; skip the dead store on the final hop
            @pl.when(t < n_hops - 1)
            def _():
                write_row = pl.multiple_of((1 - cur) * n_pad + i * tm, tm)
                h_buf[pl.ds(write_row, tm), :] = h_new.astype(h_buf.dtype)

    return hops_kernel


# ------------------------------ wrappers --------------------------------------

def mlp_hop0(x_p, w1_p, b1_p, w2_p, b2_p, s_row, n_valid, *, tm=512):
    n_pad, in_p = x_p.shape
    hid_p = w1_p.shape[1]
    f_p = w2_p.shape[1]
    assert n_pad % tm == 0

    vmem = _vmem_limit([
        ((tm, in_p), jnp.float32, 2),      # x row tile (streamed, double-buffered)
        ((in_p, hid_p), jnp.float32, 2),   # W1 (resident)
        ((1, hid_p), jnp.float32, 2),      # b1
        ((hid_p, f_p), jnp.float32, 2),    # W2 (resident)
        ((1, f_p), jnp.float32, 2),        # b2
        ((1, f_p), jnp.float32, 2),        # s
        ((tm, f_p), jnp.bfloat16, 2),      # h (bf16) out
        ((tm, f_p), jnp.float32, 2),       # gated hop-0 term out
    ])

    return pl.pallas_call(
        _make_mlp_kernel(n_valid),
        out_shape=(jax.ShapeDtypeStruct((n_pad, f_p), jnp.bfloat16),
                   jax.ShapeDtypeStruct((n_pad, f_p), jnp.float32)),
        grid_spec=pltpu.PrefetchScalarGridSpec(
            num_scalar_prefetch=0,
            grid=(n_pad // tm,),
            in_specs=[
                pl.BlockSpec((tm, in_p), lambda i: (i, 0)),      # x row tile
                pl.BlockSpec((in_p, hid_p), lambda i: (0, 0)),   # W1 (resident)
                pl.BlockSpec((1, hid_p), lambda i: (0, 0)),      # b1
                pl.BlockSpec((hid_p, f_p), lambda i: (0, 0)),    # W2 (resident)
                pl.BlockSpec((1, f_p), lambda i: (0, 0)),        # b2
                pl.BlockSpec((1, f_p), lambda i: (0, 0)),        # s (gate vector)
            ],
            out_specs=[
                pl.BlockSpec((tm, f_p), lambda i: (i, 0)),       # h (bf16)
                pl.BlockSpec((tm, f_p), lambda i: (i, 0)),       # gated hop-0 term
            ],
        ),
        compiler_params=pltpu.CompilerParams(
            dimension_semantics=("parallel",),
            vmem_limit_bytes=vmem,
        ),
    )(x_p, w1_p, b1_p, w2_p, b2_p, s_row)


def _a_stream_spec(tm, tk):
    idx = lambda t, i, k: (i, k)
    try:
        return pl.BlockSpec((tm, tk), idx, pipeline_mode=pl.Buffered(3))
    except (TypeError, AttributeError):
        return pl.BlockSpec((tm, tk), idx)


def dagnn_hops(a_hat_bf16, h0_bf16, acc0, s_row, k_hops, *, tm=256, tk=512,
               a_resident_budget=20 << 20):
    """Run all k propagation hops in one pallas_call; returns the gated DAGNN sum."""
    n_pad, f_p = acc0.shape
    assert n_pad % tm == 0 and n_pad % tk == 0

    # Keep A_hat fully VMEM-resident (read once for all hops) only when it fits a
    # conservative bf16 budget with headroom under v7x's 64 MiB/TC.
    a_resident = (n_pad * n_pad * 2) <= a_resident_budget
    if a_resident:
        a_spec = pl.BlockSpec((n_pad, n_pad), lambda t, i, k: (0, 0))
        a_entry = ((n_pad, n_pad), jnp.bfloat16, 2)
    else:
        a_spec = _a_stream_spec(tm, tk)
        a_entry = ((tm, tk), jnp.bfloat16, 4)    # up to Buffered(3) + in-flight

    vmem = _vmem_limit([
        a_entry,
        ((n_pad, f_p), jnp.bfloat16, 2),         # h0 (resident input)
        ((n_pad, f_p), jnp.float32, 2),          # hop-0 term (resident input)
        ((1, f_p), jnp.float32, 2),              # s
        ((n_pad, f_p), jnp.float32, 2),          # resident output (single writeback)
        ((2 * n_pad, f_p), jnp.bfloat16, 1),     # h ping-pong scratch
        ((tm, f_p), jnp.float32, 1),             # per-row-tile accumulator
    ])

    return pl.pallas_call(
        _make_hops_kernel(tm=tm, tk=tk, n_pad=n_pad, a_resident=a_resident),
        out_shape=jax.ShapeDtypeStruct((n_pad, f_p), jnp.float32),
        grid_spec=pltpu.PrefetchScalarGridSpec(
            num_scalar_prefetch=0,
            grid=(k_hops, n_pad // tm, n_pad // tk),
            in_specs=[
                a_spec,                                             # A_hat (bf16)
                pl.BlockSpec((n_pad, f_p), lambda t, i, k: (0, 0)),  # h0 (resident)
                pl.BlockSpec((n_pad, f_p), lambda t, i, k: (0, 0)),  # hop-0 term
                pl.BlockSpec((1, f_p), lambda t, i, k: (0, 0)),      # s
            ],
            out_specs=pl.BlockSpec((n_pad, f_p), lambda t, i, k: (0, 0)),
            scratch_shapes=[
                pltpu.VMEM((2 * n_pad, f_p), jnp.bfloat16),   # h ping-pong
                pltpu.VMEM((tm, f_p), jnp.float32),           # matmul accumulator
            ],
        ),
        compiler_params=pltpu.CompilerParams(
            # hops carry VMEM state and the output block is shared across row tiles,
            # so every axis must stay sequential.
            dimension_semantics=("arbitrary", "arbitrary", "arbitrary"),
            vmem_limit_bytes=vmem,
        ),
    )(a_hat_bf16, h0_bf16, acc0, s_row)


def dagnn_forward(adj, feats, params, k, *, tm=256, tk=512, tm_mlp=512):
    """Full DAGNN forward. adj[dst, src] = 1.0 (dense), feats (N, in_dim)."""
    n, in_dim = feats.shape
    hid_dim = params["w1"].shape[1]
    out_dim = params["w2"].shape[1]

    lane = 128
    tile = math.lcm(math.lcm(tm, tk), tm_mlp)
    n_pad = _round_up(n, tile)
    in_p = _round_up(in_dim, lane)
    hid_p = _round_up(hid_dim, lane)
    f_p = _round_up(out_dim, lane)

    # lane/tile-dense zero padding (padded rows/cols contribute nothing; sliced off).
    x_p = jnp.zeros((n_pad, in_p), jnp.float32).at[:n, :in_dim].set(feats)
    w1_p = jnp.zeros((in_p, hid_p), jnp.float32).at[:in_dim, :hid_dim].set(params["w1"])
    b1_p = jnp.zeros((1, hid_p), jnp.float32).at[:, :hid_dim].set(params["b1"])
    w2_p = jnp.zeros((hid_p, f_p), jnp.float32).at[:hid_dim, :out_dim].set(params["w2"])
    b2_p = jnp.zeros((1, f_p), jnp.float32).at[:, :out_dim].set(params["b2"])
    s_row = jnp.zeros((1, f_p), jnp.float32).at[0, :out_dim].set(params["s"][:, 0])

    # symmetric normalization folded into the adjacency once, cast to bf16 for the MXU.
    a_hat = _normalized_adj(adj)
    a_hat_bf16 = (jnp.zeros((n_pad, n_pad), jnp.float32)
                  .at[:n, :n].set(a_hat)).astype(jnp.bfloat16)

    # fused MLP + hop-0 gate, then all k gated propagation hops in one kernel.
    h0_bf16, acc0 = mlp_hop0(x_p, w1_p, b1_p, w2_p, b2_p, s_row, n, tm=tm_mlp)
    if k <= 0:
        return acc0[:n, :out_dim]
    acc = dagnn_hops(a_hat_bf16, h0_bf16, acc0, s_row, k, tm=tm, tk=tk)
    return acc[:n, :out_dim]


# --------------------------- parameter init -----------------------------------

def xavier_uniform(key, shape, gain=1.0):
    fan_in, fan_out = shape[0], shape[1]
    bound = gain * math.sqrt(6.0 / (fan_in + fan_out))
    return jax.random.uniform(key, shape, jnp.float32, -bound, bound)


def init_params(key, in_dim, hid_dim, out_dim):
    k1, k2, k3 = jax.random.split(key, 3)
    relu_gain = math.sqrt(2.0)       # nn.init.calculate_gain('relu')
    sigmoid_gain = 1.0               # nn.init.calculate_gain('sigmoid')
    return {
        "w1": xavier_uniform(k1, (in_dim, hid_dim), gain=relu_gain),
        "b1": jnp.zeros((1, hid_dim), jnp.float32),
        "w2": xavier_uniform(k2, (hid_dim, out_dim), gain=1.0),
        "b2": jnp.zeros((1, out_dim), jnp.float32),
        "s": xavier_uniform(k3, (out_dim, 1), gain=sigmoid_gain),
    }


# --------------------------- pure-JAX references --------------------------------

def dagnn_reference(adj, feats, params, k, *, matmul_dtype=jnp.float32):
    """matmul_dtype=f32: exact PyTorch-equivalent reference.
    matmul_dtype=bf16: mirrors the kernel's bf16 MXU operands (f32 accumulation)."""
    h = jnp.maximum(feats @ params["w1"] + params["b1"], 0.0)
    h = h @ params["w2"] + params["b2"]
    a_hat = _normalized_adj(adj).astype(matmul_dtype)
    results = [h]
    for _ in range(k):
        h = jnp.dot(a_hat, h.astype(matmul_dtype),
                    preferred_element_type=jnp.float32)
        results.append(h)
    H = jnp.stack(results, axis=1)                 # (N, k+1, F)
    S = jax.nn.sigmoid(H @ params["s"])            # (N, k+1, 1)
    return jnp.squeeze(jnp.swapaxes(S, 1, 2) @ H, axis=1)


# --------------------------------- main ----------------------------------------

if __name__ == "__main__":
    # small (but non-trivially tiled) synthetic problem
    N, IN_DIM, HID_DIM, OUT_DIM, K = 300, 48, 64, 16, 4

    key = jax.random.PRNGKey(0)
    k_feat, k_adj, k_param = jax.random.split(key, 3)

    feats = jax.random.normal(k_feat, (N, IN_DIM), jnp.float32)

    # random sparse-ish directed graph with self-loops (in-degree >= 1)
    adj = jax.random.bernoulli(k_adj, p=0.05, shape=(N, N)).astype(jnp.float32)
    adj = jnp.maximum(adj, jnp.eye(N, dtype=jnp.float32))   # adj[dst, src]

    params = init_params(k_param, IN_DIM, HID_DIM, OUT_DIM)

    fwd = jax.jit(lambda a, x, p: dagnn_forward(a, x, p, K))
    out = jax.block_until_ready(fwd(adj, feats, params))

    assert out.shape == (N, OUT_DIM)
    assert bool(jnp.all(jnp.isfinite(out)))

    # strict check against a reference that mirrors the kernel's bf16 matmul operands
    ref_bf16 = dagnn_reference(adj, feats, params, K, matmul_dtype=jnp.bfloat16)
    err_bf16 = float(jnp.max(jnp.abs(out - ref_bf16)))
    assert bool(jnp.allclose(out, ref_bf16, rtol=5e-3, atol=5e-3)), err_bf16

    # sanity check against the pure-f32 PyTorch-equivalent reference
    ref_f32 = dagnn_reference(adj, feats, params, K, matmul_dtype=jnp.float32)
    err_f32 = float(jnp.max(jnp.abs(out - ref_f32)))
    assert bool(jnp.allclose(out, ref_f32, rtol=5e-2, atol=5e-2)), err_f32

    print("KERNEL_OK")
</pallas_src>

<mosaic_0001>
module attributes {stable_mosaic.version = 11 : i64} {
  func.func @mlp_kernel(%arg0: i32, %arg1: memref<512x128xf32, #tpu.memory_space<vmem>>, %arg2: memref<128x128xf32, #tpu.memory_space<vmem>>, %arg3: memref<1x128xf32, #tpu.memory_space<vmem>>, %arg4: memref<128x128xf32, #tpu.memory_space<vmem>>, %arg5: memref<1x128xf32, #tpu.memory_space<vmem>>, %arg6: memref<1x128xf32, #tpu.memory_space<vmem>>, %arg7: memref<512x128xbf16, #tpu.memory_space<vmem>>, %arg8: memref<512x128xf32, #tpu.memory_space<vmem>>) attributes {dimension_semantics = [#tpu.dimension_semantics<parallel>], iteration_bounds = array<i64: 1>, scalar_prefetch = 0 : i64, scratch_operands = 0 : i64, tpu.core_type = #tpu.core_type<tc>, window_params = [{transform_indices = @transform_0, window_bounds = array<i64: 512, 128>}, {pipeline_mode = #tpu.pipeline_mode<synchronous>, transform_indices = @transform_1, window_bounds = array<i64: 128, 128>}, {pipeline_mode = #tpu.pipeline_mode<synchronous>, transform_indices = @transform_2, window_bounds = array<i64: 1, 128>}, {pipeline_mode = #tpu.pipeline_mode<synchronous>, transform_indices = @transform_3, window_bounds = array<i64: 128, 128>}, {pipeline_mode = #tpu.pipeline_mode<synchronous>, transform_indices = @transform_4, window_bounds = array<i64: 1, 128>}, {pipeline_mode = #tpu.pipeline_mode<synchronous>, transform_indices = @transform_5, window_bounds = array<i64: 1, 128>}, {transform_indices = @transform_6, window_bounds = array<i64: 512, 128>}, {transform_indices = @transform_7, window_bounds = array<i64: 512, 128>}]} {
    %c0 = arith.constant 0 : index
    %c0_0 = arith.constant 0 : index
    %0 = vector.load %arg1[%c0, %c0_0] : memref<512x128xf32, #tpu.memory_space<vmem>>, vector<512x128xf32>
    %c0_1 = arith.constant 0 : index
    %c0_2 = arith.constant 0 : index
    %1 = vector.load %arg2[%c0_1, %c0_2] : memref<128x128xf32, #tpu.memory_space<vmem>>, vector<128x128xf32>
    %cst = arith.constant dense<0.000000e+00> : vector<512x128xf32>
    %2 = tpu.matmul %0, %1, %cst {dimension_numbers = #tpu.dot_dimension_numbers<[1], [0], [0], [1], [0, 0, 1, 1], [], []>} : vector<512x128xf32>, vector<128x128xf32>, vector<512x128xf32> -> vector<512x128xf32>
    %c0_3 = arith.constant 0 : index
    %c0_4 = arith.constant 0 : index
    %3 = vector.load %arg3[%c0_3, %c0_4] : memref<1x128xf32, #tpu.memory_space<vmem>>, vector<1x128xf32>
    %4 = vector.broadcast %3 : vector<1x128xf32> to vector<512x128xf32>
    %5 = arith.addf %2, %4 : vector<512x128xf32>
    %cst_5 = arith.constant 0.000000e+00 : f32
    %6 = vector.broadcast %cst_5 : f32 to vector<512x128xf32>
    %7 = arith.maximumf %5, %6 : vector<512x128xf32>
    %c0_6 = arith.constant 0 : index
    %c0_7 = arith.constant 0 : index
    %8 = vector.load %arg4[%c0_6, %c0_7] : memref<128x128xf32, #tpu.memory_space<vmem>>, vector<128x128xf32>
    %cst_8 = arith.constant dense<0.000000e+00> : vector<512x128xf32>
    %9 = tpu.matmul %7, %8, %cst_8 {dimension_numbers = #tpu.dot_dimension_numbers<[1], [0], [0], [1], [0, 0, 1, 1], [], []>} : vector<512x128xf32>, vector<128x128xf32>, vector<512x128xf32> -> vector<512x128xf32>
    %c0_9 = arith.constant 0 : index
    %c0_10 = arith.constant 0 : index
    %10 = vector.load %arg5[%c0_9, %c0_10] : memref<1x128xf32, #tpu.memory_space<vmem>>, vector<1x128xf32>
    %11 = vector.broadcast %10 : vector<1x128xf32> to vector<512x128xf32>
    %12 = arith.addf %9, %11 : vector<512x128xf32>
    %c512_i32 = arith.constant 512 : i32
    %13 = arith.muli %arg0, %c512_i32 : i32
    %14 = tpu.iota {dimensions = array<i32: 0>} : vector<512x1xi32>
    %15 = vector.broadcast %13 : i32 to vector<512x1xi32>
    %16 = arith.addi %15, %14 : vector<512x1xi32>
    %c300_i32 = arith.constant 300 : i32
    %17 = vector.broadcast %c300_i32 : i32 to vector<512x1xi32>
    %18 = arith.cmpi slt, %16, %17 : vector<512x1xi32>
    %cst_11 = arith.constant 0.000000e+00 : f32
    %19 = vector.shape_cast %18 : vector<512x1xi1> to vector<512x1xi1>
    %20 = vector.broadcast %19 : vector<512x1xi1> to vector<512x128xi1>
    %21 = vector.broadcast %cst_11 : f32 to vector<512x128xf32>
    %22 = arith.select %20, %12, %21 : vector<512x128xi1>, vector<512x128xf32>
    %c0_12 = arith.constant 0 : index
    %c0_13 = arith.constant 0 : index
    %23 = vector.load %arg6[%c0_12, %c0_13] : memref<1x128xf32, #tpu.memory_space<vmem>>, vector<1x128xf32>
    %24 = vector.broadcast %23 : vector<1x128xf32> to vector<512x128xf32>
    %25 = arith.mulf %22, %24 : vector<512x128xf32>
    %cst_14 = arith.constant dense<0.000000e+00> : vector<512xf32>
    %26 = vector.multi_reduction <add>, %25, %cst_14 [1] : vector<512x128xf32> to vector<512xf32>
    %27 = vector.shape_cast %26 : vector<512xf32> to vector<512x1xf32>
    %28 = arith.negf %27 : vector<512x1xf32>
    %29 = math.exp %28 : vector<512x1xf32>
    %cst_15 = arith.constant 1.000000e+00 : f32
    %30 = vector.broadcast %cst_15 : f32 to vector<512x1xf32>
    %31 = arith.addf %30, %29 : vector<512x1xf32>
    %32 = arith.divf %30, %31 : vector<512x1xf32>
    %33 = arith.truncf %22 : vector<512x128xf32> to vector<512x128xbf16>
    %c0_16 = arith.constant 0 : index
    %c0_17 = arith.constant 0 : index
    %34 = vector.load %arg7[%c0_16, %c0_17] : memref<512x128xbf16, #tpu.memory_space<vmem>>, vector<512x128xbf16>
    tpu.vector_store %arg7[%c0_16, %c0_17], %33 {strides = array<i32>} : memref<512x128xbf16, #tpu.memory_space<vmem>>, vector<512x128xbf16>,
    %35 = vector.broadcast %32 : vector<512x1xf32> to vector<512x128xf32>
    %36 = arith.mulf %35, %22 : vector<512x128xf32>
    %c0_18 = arith.constant 0 : index
    %c0_19 = arith.constant 0 : index
    %37 = vector.load %arg8[%c0_18, %c0_19] : memref<512x128xf32, #tpu.memory_space<vmem>>, vector<512x128xf32>
    tpu.vector_store %arg8[%c0_18, %c0_19], %36 {strides = array<i32>} : memref<512x128xf32, #tpu.memory_space<vmem>>, vector<512x128xf32>,
    return
  }
  func.func @transform_0(%arg0: i32) -> (i32, i32) {
    %c0_i32 = arith.constant 0 : i32
    %c0_i32_0 = arith.constant 0 : i32
    return %arg0, %c0_i32 : i32, i32
  }
  func.func @transform_1(%arg0: i32) -> (i32, i32) {
    %c0_i32 = arith.constant 0 : i32
    %c0_i32_0 = arith.constant 0 : i32
    %c0_i32_1 = arith.constant 0 : i32
    return %c0_i32, %c0_i32_0 : i32, i32
  }
  func.func @transform_2(%arg0: i32) -> (i32, i32) {
    %c0_i32 = arith.constant 0 : i32
    %c0_i32_0 = arith.constant 0 : i32
    %c0_i32_1 = arith.constant 0 : i32
    return %c0_i32, %c0_i32_0 : i32, i32
  }
  func.func @transform_3(%arg0: i32) -> (i32, i32) {
    %c0_i32 = arith.constant 0 : i32
    %c0_i32_0 = arith.constant 0 : i32
    %c0_i32_1 = arith.constant 0 : i32
    return %c0_i32, %c0_i32_0 : i32, i32
  }
  func.func @transform_4(%arg0: i32) -> (i32, i32) {
    %c0_i32 = arith.constant 0 : i32
    %c0_i32_0 = arith.constant 0 : i32
    %c0_i32_1 = arith.constant 0 : i32
    return %c0_i32, %c0_i32_0 : i32, i32
  }
  func.func @transform_5(%arg0: i32) -> (i32, i32) {
    %c0_i32 = arith.constant 0 : i32
    %c0_i32_0 = arith.constant 0 : i32
    %c0_i32_1 = arith.constant 0 : i32
    return %c0_i32, %c0_i32_0 : i32, i32
  }
  func.func @transform_6(%arg0: i32) -> (i32, i32) {
    %c0_i32 = arith.constant 0 : i32
    %c0_i32_0 = arith.constant 0 : i32
    return %arg0, %c0_i32 : i32, i32
  }
  func.func @transform_7(%arg0: i32) -> (i32, i32) {
    %c0_i32 = arith.constant 0 : i32
    %c0_i32_0 = arith.constant 0 : i32
    return %arg0, %c0_i32 : i32, i32
  }
}

module attributes {stable_mosaic.version = 11 : i64} {
  func.func @hops_kernel(%arg0: i32, %arg1: i32, %arg2: i32, %arg3: memref<512x512xbf16, #tpu.memory_space<vmem>>, %arg4: memref<512x128xbf16, #tpu.memory_space<vmem>>, %arg5: memref<512x128xf32, #tpu.memory_space<vmem>>, %arg6: memref<1x128xf32, #tpu.memory_space<vmem>>, %arg7: memref<512x128xf32, #tpu.memory_space<vmem>>, %arg8: memref<1024x128xbf16, #tpu.memory_space<vmem>>, %arg9: memref<256x128xf32, #tpu.memory_space<vmem>>) attributes {dimension_semantics = [#tpu.dimension_semantics<arbitrary>, #tpu.dimension_semantics<arbitrary>, #tpu.dimension_semantics<arbitrary>], iteration_bounds = array<i64: 4, 2, 1>, scalar_prefetch = 0 : i64, scratch_operands = 2 : i64, tpu.core_type = #tpu.core_type<tc>, window_params = [{pipeline_mode = #tpu.pipeline_mode<synchronous>, transform_indices = @transform_0, window_bounds = array<i64: 512, 512>}, {pipeline_mode = #tpu.pipeline_mode<synchronous>, transform_indices = @transform_1, window_bounds = array<i64: 512, 128>}, {pipeline_mode = #tpu.pipeline_mode<synchronous>, transform_indices = @transform_2, window_bounds = array<i64: 512, 128>}, {pipeline_mode = #tpu.pipeline_mode<synchronous>, transform_indices = @transform_3, window_bounds = array<i64: 1, 128>}, {pipeline_mode = #tpu.pipeline_mode<synchronous>, transform_indices = @transform_4, window_bounds = array<i64: 512, 128>}]} {
    %c0_i32 = arith.constant 0 : i32
    %0 = arith.cmpi eq, %arg0, %c0_i32 : i32
    %c0_i32_0 = arith.constant 0 : i32
    %1 = arith.cmpi eq, %arg1, %c0_i32_0 : i32
    %2 = arith.andi %0, %1 : i1
    %c0_i32_1 = arith.constant 0 : i32
    %3 = arith.cmpi eq, %arg2, %c0_i32_1 : i32
    %4 = arith.andi %2, %3 : i1
    %5 = arith.extui %4 : i1 to i32
    %c0_i32_2 = arith.constant 0 : i32
    %6 = arith.cmpi ne, %5, %c0_i32_2 : i32
    scf.if %6 {
      %c0_13 = arith.constant 0 : index
      %c0_14 = arith.constant 0 : index
      %31 = vector.load %arg4[%c0_13, %c0_14] : memref<512x128xbf16, #tpu.memory_space<vmem>>, vector<512x128xbf16>
      %c0_15 = arith.constant 0 : index
      %c0_16 = arith.constant 0 : index
      %32 = vector.load %arg8[%c0_15, %c0_16] : memref<1024x128xbf16, #tpu.memory_space<vmem>>, vector<512x128xbf16>
      tpu.vector_store %arg8[%c0_15, %c0_16], %31 {strides = array<i32>} : memref<1024x128xbf16, #tpu.memory_space<vmem>>, vector<512x128xbf16>,
      %c0_17 = arith.constant 0 : index
      %c0_18 = arith.constant 0 : index
      %33 = vector.load %arg5[%c0_17, %c0_18] : memref<512x128xf32, #tpu.memory_space<vmem>>, vector<512x128xf32>
      %c0_19 = arith.constant 0 : index
      %c0_20 = arith.constant 0 : index
      %34 = vector.load %arg7[%c0_19, %c0_20] : memref<512x128xf32, #tpu.memory_space<vmem>>, vector<512x128xf32>
      tpu.vector_store %arg7[%c0_19, %c0_20], %33 {strides = array<i32>} : memref<512x128xf32, #tpu.memory_space<vmem>>, vector<512x128xf32>,
    } else {
    }
    %c0_i32_3 = arith.constant 0 : i32
    %7 = arith.cmpi eq, %arg2, %c0_i32_3 : i32
    %8 = arith.extui %7 : i1 to i32
    %c0_i32_4 = arith.constant 0 : i32
    %9 = arith.cmpi ne, %8, %c0_i32_4 : i32
    scf.if %9 {
      %cst_13 = arith.constant 0.000000e+00 : f32
      %31 = vector.broadcast %cst_13 : f32 to vector<256x128xf32>
      %c0_14 = arith.constant 0 : index
      %c0_15 = arith.constant 0 : index
      %32 = vector.load %arg9[%c0_14, %c0_15] : memref<256x128xf32, #tpu.memory_space<vmem>>, vector<256x128xf32>
      tpu.vector_store %arg9[%c0_14, %c0_15], %31 {strides = array<i32>} : memref<256x128xf32, #tpu.memory_space<vmem>>, vector<256x128xf32>,
    } else {
    }
    %c2_i32 = arith.constant 2 : i32
    %10 = arith.remsi %arg0, %c2_i32 : i32
    %c512_i32 = arith.constant 512 : i32
    %11 = arith.muli %10, %c512_i32 : i32
    %c512_i32_5 = arith.constant 512 : i32
    %12 = arith.muli %arg2, %c512_i32_5 : i32
    %13 = arith.addi %11, %12 : i32
    %14 = tpu.assume_multiple %13, 512 : i32
    %15 = arith.index_cast %14 : i32 to index
    %c0 = arith.constant 0 : index
    %16 = vector.load %arg8[%15, %c0] : memref<1024x128xbf16, #tpu.memory_space<vmem>>, vector<512x128xbf16>
    %c256_i32 = arith.constant 256 : i32
    %17 = arith.muli %arg1, %c256_i32 : i32
    %18 = tpu.assume_multiple %17, 256 : i32
    %c512_i32_6 = arith.constant 512 : i32
    %19 = arith.muli %arg2, %c512_i32_6 : i32
    %20 = tpu.assume_multiple %19, 512 : i32
    %21 = arith.index_cast %18 : i32 to index
    %22 = arith.index_cast %20 : i32 to index
    %23 = vector.load %arg3[%21, %22] : memref<512x512xbf16, #tpu.memory_space<vmem>>, vector<256x512xbf16>
    %c0_7 = arith.constant 0 : index
    %c0_8 = arith.constant 0 : index
    %24 = vector.load %arg9[%c0_7, %c0_8] : memref<256x128xf32, #tpu.memory_space<vmem>>, vector<256x128xf32>
    %cst = arith.constant dense<0.000000e+00> : vector<256x128xf32>
    %25 = tpu.matmul %23, %16, %cst {dimension_numbers = #tpu.dot_dimension_numbers<[1], [0], [0], [1], [0, 0, 1, 1], [], []>} : vector<256x512xbf16>, vector<512x128xbf16>, vector<256x128xf32> -> vector<256x128xf32>
    %26 = arith.addf %24, %25 : vector<256x128xf32>
    %c0_9 = arith.constant 0 : index
    %c0_10 = arith.constant 0 : index
    %27 = vector.load %arg9[%c0_9, %c0_10] : memref<256x128xf32, #tpu.memory_space<vmem>>, vector<256x128xf32>
    tpu.vector_store %arg9[%c0_9, %c0_10], %26 {strides = array<i32>} : memref<256x128xf32, #tpu.memory_space<vmem>>, vector<256x128xf32>,
    %c0_i32_11 = arith.constant 0 : i32
    %28 = arith.cmpi eq, %arg2, %c0_i32_11 : i32
    %29 = arith.extui %28 : i1 to i32
    %c0_i32_12 = arith.constant 0 : i32
    %30 = arith.cmpi ne, %29, %c0_i32_12 : i32
    scf.if %30 {
      %c0_13 = arith.constant 0 : index
      %c0_14 = arith.constant 0 : index
      %31 = vector.load %arg9[%c0_13, %c0_14] : memref<256x128xf32, #tpu.memory_space<vmem>>, vector<256x128xf32>
      %c0_15 = arith.constant 0 : index
      %c0_16 = arith.constant 0 : index
      %32 = vector.load %arg6[%c0_15, %c0_16] : memref<1x128xf32, #tpu.memory_space<vmem>>, vector<1x128xf32>
      %33 = vector.broadcast %32 : vector<1x128xf32> to vector<256x128xf32>
      %34 = arith.mulf %31, %33 : vector<256x128xf32>
      %cst_17 = arith.constant dense<0.000000e+00> : vector<256xf32>
      %35 = vector.multi_reduction <add>, %34, %cst_17 [1] : vector<256x128xf32> to vector<256xf32>
      %36 = vector.shape_cast %35 : vector<256xf32> to vector<256x1xf32>
      %37 = arith.negf %36 : vector<256x1xf32>
      %38 = math.exp %37 : vector<256x1xf32>
      %cst_18 = arith.constant 1.000000e+00 : f32
      %39 = vector.broadcast %cst_18 : f32 to vector<256x1xf32>
      %40 = arith.addf %39, %38 : vector<256x1xf32>
      %41 = arith.divf %39, %40 : vector<256x1xf32>
      %c256_i32_19 = arith.constant 256 : i32
      %42 = arith.muli %arg1, %c256_i32_19 : i32
      %43 = tpu.assume_multiple %42, 256 : i32
      %44 = arith.index_cast %43 : i32 to index
      %c0_20 = arith.constant 0 : index
      %45 = vector.load %arg7[%44, %c0_20] : memref<512x128xf32, #tpu.memory_space<vmem>>, vector<256x128xf32>
      %46 = vector.broadcast %41 : vector<256x1xf32> to vector<256x128xf32>
      %47 = arith.mulf %46, %31 : vector<256x128xf32>
      %48 = arith.addf %45, %47 : vector<256x128xf32>
      %49 = arith.index_cast %43 : i32 to index
      %c0_21 = arith.constant 0 : index
      %50 = vector.load %arg7[%49, %c0_21] : memref<512x128xf32, #tpu.memory_space<vmem>>, vector<256x128xf32>
      tpu.vector_store %arg7[%49, %c0_21], %48 {strides = array<i32>} : memref<512x128xf32, #tpu.memory_space<vmem>>, vector<256x128xf32>,
      %c3_i32 = arith.constant 3 : i32
      %51 = arith.cmpi slt, %arg0, %c3_i32 : i32
      %52 = arith.extui %51 : i1 to i32
      %c0_i32_22 = arith.constant 0 : i32
      %53 = arith.cmpi ne, %52, %c0_i32_22 : i32
      scf.if %53 {
        %c1_i32 = arith.constant 1 : i32
        %54 = arith.subi %c1_i32, %10 : i32
        %c512_i32_23 = arith.constant 512 : i32
        %55 = arith.muli %54, %c512_i32_23 : i32
        %c256_i32_24 = arith.constant 256 : i32
        %56 = arith.muli %arg1, %c256_i32_24 : i32
        %57 = arith.addi %55, %56 : i32
        %58 = tpu.assume_multiple %57, 256 : i32
        %59 = arith.truncf %31 : vector<256x128xf32> to vector<256x128xbf16>
        %60 = arith.index_cast %58 : i32 to index
        %c0_25 = arith.constant 0 : index
        %61 = vector.load %arg8[%60, %c0_25] : memref<1024x128xbf16, #tpu.memory_space<vmem>>, vector<256x128xbf16>
        tpu.vector_store %arg8[%60, %c0_25], %59 {strides = array<i32>} : memref<1024x128xbf16, #tpu.memory_space<vmem>>, vector<256x128xbf16>,
      } else {
      }
    } else {
    }
    return
  }
  func.func @transform_0(%arg0: i32, %arg1: i32, %arg2: i32) -> (i32, i32) {
    %c0_i32 = arith.constant 0 : i32
    %c0_i32_0 = arith.constant 0 : i32
    %c0_i32_1 = arith.constant 0 : i32
    return %c0_i32, %c0_i32_0 : i32, i32
  }
  func.func @transform_1(%arg0: i32, %arg1: i32, %arg2: i32) -> (i32, i32) {
    %c0_i32 = arith.constant 0 : i32
    %c0_i32_0 = arith.constant 0 : i32
    %c0_i32_1 = arith.constant 0 : i32
    return %c0_i32, %c0_i32_0 : i32, i32
  }
  func.func @transform_2(%arg0: i32, %arg1: i32, %arg2: i32) -> (i32, i32) {
    %c0_i32 = arith.constant 0 : i32
    %c0_i32_0 = arith.constant 0 : i32
    %c0_i32_1 = arith.constant 0 : i32
    return %c0_i32, %c0_i32_0 : i32, i32
  }
  func.func @transform_3(%arg0: i32, %arg1: i32, %arg2: i32) -> (i32, i32) {
    %c0_i32 = arith.constant 0 : i32
    %c0_i32_0 = arith.constant 0 : i32
    %c0_i32_1 = arith.constant 0 : i32
    return %c0_i32, %c0_i32_0 : i32, i32
  }
  func.func @transform_4(%arg0: i32, %arg1: i32, %arg2: i32) -> (i32, i32) {
    %c0_i32 = arith.constant 0 : i32
    %c0_i32_0 = arith.constant 0 : i32
    %c0_i32_1 = arith.constant 0 : i32
    return %c0_i32, %c0_i32_0 : i32, i32
  }
}

</mosaic_0001>

<llo_original>
// kernel: _lambda_.2
$region0: #{_lambda_.2}
  #allocation0 [shape = 'u32[]', space=smem, size = 0x4, offset = 0x4, fixed_abs, tag = 'smem constant byte address 0x4 - core index']
  #allocation1 [shape = 'u32[144,128]{1,0:T(1,128)}', space=vmem, size = 0x12000, scoped, tag = 'internal scratch']
  %s0 = inlined_call_operand.vmem [shape: f32[512,128], index: 0, kind: input, shape index: {}]
  %s1 = inlined_call_operand.vmem [shape: f32[128,128], index: 1, kind: input, shape index: {}]
  %s2 = inlined_call_operand.vmem [shape: f32[1,128], index: 2, kind: input, shape index: {}]
  %s3 = inlined_call_operand.vmem [shape: f32[128,128], index: 3, kind: input, shape index: {}]
  %s4 = inlined_call_operand.vmem [shape: f32[1,128], index: 4, kind: input, shape index: {}]
  %s5 = inlined_call_operand.vmem [shape: f32[1,128], index: 5, kind: input, shape index: {}]
  %s6 = inlined_call_operand.vmem [shape: bf16[512,128], index: 6, kind: output, shape index: {0}]
  %s7 = inlined_call_operand.vmem [shape: f32[512,128], index: 7, kind: output, shape index: {1}]
  %8 = xla_tuple %s6, %s7
  %s9 = sld [smem:[#allocation0]]
  $region42: #{_lambda_.2} parent=0
    _
  %s11 = ssub.s32 1, %s9
  %s12 = scalar_select 0, %s11, %s9
  // Predicated region
  $region2: #{_lambda_.2} parent=0 // pred_check
    _
  $region3: #{_lambda_.2} parent=0 // pred_check_branch
    %14 = sbr.rel (0) target = $region5
  $region4: #{_lambda_.2} parent=0 // pred_region
    _
  $region5: #{_lambda_.2} parent=0 // pred_fallthru
    _
  // Predicated region
  $region6: #{_lambda_.2} parent=0 // pred_check
    _
  $region7: #{_lambda_.2} parent=0 // pred_check_branch
    %16 = sbr.rel (0) target = $region9
  $region8: #{_lambda_.2} parent=0 // pred_region
    _
  $region9: #{_lambda_.2} parent=0 // pred_fallthru
    _
  // Predicated region
  $region10: #{_lambda_.2} parent=0 // pred_check
    _
  $region11: #{_lambda_.2} parent=0 // pred_check_branch
    %18 = sbr.rel (0) target = $region13
  $region12: #{_lambda_.2} parent=0 // pred_region
    _
  $region13: #{_lambda_.2} parent=0 // pred_fallthru
    _
  // Predicated region
  $region14: #{_lambda_.2} parent=0 // pred_check
    _
  $region15: #{_lambda_.2} parent=0 // pred_check_branch
    %20 = sbr.rel (0) target = $region17
  $region16: #{_lambda_.2} parent=0 // pred_region
    _
  $region17: #{_lambda_.2} parent=0 // pred_fallthru
    _
  // Predicated region
  $region18: #{_lambda_.2} parent=0 // pred_check
    _
  $region19: #{_lambda_.2} parent=0 // pred_check_branch
    %22 = sbr.rel (0) target = $region21
  $region20: #{_lambda_.2} parent=0 // pred_region
    _
  $region21: #{_lambda_.2} parent=0 // pred_fallthru
    _
  // Predicated region
  $region22: #{_lambda_.2} parent=0 // pred_check
    _
  $region23: #{_lambda_.2} parent=0 // pred_check_branch
    %24 = sbr.rel (0) target = $region25
  $region24: #{_lambda_.2} parent=0 // pred_region
    _
  $region25: #{_lambda_.2} parent=0 // pred_fallthru
    _
  %v25 = vld [vmem:[%s0] sm:$0xff]
  %v26 = vld [vmem:[%s0 + $0x8] sm:$0xff]
  %v27 = vld [vmem:[%s0 + $0x10] sm:$0xff]
  %v28 = vld [vmem:[%s0 + $0x18] sm:$0xff]
  %v29 = vld [vmem:[%s0 + $0x20] sm:$0xff]
  %v30 = vld [vmem:[%s0 + $0x28] sm:$0xff]
  %v31 = vld [vmem:[%s0 + $0x30] sm:$0xff]
  %v32 = vld [vmem:[%s0 + $0x38] sm:$0xff]
  %v33 = vld [vmem:[%s0 + $0x40] sm:$0xff]
  %v34 = vld [vmem:[%s0 + $0x48] sm:$0xff]
  %v35 = vld [vmem:[%s0 + $0x50] sm:$0xff]
  %v36 = vld [vmem:[%s0 + $0x58] sm:$0xff]
  %v37 = vld [vmem:[%s0 + $0x60] sm:$0xff]
  %v38 = vld [vmem:[%s0 + $0x68] sm:$0xff]
  %v39 = vld [vmem:[%s0 + $0x70] sm:$0xff]
  %v40 = vld [vmem:[%s0 + $0x78] sm:$0xff]
  %v41 = vld [vmem:[%s0 + $0x80] sm:$0xff]
  %v42 = vld [vmem:[%s0 + $0x88] sm:$0xff]
  %v43 = vld [vmem:[%s0 + $0x90] sm:$0xff]
  %v44 = vld [vmem:[%s0 + $0x98] sm:$0xff]
  %v45 = vld [vmem:[%s0 + $0xa0] sm:$0xff]
  %v46 = vld [vmem:[%s0 + $0xa8] sm:$0xff]
  %v47 = vld [vmem:[%s0 + $0xb0] sm:$0xff]
  %v48 = vld [vmem:[%s0 + $0xb8] sm:$0xff]
  %v49 = vld [vmem:[%s0 + $0xc0] sm:$0xff]
  %v50 = vld [vmem:[%s0 + $0xc8] sm:$0xff]
  %v51 = vld [vmem:[%s0 + $0xd0] sm:$0xff]
  %v52 = vld [vmem:[%s0 + $0xd8] sm:$0xff]
  %v53 = vld [vmem:[%s0 + $0xe0] sm:$0xff]
  %v54 = vld [vmem:[%s0 + $0xe8] sm:$0xff]
  %v55 = vld [vmem:[%s0 + $0xf0] sm:$0xff]
  %v56 = vld [vmem:[%s0 + $0xf8] sm:$0xff]
  %v57 = vld [vmem:[%s0 + $0x100] sm:$0xff]
  %v58 = vld [vmem:[%s0 + $0x108] sm:$0xff]
  %v59 = vld [vmem:[%s0 + $0x110] sm:$0xff]
  %v60 = vld [vmem:[%s0 + $0x118] sm:$0xff]
  %v61 = vld [vmem:[%s0 + $0x120] sm:$0xff]
  %v62 = vld [vmem:[%s0 + $0x128] sm:$0xff]
  %v63 = vld [vmem:[%s0 + $0x130] sm:$0xff]
  %v64 = vld [vmem:[%s0 + $0x138] sm:$0xff]
  %v65 = vld [vmem:[%s0 + $0x140] sm:$0xff]
  %v66 = vld [vmem:[%s0 + $0x148] sm:$0xff]
  %v67 = vld [vmem:[%s0 + $0x150] sm:$0xff]
  %v68 = vld [vmem:[%s0 + $0x158] sm:$0xff]
  %v69 = vld [vmem:[%s0 + $0x160] sm:$0xff]
  %v70 = vld [vmem:[%s0 + $0x168] sm:$0xff]
  %v71 = vld [vmem:[%s0 + $0x170] sm:$0xff]
  %v72 = vld [vmem:[%s0 + $0x178] sm:$0xff]
  %v73 = vld [vmem:[%s0 + $0x180] sm:$0xff]
  %v74 = vld [vmem:[%s0 + $0x188] sm:$0xff]
  %v75 = vld [vmem:[%s0 + $0x190] sm:$0xff]
  %v76 = vld [vmem:[%s0 + $0x198] sm:$0xff]
  %v77 = vld [vmem:[%s0 + $0x1a0] sm:$0xff]
  %v78 = vld [vmem:[%s0 + $0x1a8] sm:$0xff]
  %v79 = vld [vmem:[%s0 + $0x1b0] sm:$0xff]
  %v80 = vld [vmem:[%s0 + $0x1b8] sm:$0xff]
  %v81 = vld [vmem:[%s0 + $0x1c0] sm:$0xff]
  %v82 = vld [vmem:[%s0 + $0x1c8] sm:$0xff]
  %v83 = vld [vmem:[%s0 + $0x1d0] sm:$0xff]
  %v84 = vld [vmem:[%s0 + $0x1d8] sm:$0xff]
  %v85 = vld [vmem:[%s0 + $0x1e0] sm:$0xff]
  %v86 = vld [vmem:[%s0 + $0x1e8] sm:$0xff]
  %v87 = vld [vmem:[%s0 + $0x1f0] sm:$0xff]
  %v88 = vld [vmem:[%s0 + $0x1f8] sm:$0xff]
  %v89 = vld [vmem:[%s1] sm:$0xff]
  %v90 = vld [vmem:[%s1 + $0x8] sm:$0xff]
  %v91 = vld [vmem:[%s1 + $0x10] sm:$0xff]
  %v92 = vld [vmem:[%s1 + $0x18] sm:$0xff]
  %v93 = vld [vmem:[%s1 + $0x20] sm:$0xff]
  %v94 = vld [vmem:[%s1 + $0x28] sm:$0xff]
  %v95 = vld [vmem:[%s1 + $0x30] sm:$0xff]
  %v96 = vld [vmem:[%s1 + $0x38] sm:$0xff]
  %v97 = vld [vmem:[%s1 + $0x40] sm:$0xff]
  %v98 = vld [vmem:[%s1 + $0x48] sm:$0xff]
  %v99 = vld [vmem:[%s1 + $0x50] sm:$0xff]
  %v100 = vld [vmem:[%s1 + $0x58] sm:$0xff]
  %v101 = vld [vmem:[%s1 + $0x60] sm:$0xff]
  %v102 = vld [vmem:[%s1 + $0x68] sm:$0xff]
  %v103 = vld [vmem:[%s1 + $0x70] sm:$0xff]
  %v104 = vld [vmem:[%s1 + $0x78] sm:$0xff]
  %v105 = vld [vmem:[%s2] sm:$0x1]
  %v107 = vlaneseq
  %v108 = vshrl.u32 %v107, 7
  %v109 = vsub.s32 0, %v108
  %v110 = vrot.slane %v105, %v109
  %112 = vmatprep.subr.mxu0 0.0
  %113 = vmatpush1.msra.mxu0 %v89
  %114 = vmatprep.subr.mxu0 0.0
  %115 = vmatpush1.msra.mxu0 %v90
  %116 = vmatprep.subr.mxu0 0.0
  %117 = vmatpush1.msra.mxu0 %v91
  %118 = vmatprep.subr.mxu0 0.0
  %119 = vmatpush1.msra.mxu0 %v92
  %120 = vmatprep.subr.mxu0 0.0
  %121 = vmatpush1.msra.mxu0 %v93
  %122 = vmatprep.subr.mxu0 0.0
  %123 = vmatpush1.msra.mxu0 %v94
  %124 = vmatprep.subr.mxu0 0.0
  %125 = vmatpush1.msra.mxu0 %v95
  %126 = vmatprep.subr.mxu0 0.0
  %127 = vmatpush1.msra.mxu0 %v96
  %128 = vmatprep.subr.mxu0 0.0
  %129 = vmatpush1.msra.mxu0 %v97
  %130 = vmatprep.subr.mxu0 0.0
  %131 = vmatpush1.msra.mxu0 %v98
  %132 = vmatprep.subr.mxu0 0.0
  %133 = vmatpush1.msra.mxu0 %v99
  %134 = vmatprep.subr.mxu0 0.0
  %135 = vmatpush1.msra.mxu0 %v100
  %136 = vmatprep.subr.mxu0 0.0
  %137 = vmatpush1.msra.mxu0 %v101
  %138 = vmatprep.subr.mxu0 0.0
  %139 = vmatpush1.msra.mxu0 %v102
  %140 = vmatprep.subr.mxu0 0.0
  %141 = vmatpush1.msra.mxu0 %v103
  %142 = vmatprep.subr.mxu0 0.0
  %143 = vmatpush1.msra.mxu0 %v104
  %144 = vmatprep.subr.mxu0 0.0
  %145 = vmatpush1.msra.mxu0 0.0
  %146 = vmatprep.subr.mxu0 0.0
  %147 = vmatpush1.msra.mxu0 0.0
  %148 = vmatprep.subr.mxu0 0.0
  %149 = vmatpush1.msra.mxu0 0.0
  %150 = vmatprep.subr.mxu0 0.0
  %151 = vmatpush1.msra.mxu0 0.0
  %152 = vmatprep.subr.mxu0 0.0
  %153 = vmatpush1.msra.mxu0 0.0
  %154 = vmatprep.subr.mxu0 0.0
  %155 = vmatpush1.msra.mxu0 0.0
  %156 = vmatprep.subr.mxu0 0.0
  %157 = vmatpush1.msra.mxu0 0.0
  %158 = vmatprep.subr.mxu0 0.0
  %159 = vmatpush1.msra.mxu0 0.0
  %160 = vmatprep.subr.mxu0 0.0
  %161 = vmatpush1.msra.mxu0 0.0
  %162 = vmatprep.subr.mxu0 0.0
  %163 = vmatpush1.msra.mxu0 0.0
  %164 = vmatprep.subr.mxu0 0.0
  %165 = vmatpush1.msra.mxu0 0.0
  %166 = vmatprep.subr.mxu0 0.0
  %167 = vmatpush1.msra.mxu0 0.0
  %168 = vmatprep.subr.mxu0 0.0
  %169 = vmatpush1.msra.mxu0 0.0
  %170 = vmatprep.subr.mxu0 0.0
  %171 = vmatpush1.msra.mxu0 0.0
  %172 = vmatprep.subr.mxu0 0.0
  %173 = vmatpush1.msra.mxu0 0.0
  %174 = vmatprep.subr.mxu0 0.0
  %175 = vmatpush1.msra.mxu0 0.0
  %176 = vmatprep.mubr.f32.mxu0 0.0
  %177 = vmatmul.mubr.f32.gmra.mrb[0].mxu0 %v25
  %v178 = vpop.f32.mrb[0].mxu0
  %v179 = vadd.f32 %v110, %v178
  %v180 = vpop.f32.mrb[0].mxu0
  %181 = vmatprep.mubr.f32.mxu0 0.0
  %182 = vmatmul.mubr.f32.gmra.mrb[0].mxu0 %v26
  %v183 = vpop.f32.mrb[0].mxu0
  %v184 = vadd.f32 %v110, %v183
  %v185 = vpop.f32.mrb[0].mxu0
  %186 = vmatprep.mubr.f32.mxu0 0.0
  %187 = vmatmul.mubr.f32.gmra.mrb[0].mxu0 %v27
  %v188 = vpop.f32.mrb[0].mxu0
  %v189 = vadd.f32 %v110, %v188
  %v190 = vpop.f32.mrb[0].mxu0
  %191 = vmatprep.mubr.f32.mxu0 0.0
  %192 = vmatmul.mubr.f32.gmra.mrb[0].mxu0 %v28
  %v193 = vpop.f32.mrb[0].mxu0
  %v194 = vadd.f32 %v110, %v193
  %v195 = vpop.f32.mrb[0].mxu0
  %196 = vmatprep.mubr.f32.mxu0 0.0
  %197 = vmatmul.mubr.f32.gmra.mrb[0].mxu0 %v29
  %v198 = vpop.f32.mrb[0].mxu0
  %v199 = vadd.f32 %v110, %v198
  %v200 = vpop.f32.mrb[0].mxu0
  %201 = vmatprep.mubr.f32.mxu0 0.0
  %202 = vmatmul.mubr.f32.gmra.mrb[0].mxu0 %v30
  %v203 = vpop.f32.mrb[0].mxu0
  %v204 = vadd.f32 %v110, %v203
  %v205 = vpop.f32.mrb[0].mxu0
  %206 = vmatprep.mubr.f32.mxu0 0.0
  %207 = vmatmul.mubr.f32.gmra.mrb[0].mxu0 %v31
  %v208 = vpop.f32.mrb[0].mxu0
  %v209 = vadd.f32 %v110, %v208
  %v210 = vpop.f32.mrb[0].mxu0
  %211 = vmatprep.mubr.f32.mxu0 0.0
  %212 = vmatmul.mubr.f32.gmra.mrb[0].mxu0 %v32
  %v213 = vpop.f32.mrb[0].mxu0
  %v214 = vadd.f32 %v110, %v213
  %v215 = vpop.f32.mrb[0].mxu0
  %216 = vmatprep.mubr.f32.mxu0 0.0
  %217 = vmatmul.mubr.f32.gmra.mrb[0].mxu0 %v33
  %v218 = vpop.f32.mrb[0].mxu0
  %v219 = vadd.f32 %v110, %v218
  %v220 = vpop.f32.mrb[0].mxu0
  %221 = vmatprep.mubr.f32.mxu0 0.0
  %222 = vmatmul.mubr.f32.gmra.mrb[0].mxu0 %v34
  %v223 = vpop.f32.mrb[0].mxu0
  %v224 = vadd.f32 %v110, %v223
  %v225 = vpop.f32.mrb[0].mxu0
  %226 = vmatprep.mubr.f32.mxu0 0.0
  %227 = vmatmul.mubr.f32.gmra.mrb[0].mxu0 %v35
  %v228 = vpop.f32.mrb[0].mxu0
  %v229 = vadd.f32 %v110, %v228
  %v230 = vpop.f32.mrb[0].mxu0
  %231 = vmatprep.mubr.f32.mxu0 0.0
  %232 = vmatmul.mubr.f32.gmra.mrb[0].mxu0 %v36
  %v233 = vpop.f32.mrb[0].mxu0
  %v234 = vadd.f32 %v110, %v233
  %v235 = vpop.f32.mrb[0].mxu0
  %236 = vmatprep.mubr.f32.mxu0 0.0
  %237 = vmatmul.mubr.f32.gmra.mrb[0].mxu0 %v37
  %v238 = vpop.f32.mrb[0].mxu0
  %v239 = vadd.f32 %v110, %v238
  %v240 = vpop.f32.mrb[0].mxu0
  %241 = vmatprep.mubr.f32.mxu0 0.0
  %242 = vmatmul.mubr.f32.gmra.mrb[0].mxu0 %v38
  %v243 = vpop.f32.mrb[0].mxu0
  %v244 = vadd.f32 %v110, %v243
  %v245 = vpop.f32.mrb[0].mxu0
  %246 = vmatprep.mubr.f32.mxu0 0.0
  %247 = vmatmul.mubr.f32.gmra.mrb[0].mxu0 %v39
  %v248 = vpop.f32.mrb[0].mxu0
  %v249 = vadd.f32 %v110, %v248
  %v250 = vpop.f32.mrb[0].mxu0
  %251 = vmatprep.mubr.f32.mxu0 0.0
  %252 = vmatmul.mubr.f32.gmra.mrb[0].mxu0 %v40
  %v253 = vpop.f32.mrb[0].mxu0
  %v254 = vadd.f32 %v110, %v253
  %v255 = vpop.f32.mrb[0].mxu0
  %256 = vmatprep.mubr.f32.mxu0 0.0
  %257 = vmatmul.mubr.f32.gmra.mrb[0].mxu0 %v41
  %v258 = vpop.f32.mrb[0].mxu0
  %v259 = vadd.f32 %v110, %v258
  %v260 = vpop.f32.mrb[0].mxu0
  %261 = vmatprep.mubr.f32.mxu0 0.0
  %262 = vmatmul.mubr.f32.gmra.mrb[0].mxu0 %v42
  %v263 = vpop.f32.mrb[0].mxu0
  %v264 = vadd.f32 %v110, %v263
  %v265 = vpop.f32.mrb[0].mxu0
  %266 = vmatprep.mubr.f32.mxu0 0.0
  %267 = vmatmul.mubr.f32.gmra.mrb[0].mxu0 %v43
  %v268 = vpop.f32.mrb[0].mxu0
  %v269 = vadd.f32 %v110, %v268
  %v270 = vpop.f32.mrb[0].mxu0
  %271 = vmatprep.mubr.f32.mxu0 0.0
  %272 = vmatmul.mubr.f32.gmra.mrb[0].mxu0 %v44
  %v273 = vpop.f32.mrb[0].mxu0
  %v274 = vadd.f32 %v110, %v273
  %v275 = vpop.f32.mrb[0].mxu0
  %276 = vmatprep.mubr.f32.mxu0 0.0
  %277 = vmatmul.mubr.f32.gmra.mrb[0].mxu0 %v45
  %v278 = vpop.f32.mrb[0].mxu0
  %v279 = vadd.f32 %v110, %v278
  %v280 = vpop.f32.mrb[0].mxu0
  %281 = vmatprep.mubr.f32.mxu0 0.0
  %282 = vmatmul.mubr.f32.gmra.mrb[0].mxu0 %v46
  %v283 = vpop.f32.mrb[0].mxu0
  %v284 = vadd.f32 %v110, %v283
  %v285 = vpop.f32.mrb[0].mxu0
  %286 = vmatprep.mubr.f32.mxu0 0.0
  %287 = vmatmul.mubr.f32.gmra.mrb[0].mxu0 %v47
  %v288 = vpop.f32.mrb[0].mxu0
  %v289 = vadd.f32 %v110, %v288
  %v290 = vpop.f32.mrb[0].mxu0
  %291 = vmatprep.mubr.f32.mxu0 0.0
  %292 = vmatmul.mubr.f32.gmra.mrb[0].mxu0 %v48
  %v293 = vpop.f32.mrb[0].mxu0
  %v294 = vadd.f32 %v110, %v293
  %v295 = vpop.f32.mrb[0].mxu0
  %296 = vmatprep.mubr.f32.mxu0 0.0
  %297 = vmatmul.mubr.f32.gmra.mrb[0].mxu0 %v49
  %v298 = vpop.f32.mrb[0].mxu0
  %v299 = vadd.f32 %v110, %v298
  %v300 = vpop.f32.mrb[0].mxu0
  %301 = vmatprep.mubr.f32.mxu0 0.0
  %302 = vmatmul.mubr.f32.gmra.mrb[0].mxu0 %v50
  %v303 = vpop.f32.mrb[0].mxu0
  %v304 = vadd.f32 %v110, %v303
  %v305 = vpop.f32.mrb[0].mxu0
  %306 = vmatprep.mubr.f32.mxu0 0.0
  %307 = vmatmul.mubr.f32.gmra.mrb[0].mxu0 %v51
  %v308 = vpop.f32.mrb[0].mxu0
  %v309 = vadd.f32 %v110, %v308
  %v310 = vpop.f32.mrb[0].mxu0
  %311 = vmatprep.mubr.f32.mxu0 0.0
  %312 = vmatmul.mubr.f32.gmra.mrb[0].mxu0 %v52
  %v313 = vpop.f32.mrb[0].mxu0
  %v314 = vadd.f32 %v110, %v313
  %v315 = vpop.f32.mrb[0].mxu0
  %316 = vmatprep.mubr.f32.mxu0 0.0
  %317 = vmatmul.mubr.f32.gmra.mrb[0].mxu0 %v53
  %v318 = vpop.f32.mrb[0].mxu0
  %v319 = vadd.f32 %v110, %v318
  %v320 = vpop.f32.mrb[0].mxu0
  %321 = vmatprep.mubr.f32.mxu0 0.0
  %322 = vmatmul.mubr.f32.gmra.mrb[0].mxu0 %v54
  %v323 = vpop.f32.mrb[0].mxu0
  %v324 = vadd.f32 %v110, %v323
  %v325 = vpop.f32.mrb[0].mxu0
  %326 = vmatprep.mubr.f32.mxu0 0.0
  %327 = vmatmul.mubr.f32.gmra.mrb[0].mxu0 %v55
  %v328 = vpop.f32.mrb[0].mxu0
  %v329 = vadd.f32 %v110, %v328
  %v330 = vpop.f32.mrb[0].mxu0
  %331 = vmatprep.mubr.f32.mxu0 0.0
  %332 = vmatmul.mubr.f32.gmra.mrb[0].mxu0 %v56
  %v333 = vpop.f32.mrb[0].mxu0
  %v334 = vadd.f32 %v110, %v333
  %v335 = vpop.f32.mrb[0].mxu0
  %336 = vmatprep.mubr.f32.mxu0 0.0
  %337 = vmatmul.mubr.f32.gmra.mrb[0].mxu0 %v57
  %v338 = vpop.f32.mrb[0].mxu0
  %v339 = vadd.f32 %v110, %v338
  %v340 = vpop.f32.mrb[0].mxu0
  %341 = vmatprep.mubr.f32.mxu0 0.0
  %342 = vmatmul.mubr.f32.gmra.mrb[0].mxu0 %v58
  %v343 = vpop.f32.mrb[0].mxu0
  %v344 = vadd.f32 %v110, %v343
  %v345 = vpop.f32.mrb[0].mxu0
  %346 = vmatprep.mubr.f32.mxu0 0.0
  %347 = vmatmul.mubr.f32.gmra.mrb[0].mxu0 %v59
  %v348 = vpop.f32.mrb[0].mxu0
  %v349 = vadd.f32 %v110, %v348
  %v350 = vpop.f32.mrb[0].mxu0
  %351 = vmatprep.mubr.f32.mxu0 0.0
  %352 = vmatmul.mubr.f32.gmra.mrb[0].mxu0 %v60
  %v353 = vpop.f32.mrb[0].mxu0
  %v354 = vadd.f32 %v110, %v353
  %v355 = vpop.f32.mrb[0].mxu0
  %356 = vmatprep.mubr.f32.mxu0 0.0
  %357 = vmatmul.mubr.f32.gmra.mrb[0].mxu0 %v61
  %v358 = vpop.f32.mrb[0].mxu0
  %v359 = vadd.f32 %v110, %v358
  %v360 = vpop.f32.mrb[0].mxu0
  %361 = vmatprep.mubr.f32.mxu0 0.0
  %362 = vmatmul.mubr.f32.gmra.mrb[0].mxu0 %v62
  %v363 = vpop.f32.mrb[0].mxu0
  %v364 = vadd.f32 %v110, %v363
  %v365 = vpop.f32.mrb[0].mxu0
  %366 = vmatprep.mubr.f32.mxu0 0.0
  %367 = vmatmul.mubr.f32.gmra.mrb[0].mxu0 %v63
  %v368 = vpop.f32.mrb[0].mxu0
  %v369 = vadd.f32 %v110, %v368
  %v370 = vpop.f32.mrb[0].mxu0
  %371 = vmatprep.mubr.f32.mxu0 0.0
  %372 = vmatmul.mubr.f32.gmra.mrb[0].mxu0 %v64
  %v373 = vpop.f32.mrb[0].mxu0
  %v374 = vadd.f32 %v110, %v373
  %v375 = vpop.f32.mrb[0].mxu0
  %376 = vmatprep.mubr.f32.mxu0 0.0
  %377 = vmatmul.mubr.f32.gmra.mrb[0].mxu0 %v65
  %v378 = vpop.f32.mrb[0].mxu0
  %v379 = vadd.f32 %v110, %v378
  %v380 = vpop.f32.mrb[0].mxu0
  %381 = vmatprep.mubr.f32.mxu0 0.0
  %382 = vmatmul.mubr.f32.gmra.mrb[0].mxu0 %v66
  %v383 = vpop.f32.mrb[0].mxu0
  %v384 = vadd.f32 %v110, %v383
  %v385 = vpop.f32.mrb[0].mxu0
  %386 = vmatprep.mubr.f32.mxu0 0.0
  %387 = vmatmul.mubr.f32.gmra.mrb[0].mxu0 %v67
  %v388 = vpop.f32.mrb[0].mxu0
  %v389 = vadd.f32 %v110, %v388
  %v390 = vpop.f32.mrb[0].mxu0
  %391 = vmatprep.mubr.f32.mxu0 0.0
  %392 = vmatmul.mubr.f32.gmra.mrb[0].mxu0 %v68
  %v393 = vpop.f32.mrb[0].mxu0
  %v394 = vadd.f32 %v110, %v393
  %v395 = vpop.f32.mrb[0].mxu0
  %396 = vmatprep.mubr.f32.mxu0 0.0
  %397 = vmatmul.mubr.f32.gmra.mrb[0].mxu0 %v69
  %v398 = vpop.f32.mrb[0].mxu0
  %v399 = vadd.f32 %v110, %v398
  %v400 = vpop.f32.mrb[0].mxu0
  %401 = vmatprep.mubr.f32.mxu0 0.0
  %402 = vmatmul.mubr.f32.gmra.mrb[0].mxu0 %v70
  %v403 = vpop.f32.mrb[0].mxu0
  %v404 = vadd.f32 %v110, %v403
  %v405 = vpop.f32.mrb[0].mxu0
  %406 = vmatprep.mubr.f32.mxu0 0.0
  %407 = vmatmul.mubr.f32.gmra.mrb[0].mxu0 %v71
  %v408 = vpop.f32.mrb[0].mxu0
  %v409 = vadd.f32 %v110, %v408
  %v410 = vpop.f32.mrb[0].mxu0
  %411 = vmatprep.mubr.f32.mxu0 0.0
  %412 = vmatmul.mubr.f32.gmra.mrb[0].mxu0 %v72
  %v413 = vpop.f32.mrb[0].mxu0
  %v414 = vadd.f32 %v110, %v413
  %v415 = vpop.f32.mrb[0].mxu0
  %416 = vmatprep.mubr.f32.mxu0 0.0
  %417 = vmatmul.mubr.f32.gmra.mrb[0].mxu0 %v73
  %v418 = vpop.f32.mrb[0].mxu0
  %v419 = vadd.f32 %v110, %v418
  %v420 = vpop.f32.mrb[0].mxu0
  %421 = vmatprep.mubr.f32.mxu0 0.0
  %422 = vmatmul.mubr.f32.gmra.mrb[0].mxu0 %v74
  %v423 = vpop.f32.mrb[0].mxu0
  %v424 = vadd.f32 %v110, %v423
  %v425 = vpop.f32.mrb[0].mxu0
  %426 = vmatprep.mubr.f32.mxu0 0.0
  %427 = vmatmul.mubr.f32.gmra.mrb[0].mxu0 %v75
  %v428 = vpop.f32.mrb[0].mxu0
  %v429 = vadd.f32 %v110, %v428
  %v430 = vpop.f32.mrb[0].mxu0
  %431 = vmatprep.mubr.f32.mxu0 0.0
  %432 = vmatmul.mubr.f32.gmra.mrb[0].mxu0 %v76
  %v433 = vpop.f32.mrb[0].mxu0
  %v434 = vadd.f32 %v110, %v433
  %v435 = vpop.f32.mrb[0].mxu0
  %436 = vmatprep.mubr.f32.mxu0 0.0
  %437 = vmatmul.mubr.f32.gmra.mrb[0].mxu0 %v77
  %v438 = vpop.f32.mrb[0].mxu0
  %v439 = vadd.f32 %v110, %v438
  %v440 = vpop.f32.mrb[0].mxu0
  %441 = vmatprep.mubr.f32.mxu0 0.0
  %442 = vmatmul.mubr.f32.gmra.mrb[0].mxu0 %v78
  %v443 = vpop.f32.mrb[0].mxu0
  %v444 = vadd.f32 %v110, %v443
  %v445 = vpop.f32.mrb[0].mxu0
  %446 = vmatprep.mubr.f32.mxu0 0.0
  %447 = vmatmul.mubr.f32.gmra.mrb[0].mxu0 %v79
  %v448 = vpop.f32.mrb[0].mxu0
  %v449 = vadd.f32 %v110, %v448
  %v450 = vpop.f32.mrb[0].mxu0
  %451 = vmatprep.mubr.f32.mxu0 0.0
  %452 = vmatmul.mubr.f32.gmra.mrb[0].mxu0 %v80
  %v453 = vpop.f32.mrb[0].mxu0
  %v454 = vadd.f32 %v110, %v453
  %v455 = vpop.f32.mrb[0].mxu0
  %456 = vmatprep.mubr.f32.mxu0 0.0
  %457 = vmatmul.mubr.f32.gmra.mrb[0].mxu0 %v81
  %v458 = vpop.f32.mrb[0].mxu0
  %v459 = vadd.f32 %v110, %v458
  %v460 = vpop.f32.mrb[0].mxu0
  %461 = vmatprep.mubr.f32.mxu0 0.0
  %462 = vmatmul.mubr.f32.gmra.mrb[0].mxu0 %v82
  %v463 = vpop.f32.mrb[0].mxu0
  %v464 = vadd.f32 %v110, %v463
  %v465 = vpop.f32.mrb[0].mxu0
  %466 = vmatprep.mubr.f32.mxu0 0.0
  %467 = vmatmul.mubr.f32.gmra.mrb[0].mxu0 %v83
  %v468 = vpop.f32.mrb[0].mxu0
  %v469 = vadd.f32 %v110, %v468
  %v470 = vpop.f32.mrb[0].mxu0
  %471 = vmatprep.mubr.f32.mxu0 0.0
  %472 = vmatmul.mubr.f32.gmra.mrb[0].mxu0 %v84
  %v473 = vpop.f32.mrb[0].mxu0
  %v474 = vadd.f32 %v110, %v473
  %v475 = vpop.f32.mrb[0].mxu0
  %476 = vmatprep.mubr.f32.mxu0 0.0
  %477 = vmatmul.mubr.f32.gmra.mrb[0].mxu0 %v85
  %v478 = vpop.f32.mrb[0].mxu0
  %v479 = vadd.f32 %v110, %v478
  %v480 = vpop.f32.mrb[0].mxu0
  %481 = vmatprep.mubr.f32.mxu0 0.0
  %482 = vmatmul.mubr.f32.gmra.mrb[0].mxu0 %v86
  %v483 = vpop.f32.mrb[0].mxu0
  %v484 = vadd.f32 %v110, %v483
  %v485 = vpop.f32.mrb[0].mxu0
  %486 = vmatprep.mubr.f32.mxu0 0.0
  %487 = vmatmul.mubr.f32.gmra.mrb[0].mxu0 %v87
  %v488 = vpop.f32.mrb[0].mxu0
  %v489 = vadd.f32 %v110, %v488
  %v490 = vpop.f32.mrb[0].mxu0
  %491 = vmatprep.mubr.f32.mxu0 0.0
  %492 = vmatmul.mubr.f32.gmra.mrb[0].mxu0 %v88
  %v493 = vpop.f32.mrb[0].mxu0
  %v494 = vadd.f32 %v110, %v493
  %v495 = vpop.f32.mrb[0].mxu0
  %496 = vdwg.mxu0
  %v497 = vmax.f32 %v179, 0.0
  %v498 = vmax.f32 %v184, 0.0
  %v499 = vmax.f32 %v189, 0.0
  %v500 = vmax.f32 %v194, 0.0
  %v501 = vmax.f32 %v199, 0.0
  %v502 = vmax.f32 %v204, 0.0
  %v503 = vmax.f32 %v209, 0.0
  %v504 = vmax.f32 %v214, 0.0
  %v505 = vmax.f32 %v219, 0.0
  %v506 = vmax.f32 %v224, 0.0
  %v507 = vmax.f32 %v229, 0.0
  %v508 = vmax.f32 %v234, 0.0
  %v509 = vmax.f32 %v239, 0.0
  %v510 = vmax.f32 %v244, 0.0
  %v511 = vmax.f32 %v249, 0.0
  %v512 = vmax.f32 %v254, 0.0
  %v513 = vmax.f32 %v259, 0.0
  %v514 = vmax.f32 %v264, 0.0
  %v515 = vmax.f32 %v269, 0.0
  %v516 = vmax.f32 %v274, 0.0
  %v517 = vmax.f32 %v279, 0.0
  %v518 = vmax.f32 %v284, 0.0
  %v519 = vmax.f32 %v289, 0.0
  %v520 = vmax.f32 %v294, 0.0
  %v521 = vmax.f32 %v299, 0.0
  %v522 = vmax.f32 %v304, 0.0
  %v523 = vmax.f32 %v309, 0.0
  %v524 = vmax.f32 %v314, 0.0
  %v525 = vmax.f32 %v319, 0.0
  %v526 = vmax.f32 %v324, 0.0
  %v527 = vmax.f32 %v329, 0.0
  %v528 = vmax.f32 %v334, 0.0
  %v529 = vmax.f32 %v339, 0.0
  %v530 = vmax.f32 %v344, 0.0
  %v531 = vmax.f32 %v349, 0.0
  %v532 = vmax.f32 %v354, 0.0
  %v533 = vmax.f32 %v359, 0.0
  %v534 = vmax.f32 %v364, 0.0
  %v535 = vmax.f32 %v369, 0.0
  %v536 = vmax.f32 %v374, 0.0
  %v537 = vmax.f32 %v379, 0.0
  %v538 = vmax.f32 %v384, 0.0
  %v539 = vmax.f32 %v389, 0.0
  %v540 = vmax.f32 %v394, 0.0
  %v541 = vmax.f32 %v399, 0.0
  %v542 = vmax.f32 %v404, 0.0
  %v543 = vmax.f32 %v409, 0.0
  %v544 = vmax.f32 %v414, 0.0
  %v545 = vmax.f32 %v419, 0.0
  %v546 = vmax.f32 %v424, 0.0
  %v547 = vmax.f32 %v429, 0.0
  %v548 = vmax.f32 %v434, 0.0
  %v549 = vmax.f32 %v439, 0.0
  %v550 = vmax.f32 %v444, 0.0
  %v551 = vmax.f32 %v449, 0.0
  %v552 = vmax.f32 %v454, 0.0
  %v553 = vmax.f32 %v459, 0.0
  %v554 = vmax.f32 %v464, 0.0
  %v555 = vmax.f32 %v469, 0.0
  %v556 = vmax.f32 %v474, 0.0
  %v557 = vmax.f32 %v479, 0.0
  %v558 = vmax.f32 %v484, 0.0
  %v559 = vmax.f32 %v489, 0.0
  %v560 = vmax.f32 %v494, 0.0
  %v561 = vld [vmem:[%s3] sm:$0xff]
  %v562 = vld [vmem:[%s3 + $0x8] sm:$0xff]
  %v563 = vld [vmem:[%s3 + $0x10] sm:$0xff]
  %v564 = vld [vmem:[%s3 + $0x18] sm:$0xff]
  %v565 = vld [vmem:[%s3 + $0x20] sm:$0xff]
  %v566 = vld [vmem:[%s3 + $0x28] sm:$0xff]
  %v567 = vld [vmem:[%s3 + $0x30] sm:$0xff]
  %v568 = vld [vmem:[%s3 + $0x38] sm:$0xff]
  %v569 = vld [vmem:[%s3 + $0x40] sm:$0xff]
  %v570 = vld [vmem:[%s3 + $0x48] sm:$0xff]
  %v571 = vld [vmem:[%s3 + $0x50] sm:$0xff]
  %v572 = vld [vmem:[%s3 + $0x58] sm:$0xff]
  %v573 = vld [vmem:[%s3 + $0x60] sm:$0xff]
  %v574 = vld [vmem:[%s3 + $0x68] sm:$0xff]
  %v575 = vld [vmem:[%s3 + $0x70] sm:$0xff]
  %v576 = vld [vmem:[%s3 + $0x78] sm:$0xff]
  %v577 = vld [vmem:[%s4] sm:$0x1]
  %v579 = vlaneseq
  %v580 = vshrl.u32 %v579, 7
  %v581 = vsub.s32 0, %v580
  %v582 = vrot.slane %v577, %v581
  %584 = vmatprep.subr.mxu0 0.0
  %585 = vmatpush1.msra.mxu0 %v561
  %586 = vmatprep.subr.mxu0 0.0
  %587 = vmatpush1.msra.mxu0 %v562
  %588 = vmatprep.subr.mxu0 0.0
  %589 = vmatpush1.msra.mxu0 %v563
  %590 = vmatprep.subr.mxu0 0.0
  %591 = vmatpush1.msra.mxu0 %v564
  %592 = vmatprep.subr.mxu0 0.0
  %593 = vmatpush1.msra.mxu0 %v565
  %594 = vmatprep.subr.mxu0 0.0
  %595 = vmatpush1.msra.mxu0 %v566
  %596 = vmatprep.subr.mxu0 0.0
  %597 = vmatpush1.msra.mxu0 %v567
  %598 = vmatprep.subr.mxu0 0.0
  %599 = vmatpush1.msra.mxu0 %v568
  %600 = vmatprep.subr.mxu0 0.0
  %601 = vmatpush1.msra.mxu0 %v569
  %602 = vmatprep.subr.mxu0 0.0
  %603 = vmatpush1.msra.mxu0 %v570
  %604 = vmatprep.subr.mxu0 0.0
  %605 = vmatpush1.msra.mxu0 %v571
  %606 = vmatprep.subr.mxu0 0.0
  %607 = vmatpush1.msra.mxu0 %v572
  %608 = vmatprep.subr.mxu0 0.0
  %609 = vmatpush1.msra.mxu0 %v573
  %610 = vmatprep.subr.mxu0 0.0
  %611 = vmatpush1.msra.mxu0 %v574
  %612 = vmatprep.subr.mxu0 0.0
  %613 = vmatpush1.msra.mxu0 %v575
  %614 = vmatprep.subr.mxu0 0.0
  %615 = vmatpush1.msra.mxu0 %v576
  %616 = vmatprep.subr.mxu0 0.0
  %617 = vmatpush1.msra.mxu0 0.0
  %618 = vmatprep.subr.mxu0 0.0
  %619 = vmatpush1.msra.mxu0 0.0
  %620 = vmatprep.subr.mxu0 0.0
  %621 = vmatpush1.msra.mxu0 0.0
  %622 = vmatprep.subr.mxu0 0.0
  %623 = vmatpush1.msra.mxu0 0.0
  %624 = vmatprep.subr.mxu0 0.0
  %625 = vmatpush1.msra.mxu0 0.0
  %626 = vmatprep.subr.mxu0 0.0
  %627 = vmatpush1.msra.mxu0 0.0
  %628 = vmatprep.subr.mxu0 0.0
  %629 = vmatpush1.msra.mxu0 0.0
  %630 = vmatprep.subr.mxu0 0.0
  %631 = vmatpush1.msra.mxu0 0.0
  %632 = vmatprep.subr.mxu0 0.0
  %633 = vmatpush1.msra.mxu0 0.0
  %634 = vmatprep.subr.mxu0 0.0
  %635 = vmatpush1.msra.mxu0 0.0
  %636 = vmatprep.subr.mxu0 0.0
  %637 = vmatpush1.msra.mxu0 0.0
  %638 = vmatprep.subr.mxu0 0.0
  %639 = vmatpush1.msra.mxu0 0.0
  %640 = vmatprep.subr.mxu0 0.0
  %641 = vmatpush1.msra.mxu0 0.0
  %642 = vmatprep.subr.mxu0 0.0
  %643 = vmatpush1.msra.mxu0 0.0
  %644 = vmatprep.subr.mxu0 0.0
  %645 = vmatpush1.msra.mxu0 0.0
  %646 = vmatprep.subr.mxu0 0.0
  %647 = vmatpush1.msra.mxu0 0.0
  %648 = vmatprep.mubr.f32.mxu0 0.0
  %649 = vmatmul.mubr.f32.gmra.mrb[0].mxu0 %v497
  %v650 = vpop.f32.mrb[0].mxu0
  %v651 = vadd.f32 %v582, %v650
  %v652 = vpop.f32.mrb[0].mxu0
  %653 = vmatprep.mubr.f32.mxu0 0.0
  %654 = vmatmul.mubr.f32.gmra.mrb[0].mxu0 %v498
  %v655 = vpop.f32.mrb[0].mxu0
  %v656 = vadd.f32 %v582, %v655
  %v657 = vpop.f32.mrb[0].mxu0
  %658 = vmatprep.mubr.f32.mxu0 0.0
  %659 = vmatmul.mubr.f32.gmra.mrb[0].mxu0 %v499
  %v660 = vpop.f32.mrb[0].mxu0
  %v661 = vadd.f32 %v582, %v660
  %v662 = vpop.f32.mrb[0].mxu0
  %663 = vmatprep.mubr.f32.mxu0 0.0
  %664 = vmatmul.mubr.f32.gmra.mrb[0].mxu0 %v500
  %v665 = vpop.f32.mrb[0].mxu0
  %v666 = vadd.f32 %v582, %v665
  %v667 = vpop.f32.mrb[0].mxu0
  %668 = vmatprep.mubr.f32.mxu0 0.0
  %669 = vmatmul.mubr.f32.gmra.mrb[0].mxu0 %v501
  %v670 = vpop.f32.mrb[0].mxu0
  %v671 = vadd.f32 %v582, %v670
  %v672 = vpop.f32.mrb[0].mxu0
  %673 = vmatprep.mubr.f32.mxu0 0.0
  %674 = vmatmul.mubr.f32.gmra.mrb[0].mxu0 %v502
  %v675 = vpop.f32.mrb[0].mxu0
  %v676 = vadd.f32 %v582, %v675
  %v677 = vpop.f32.mrb[0].mxu0
  %678 = vmatprep.mubr.f32.mxu0 0.0
  %679 = vmatmul.mubr.f32.gmra.mrb[0].mxu0 %v503
  %v680 = vpop.f32.mrb[0].mxu0
  %v681 = vadd.f32 %v582, %v680
  %v682 = vpop.f32.mrb[0].mxu0
  %683 = vmatprep.mubr.f32.mxu0 0.0
  %684 = vmatmul.mubr.f32.gmra.mrb[0].mxu0 %v504
  %v685 = vpop.f32.mrb[0].mxu0
  %v686 = vadd.f32 %v582, %v685
  %v687 = vpop.f32.mrb[0].mxu0
  %688 = vmatprep.mubr.f32.mxu0 0.0
  %689 = vmatmul.mubr.f32.gmra.mrb[0].mxu0 %v505
  %v690 = vpop.f32.mrb[0].mxu0
  %v691 = vadd.f32 %v582, %v690
  %v692 = vpop.f32.mrb[0].mxu0
  %693 = vmatprep.mubr.f32.mxu0 0.0
  %694 = vmatmul.mubr.f32.gmra.mrb[0].mxu0 %v506
  %v695 = vpop.f32.mrb[0].mxu0
  %v696 = vadd.f32 %v582, %v695
  %v697 = vpop.f32.mrb[0].mxu0
  %698 = vmatprep.mubr.f32.mxu0 0.0
  %699 = vmatmul.mubr.f32.gmra.mrb[0].mxu0 %v507
  %v700 = vpop.f32.mrb[0].mxu0
  %v701 = vadd.f32 %v582, %v700
  %v702 = vpop.f32.mrb[0].mxu0
  %703 = vmatprep.mubr.f32.mxu0 0.0
  %704 = vmatmul.mubr.f32.gmra.mrb[0].mxu0 %v508
  %v705 = vpop.f32.mrb[0].mxu0
  %v706 = vadd.f32 %v582, %v705
  %v707 = vpop.f32.mrb[0].mxu0
  %708 = vmatprep.mubr.f32.mxu0 0.0
  %709 = vmatmul.mubr.f32.gmra.mrb[0].mxu0 %v509
  %v710 = vpop.f32.mrb[0].mxu0
  %v711 = vadd.f32 %v582, %v710
  %v712 = vpop.f32.mrb[0].mxu0
  %713 = vmatprep.mubr.f32.mxu0 0.0
  %714 = vmatmul.mubr.f32.gmra.mrb[0].mxu0 %v510
  %v715 = vpop.f32.mrb[0].mxu0
  %v716 = vadd.f32 %v582, %v715
  %v717 = vpop.f32.mrb[0].mxu0
  %718 = vmatprep.mubr.f32.mxu0 0.0
  %719 = vmatmul.mubr.f32.gmra.mrb[0].mxu0 %v511
  %v720 = vpop.f32.mrb[0].mxu0
  %v721 = vadd.f32 %v582, %v720
  %v722 = vpop.f32.mrb[0].mxu0
  %723 = vmatprep.mubr.f32.mxu0 0.0
  %724 = vmatmul.mubr.f32.gmra.mrb[0].mxu0 %v512
  %v725 = vpop.f32.mrb[0].mxu0
  %v726 = vadd.f32 %v582, %v725
  %v727 = vpop.f32.mrb[0].mxu0
  %728 = vmatprep.mubr.f32.mxu0 0.0
  %729 = vmatmul.mubr.f32.gmra.mrb[0].mxu0 %v513
  %v730 = vpop.f32.mrb[0].mxu0
  %v731 = vadd.f32 %v582, %v730
  %v732 = vpop.f32.mrb[0].mxu0
  %733 = vmatprep.mubr.f32.mxu0 0.0
  %734 = vmatmul.mubr.f32.gmra.mrb[0].mxu0 %v514
  %v735 = vpop.f32.mrb[0].mxu0
  %v736 = vadd.f32 %v582, %v735
  %v737 = vpop.f32.mrb[0].mxu0
  %738 = vmatprep.mubr.f32.mxu0 0.0
  %739 = vmatmul.mubr.f32.gmra.mrb[0].mxu0 %v515
  %v740 = vpop.f32.mrb[0].mxu0
  %v741 = vadd.f32 %v582, %v740
  %v742 = vpop.f32.mrb[0].mxu0
  %743 = vmatprep.mubr.f32.mxu0 0.0
  %744 = vmatmul.mubr.f32.gmra.mrb[0].mxu0 %v516
  %v745 = vpop.f32.mrb[0].mxu0
  %v746 = vadd.f32 %v582, %v745
  %v747 = vpop.f32.mrb[0].mxu0
  %748 = vmatprep.mubr.f32.mxu0 0.0
  %749 = vmatmul.mubr.f32.gmra.mrb[0].mxu0 %v517
  %v750 = vpop.f32.mrb[0].mxu0
  %v751 = vadd.f32 %v582, %v750
  %v752 = vpop.f32.mrb[0].mxu0
  %753 = vmatprep.mubr.f32.mxu0 0.0
  %754 = vmatmul.mubr.f32.gmra.mrb[0].mxu0 %v518
  %v755 = vpop.f32.mrb[0].mxu0
  %v756 = vadd.f32 %v582, %v755
  %v757 = vpop.f32.mrb[0].mxu0
  %758 = vmatprep.mubr.f32.mxu0 0.0
  %759 = vmatmul.mubr.f32.gmra.mrb[0].mxu0 %v519
  %v760 = vpop.f32.mrb[0].mxu0
  %v761 = vadd.f32 %v582, %v760
  %v762 = vpop.f32.mrb[0].mxu0
  %763 = vmatprep.mubr.f32.mxu0 0.0
  %764 = vmatmul.mubr.f32.gmra.mrb[0].mxu0 %v520
  %v765 = vpop.f32.mrb[0].mxu0
  %v766 = vadd.f32 %v582, %v765
  %v767 = vpop.f32.mrb[0].mxu0
  %768 = vmatprep.mubr.f32.mxu0 0.0
  %769 = vmatmul.mubr.f32.gmra.mrb[0].mxu0 %v521
  %v770 = vpop.f32.mrb[0].mxu0
  %v771 = vadd.f32 %v582, %v770
  %v772 = vpop.f32.mrb[0].mxu0
  %773 = vmatprep.mubr.f32.mxu0 0.0
  %774 = vmatmul.mubr.f32.gmra.mrb[0].mxu0 %v522
  %v775 = vpop.f32.mrb[0].mxu0
  %v776 = vadd.f32 %v582, %v775
  %v777 = vpop.f32.mrb[0].mxu0
  %778 = vmatprep.mubr.f32.mxu0 0.0
  %779 = vmatmul.mubr.f32.gmra.mrb[0].mxu0 %v523
  %v780 = vpop.f32.mrb[0].mxu0
  %v781 = vadd.f32 %v582, %v780
  %v782 = vpop.f32.mrb[0].mxu0
  %783 = vmatprep.mubr.f32.mxu0 0.0
  %784 = vmatmul.mubr.f32.gmra.mrb[0].mxu0 %v524
  %v785 = vpop.f32.mrb[0].mxu0
  %v786 = vadd.f32 %v582, %v785
  %v787 = vpop.f32.mrb[0].mxu0
  %788 = vmatprep.mubr.f32.mxu0 0.0
  %789 = vmatmul.mubr.f32.gmra.mrb[0].mxu0 %v525
  %v790 = vpop.f32.mrb[0].mxu0
  %v791 = vadd.f32 %v582, %v790
  %v792 = vpop.f32.mrb[0].mxu0
  %793 = vmatprep.mubr.f32.mxu0 0.0
  %794 = vmatmul.mubr.f32.gmra.mrb[0].mxu0 %v526
  %v795 = vpop.f32.mrb[0].mxu0
  %v796 = vadd.f32 %v582, %v795
  %v797 = vpop.f32.mrb[0].mxu0
  %798 = vmatprep.mubr.f32.mxu0 0.0
  %799 = vmatmul.mubr.f32.gmra.mrb[0].mxu0 %v527
  %v800 = vpop.f32.mrb[0].mxu0
  %v801 = vadd.f32 %v582, %v800
  %v802 = vpop.f32.mrb[0].mxu0
  %803 = vmatprep.mubr.f32.mxu0 0.0
  %804 = vmatmul.mubr.f32.gmra.mrb[0].mxu0 %v528
  %v805 = vpop.f32.mrb[0].mxu0
  %v806 = vadd.f32 %v582, %v805
  %v807 = vpop.f32.mrb[0].mxu0
  %808 = vmatprep.mubr.f32.mxu0 0.0
  %809 = vmatmul.mubr.f32.gmra.mrb[0].mxu0 %v529
  %v810 = vpop.f32.mrb[0].mxu0
  %v811 = vadd.f32 %v582, %v810
  %v812 = vpop.f32.mrb[0].mxu0
  %813 = vmatprep.mubr.f32.mxu0 0.0
  %814 = vmatmul.mubr.f32.gmra.mrb[0].mxu0 %v530
  %v815 = vpop.f32.mrb[0].mxu0
  %v816 = vadd.f32 %v582, %v815
  %v817 = vpop.f32.mrb[0].mxu0
  %818 = vmatprep.mubr.f32.mxu0 0.0
  %819 = vmatmul.mubr.f32.gmra.mrb[0].mxu0 %v531
  %v820 = vpop.f32.mrb[0].mxu0
  %v821 = vadd.f32 %v582, %v820
  %v822 = vpop.f32.mrb[0].mxu0
  %823 = vmatprep.mubr.f32.mxu0 0.0
  %824 = vmatmul.mubr.f32.gmra.mrb[0].mxu0 %v532
  %v825 = vpop.f32.mrb[0].mxu0
  %v826 = vadd.f32 %v582, %v825
  %v827 = vpop.f32.mrb[0].mxu0
  %828 = vmatprep.mubr.f32.mxu0 0.0
  %829 = vmatmul.mubr.f32.gmra.mrb[0].mxu0 %v533
  %v830 = vpop.f32.mrb[0].mxu0
  %v831 = vadd.f32 %v582, %v830
  %v832 = vpop.f32.mrb[0].mxu0
  %833 = vmatprep.mubr.f32.mxu0 0.0
  %834 = vmatmul.mubr.f32.gmra.mrb[0].mxu0 %v534
  %v835 = vpop.f32.mrb[0].mxu0
  %v836 = vadd.f32 %v582, %v835
  %v837 = vpop.f32.mrb[0].mxu0
  %838 = vmatprep.mubr.f32.mxu0 0.0
  %839 = vmatmul.mubr.f32.gmra.mrb[0].mxu0 %v535
  %v840 = vpop.f32.mrb[0].mxu0
  %v841 = vadd.f32 %v582, %v840
  %v842 = vpop.f32.mrb[0].mxu0
  %843 = vmatprep.mubr.f32.mxu0 0.0
  %844 = vmatmul.mubr.f32.gmra.mrb[0].mxu0 %v536
  %v845 = vpop.f32.mrb[0].mxu0
  %v846 = vadd.f32 %v582, %v845
  %v847 = vpop.f32.mrb[0].mxu0
  %848 = vmatprep.mubr.f32.mxu0 0.0
  %849 = vmatmul.mubr.f32.gmra.mrb[0].mxu0 %v537
  %v850 = vpop.f32.mrb[0].mxu0
  %v851 = vadd.f32 %v582, %v850
  %v852 = vpop.f32.mrb[0].mxu0
  %853 = vmatprep.mubr.f32.mxu0 0.0
  %854 = vmatmul.mubr.f32.gmra.mrb[0].mxu0 %v538
  %v855 = vpop.f32.mrb[0].mxu0
  %v856 = vadd.f32 %v582, %v855
  %v857 = vpop.f32.mrb[0].mxu0
  %858 = vmatprep.mubr.f32.mxu0 0.0
  %859 = vmatmul.mubr.f32.gmra.mrb[0].mxu0 %v539
  %v860 = vpop.f32.mrb[0].mxu0
  %v861 = vadd.f32 %v582, %v860
  %v862 = vpop.f32.mrb[0].mxu0
  %863 = vmatprep.mubr.f32.mxu0 0.0
  %864 = vmatmul.mubr.f32.gmra.mrb[0].mxu0 %v540
  %v865 = vpop.f32.mrb[0].mxu0
  %v866 = vadd.f32 %v582, %v865
  %v867 = vpop.f32.mrb[0].mxu0
  %868 = vmatprep.mubr.f32.mxu0 0.0
  %869 = vmatmul.mubr.f32.gmra.mrb[0].mxu0 %v541
  %v870 = vpop.f32.mrb[0].mxu0
  %v871 = vadd.f32 %v582, %v870
  %v872 = vpop.f32.mrb[0].mxu0
  %873 = vmatprep.mubr.f32.mxu0 0.0
  %874 = vmatmul.mubr.f32.gmra.mrb[0].mxu0 %v542
  %v875 = vpop.f32.mrb[0].mxu0
  %v876 = vadd.f32 %v582, %v875
  %v877 = vpop.f32.mrb[0].mxu0
  %878 = vmatprep.mubr.f32.mxu0 0.0
  %879 = vmatmul.mubr.f32.gmra.mrb[0].mxu0 %v543
  %v880 = vpop.f32.mrb[0].mxu0
  %v881 = vadd.f32 %v582, %v880
  %v882 = vpop.f32.mrb[0].mxu0
  %883 = vmatprep.mubr.f32.mxu0 0.0
  %884 = vmatmul.mubr.f32.gmra.mrb[0].mxu0 %v544
  %v885 = vpop.f32.mrb[0].mxu0
  %v886 = vadd.f32 %v582, %v885
  %v887 = vpop.f32.mrb[0].mxu0
  %888 = vmatprep.mubr.f32.mxu0 0.0
  %889 = vmatmul.mubr.f32.gmra.mrb[0].mxu0 %v545
  %v890 = vpop.f32.mrb[0].mxu0
  %v891 = vadd.f32 %v582, %v890
  %v892 = vpop.f32.mrb[0].mxu0
  %893 = vmatprep.mubr.f32.mxu0 0.0
  %894 = vmatmul.mubr.f32.gmra.mrb[0].mxu0 %v546
  %v895 = vpop.f32.mrb[0].mxu0
  %v896 = vadd.f32 %v582, %v895
  %v897 = vpop.f32.mrb[0].mxu0
  %898 = vmatprep.mubr.f32.mxu0 0.0
  %899 = vmatmul.mubr.f32.gmra.mrb[0].mxu0 %v547
  %v900 = vpop.f32.mrb[0].mxu0
  %v901 = vadd.f32 %v582, %v900
  %v902 = vpop.f32.mrb[0].mxu0
  %903 = vmatprep.mubr.f32.mxu0 0.0
  %904 = vmatmul.mubr.f32.gmra.mrb[0].mxu0 %v548
  %v905 = vpop.f32.mrb[0].mxu0
  %v906 = vadd.f32 %v582, %v905
  %v907 = vpop.f32.mrb[0].mxu0
  %908 = vmatprep.mubr.f32.mxu0 0.0
  %909 = vmatmul.mubr.f32.gmra.mrb[0].mxu0 %v549
  %v910 = vpop.f32.mrb[0].mxu0
  %v911 = vadd.f32 %v582, %v910
  %v912 = vpop.f32.mrb[0].mxu0
  %913 = vmatprep.mubr.f32.mxu0 0.0
  %914 = vmatmul.mubr.f32.gmra.mrb[0].mxu0 %v550
  %v915 = vpop.f32.mrb[0].mxu0
  %v916 = vadd.f32 %v582, %v915
  %v917 = vpop.f32.mrb[0].mxu0
  %918 = vmatprep.mubr.f32.mxu0 0.0
  %919 = vmatmul.mubr.f32.gmra.mrb[0].mxu0 %v551
  %v920 = vpop.f32.mrb[0].mxu0
  %v921 = vadd.f32 %v582, %v920
  %v922 = vpop.f32.mrb[0].mxu0
  %923 = vmatprep.mubr.f32.mxu0 0.0
  %924 = vmatmul.mubr.f32.gmra.mrb[0].mxu0 %v552
  %v925 = vpop.f32.mrb[0].mxu0
  %v926 = vadd.f32 %v582, %v925
  %v927 = vpop.f32.mrb[0].mxu0
  %928 = vmatprep.mubr.f32.mxu0 0.0
  %929 = vmatmul.mubr.f32.gmra.mrb[0].mxu0 %v553
  %v930 = vpop.f32.mrb[0].mxu0
  %v931 = vadd.f32 %v582, %v930
  %v932 = vpop.f32.mrb[0].mxu0
  %933 = vmatprep.mubr.f32.mxu0 0.0
  %934 = vmatmul.mubr.f32.gmra.mrb[0].mxu0 %v554
  %v935 = vpop.f32.mrb[0].mxu0
  %v936 = vadd.f32 %v582, %v935
  %v937 = vpop.f32.mrb[0].mxu0
  %938 = vmatprep.mubr.f32.mxu0 0.0
  %939 = vmatmul.mubr.f32.gmra.mrb[0].mxu0 %v555
  %v940 = vpop.f32.mrb[0].mxu0
  %v941 = vadd.f32 %v582, %v940
  %v942 = vpop.f32.mrb[0].mxu0
  %943 = vmatprep.mubr.f32.mxu0 0.0
  %944 = vmatmul.mubr.f32.gmra.mrb[0].mxu0 %v556
  %v945 = vpop.f32.mrb[0].mxu0
  %v946 = vadd.f32 %v582, %v945
  %v947 = vpop.f32.mrb[0].mxu0
  %948 = vmatprep.mubr.f32.mxu0 0.0
  %949 = vmatmul.mubr.f32.gmra.mrb[0].mxu0 %v557
  %v950 = vpop.f32.mrb[0].mxu0
  %v951 = vadd.f32 %v582, %v950
  %v952 = vpop.f32.mrb[0].mxu0
  %953 = vmatprep.mubr.f32.mxu0 0.0
  %954 = vmatmul.mubr.f32.gmra.mrb[0].mxu0 %v558
  %v955 = vpop.f32.mrb[0].mxu0
  %v956 = vadd.f32 %v582, %v955
  %v957 = vpop.f32.mrb[0].mxu0
  %958 = vmatprep.mubr.f32.mxu0 0.0
  %959 = vmatmul.mubr.f32.gmra.mrb[0].mxu0 %v559
  %v960 = vpop.f32.mrb[0].mxu0
  %v961 = vadd.f32 %v582, %v960
  %v962 = vpop.f32.mrb[0].mxu0
  %963 = vmatprep.mubr.f32.mxu0 0.0
  %964 = vmatmul.mubr.f32.gmra.mrb[0].mxu0 %v560
  %v965 = vpop.f32.mrb[0].mxu0
  %v966 = vadd.f32 %v582, %v965
  %v967 = vpop.f32.mrb[0].mxu0
  %968 = vdwg.mxu0
  %s969 = smul.u32 0, 512
  %v970 = vlaneseq
  %v971 = vshrl.u32 %v970, 7
  %v972 = vadd.s32 %v971, 8
  %v973 = vadd.s32 %v971, 16
  %v974 = vadd.s32 %v971, 24
  %v975 = vadd.s32 %v971, 32
  %v976 = vadd.s32 %v971, 40
  %v977 = vadd.s32 %v971, 48
  %v978 = vadd.s32 %v971, 56
  %v979 = vadd.s32 %v971, 64
  %v980 = vadd.s32 %v971, 72
  %v981 = vadd.s32 %v971, 80
  %v982 = vadd.s32 %v971, 88
  %v983 = vadd.s32 %v971, 96
  %v984 = vadd.s32 %v971, 104
  %v985 = vadd.s32 %v971, 112
  %v986 = vadd.s32 %v971, 120
  %v987 = vadd.s32 %v971, 128
  %v988 = vadd.s32 %v971, 136
  %v989 = vadd.s32 %v971, 144
  %v990 = vadd.s32 %v971, 152
  %v991 = vadd.s32 %v971, 160
  %v992 = vadd.s32 %v971, 168
  %v993 = vadd.s32 %v971, 176
  %v994 = vadd.s32 %v971, 184
  %v995 = vadd.s32 %v971, 192
  %v996 = vadd.s32 %v971, 200
  %v997 = vadd.s32 %v971, 208
  %v998 = vadd.s32 %v971, 216
  %v999 = vadd.s32 %v971, 224
  %v1000 = vadd.s32 %v971, 232
  %v1001 = vadd.s32 %v971, 240
  %v1002 = vadd.s32 %v971, 248
  %v1003 = vadd.s32 %v971, 256
  %v1004 = vadd.s32 %v971, 264
  %v1005 = vadd.s32 %v971, 272
  %v1006 = vadd.s32 %v971, 280
  %v1007 = vadd.s32 %v971, 288
  %v1008 = vadd.s32 %v971, 296
  %v1009 = vadd.s32 %v971, 304
  %v1010 = vadd.s32 %v971, 312
  %v1011 = vadd.s32 %v971, 320
  %v1012 = vadd.s32 %v971, 328
  %v1013 = vadd.s32 %v971, 336
  %v1014 = vadd.s32 %v971, 344
  %v1015 = vadd.s32 %v971, 352
  %v1016 = vadd.s32 %v971, 360
  %v1017 = vadd.s32 %v971, 368
  %v1018 = vadd.s32 %v971, 376
  %v1019 = vadd.s32 %v971, 384
  %v1020 = vadd.s32 %v971, 392
  %v1021 = vadd.s32 %v971, 400
  %v1022 = vadd.s32 %v971, 408
  %v1023 = vadd.s32 %v971, 416
  %v1024 = vadd.s32 %v971, 424
  %v1025 = vadd.s32 %v971, 432
  %v1026 = vadd.s32 %v971, 440
  %v1027 = vadd.s32 %v971, 448
  %v1028 = vadd.s32 %v971, 456
  %v1029 = vadd.s32 %v971, 464
  %v1030 = vadd.s32 %v971, 472
  %v1031 = vadd.s32 %v971, 480
  %v1032 = vadd.s32 %v971, 488
  %v1033 = vadd.s32 %v971, 496
  %v1034 = vadd.s32 %v971, 504
  %v1035 = vstv %s969
  %v1036 = vadd.s32 %v1035, %v971
  %v1037 = vadd.s32 %v1035, %v972
  %v1038 = vadd.s32 %v1035, %v973
  %v1039 = vadd.s32 %v1035, %v974
  %v1040 = vadd.s32 %v1035, %v975
  %v1041 = vadd.s32 %v1035, %v976
  %v1042 = vadd.s32 %v1035, %v977
  %v1043 = vadd.s32 %v1035, %v978
  %v1044 = vadd.s32 %v1035, %v979
  %v1045 = vadd.s32 %v1035, %v980
  %v1046 = vadd.s32 %v1035, %v981
  %v1047 = vadd.s32 %v1035, %v982
  %v1048 = vadd.s32 %v1035, %v983
  %v1049 = vadd.s32 %v1035, %v984
  %v1050 = vadd.s32 %v1035, %v985
  %v1051 = vadd.s32 %v1035, %v986
  %v1052 = vadd.s32 %v1035, %v987
  %v1053 = vadd.s32 %v1035, %v988
  %v1054 = vadd.s32 %v1035, %v989
  %v1055 = vadd.s32 %v1035, %v990
  %v1056 = vadd.s32 %v1035, %v991
  %v1057 = vadd.s32 %v1035, %v992
  %v1058 = vadd.s32 %v1035, %v993
  %v1059 = vadd.s32 %v1035, %v994
  %v1060 = vadd.s32 %v1035, %v995
  %v1061 = vadd.s32 %v1035, %v996
  %v1062 = vadd.s32 %v1035, %v997
  %v1063 = vadd.s32 %v1035, %v998
  %v1064 = vadd.s32 %v1035, %v999
  %v1065 = vadd.s32 %v1035, %v1000
  %v1066 = vadd.s32 %v1035, %v1001
  %v1067 = vadd.s32 %v1035, %v1002
  %v1068 = vadd.s32 %v1035, %v1003
  %v1069 = vadd.s32 %v1035, %v1004
  %v1070 = vadd.s32 %v1035, %v1005
  %v1071 = vadd.s32 %v1035, %v1006
  %v1072 = vadd.s32 %v1035, %v1007
  %v1073 = vadd.s32 %v1035, %v1008
  %v1074 = vadd.s32 %v1035, %v1009
  %v1075 = vadd.s32 %v1035, %v1010
  %v1076 = vadd.s32 %v1035, %v1011
  %v1077 = vadd.s32 %v1035, %v1012
  %v1078 = vadd.s32 %v1035, %v1013
  %v1079 = vadd.s32 %v1035, %v1014
  %v1080 = vadd.s32 %v1035, %v1015
  %v1081 = vadd.s32 %v1035, %v1016
  %v1082 = vadd.s32 %v1035, %v1017
  %v1083 = vadd.s32 %v1035, %v1018
  %v1084 = vadd.s32 %v1035, %v1019
  %v1085 = vadd.s32 %v1035, %v1020
  %v1086 = vadd.s32 %v1035, %v1021
  %v1087 = vadd.s32 %v1035, %v1022
  %v1088 = vadd.s32 %v1035, %v1023
  %v1089 = vadd.s32 %v1035, %v1024
  %v1090 = vadd.s32 %v1035, %v1025
  %v1091 = vadd.s32 %v1035, %v1026
  %v1092 = vadd.s32 %v1035, %v1027
  %v1093 = vadd.s32 %v1035, %v1028
  %v1094 = vadd.s32 %v1035, %v1029
  %v1095 = vadd.s32 %v1035, %v1030
  %v1096 = vadd.s32 %v1035, %v1031
  %v1097 = vadd.s32 %v1035, %v1032
  %v1098 = vadd.s32 %v1035, %v1033
  %v1099 = vadd.s32 %v1035, %v1034
  %vm1100 = vcmp.lt.s32.totalorder %v1036, 300
  %vm1101 = vcmp.lt.s32.totalorder %v1037, 300
  %vm1102 = vcmp.lt.s32.totalorder %v1038, 300
  %vm1103 = vcmp.lt.s32.totalorder %v1039, 300
  %vm1104 = vcmp.lt.s32.totalorder %v1040, 300
  %vm1105 = vcmp.lt.s32.totalorder %v1041, 300
  %vm1106 = vcmp.lt.s32.totalorder %v1042, 300
  %vm1107 = vcmp.lt.s32.totalorder %v1043, 300
  %vm1108 = vcmp.lt.s32.totalorder %v1044, 300
  %vm1109 = vcmp.lt.s32.totalorder %v1045, 300
  %vm1110 = vcmp.lt.s32.totalorder %v1046, 300
  %vm1111 = vcmp.lt.s32.totalorder %v1047, 300
  %vm1112 = vcmp.lt.s32.totalorder %v1048, 300
  %vm1113 = vcmp.lt.s32.totalorder %v1049, 300
  %vm1114 = vcmp.lt.s32.totalorder %v1050, 300
  %vm1115 = vcmp.lt.s32.totalorder %v1051, 300
  %vm1116 = vcmp.lt.s32.totalorder %v1052, 300
  %vm1117 = vcmp.lt.s32.totalorder %v1053, 300
  %vm1118 = vcmp.lt.s32.totalorder %v1054, 300
  %vm1119 = vcmp.lt.s32.totalorder %v1055, 300
  %vm1120 = vcmp.lt.s32.totalorder %v1056, 300
  %vm1121 = vcmp.lt.s32.totalorder %v1057, 300
  %vm1122 = vcmp.lt.s32.totalorder %v1058, 300
  %vm1123 = vcmp.lt.s32.totalorder %v1059, 300
  %vm1124 = vcmp.lt.s32.totalorder %v1060, 300
  %vm1125 = vcmp.lt.s32.totalorder %v1061, 300
  %vm1126 = vcmp.lt.s32.totalorder %v1062, 300
  %vm1127 = vcmp.lt.s32.totalorder %v1063, 300
  %vm1128 = vcmp.lt.s32.totalorder %v1064, 300
  %vm1129 = vcmp.lt.s32.totalorder %v1065, 300
  %vm1130 = vcmp.lt.s32.totalorder %v1066, 300
  %vm1131 = vcmp.lt.s32.totalorder %v1067, 300
  %vm1132 = vcmp.lt.s32.totalorder %v1068, 300
  %vm1133 = vcmp.lt.s32.totalorder %v1069, 300
  %vm1134 = vcmp.lt.s32.totalorder %v1070, 300
  %vm1135 = vcmp.lt.s32.totalorder %v1071, 300
  %vm1136 = vcmp.lt.s32.totalorder %v1072, 300
  %vm1137 = vcmp.lt.s32.totalorder %v1073, 300
  %vm1138 = vcmp.lt.s32.totalorder %v1074, 300
  %vm1139 = vcmp.lt.s32.totalorder %v1075, 300
  %vm1140 = vcmp.lt.s32.totalorder %v1076, 300
  %vm1141 = vcmp.lt.s32.totalorder %v1077, 300
  %vm1142 = vcmp.lt.s32.totalorder %v1078, 300
  %vm1143 = vcmp.lt.s32.totalorder %v1079, 300
  %vm1144 = vcmp.lt.s32.totalorder %v1080, 300
  %vm1145 = vcmp.lt.s32.totalorder %v1081, 300
  %vm1146 = vcmp.lt.s32.totalorder %v1082, 300
  %vm1147 = vcmp.lt.s32.totalorder %v1083, 300
  %vm1148 = vcmp.lt.s32.totalorder %v1084, 300
  %vm1149 = vcmp.lt.s32.totalorder %v1085, 300
  %vm1150 = vcmp.lt.s32.totalorder %v1086, 300
  %vm1151 = vcmp.lt.s32.totalorder %v1087, 300
  %vm1152 = vcmp.lt.s32.totalorder %v1088, 300
  %vm1153 = vcmp.lt.s32.totalorder %v1089, 300
  %vm1154 = vcmp.lt.s32.totalorder %v1090, 300
  %vm1155 = vcmp.lt.s32.totalorder %v1091, 300
  %vm1156 = vcmp.lt.s32.totalorder %v1092, 300
  %vm1157 = vcmp.lt.s32.totalorder %v1093, 300
  %vm1158 = vcmp.lt.s32.totalorder %v1094, 300
  %vm1159 = vcmp.lt.s32.totalorder %v1095, 300
  %vm1160 = vcmp.lt.s32.totalorder %v1096, 300
  %vm1161 = vcmp.lt.s32.totalorder %v1097, 300
  %vm1162 = vcmp.lt.s32.totalorder %v1098, 300
  %vm1163 = vcmp.lt.s32.totalorder %v1099, 300
  %v1164 = vsel %vm1100, 1, 0
  %v1165 = vsel %vm1101, 1, 0
  %v1166 = vsel %vm1102, 1, 0
  %v1167 = vsel %vm1103, 1, 0
  %v1168 = vsel %vm1104, 1, 0
  %v1169 = vsel %vm1105, 1, 0
  %v1170 = vsel %vm1106, 1, 0
  %v1171 = vsel %vm1107, 1, 0
  %v1172 = vsel %vm1108, 1, 0
  %v1173 = vsel %vm1109, 1, 0
  %v1174 = vsel %vm1110, 1, 0
  %v1175 = vsel %vm1111, 1, 0
  %v1176 = vsel %vm1112, 1, 0
  %v1177 = vsel %vm1113, 1, 0
  %v1178 = vsel %vm1114, 1, 0
  %v1179 = vsel %vm1115, 1, 0
  %v1180 = vsel %vm1116, 1, 0
  %v1181 = vsel %vm1117, 1, 0
  %v1182 = vsel %vm1118, 1, 0
  %v1183 = vsel %vm1119, 1, 0
  %v1184 = vsel %vm1120, 1, 0
  %v1185 = vsel %vm1121, 1, 0
  %v1186 = vsel %vm1122, 1, 0
  %v1187 = vsel %vm1123, 1, 0
  %v1188 = vsel %vm1124, 1, 0
  %v1189 = vsel %vm1125, 1, 0
  %v1190 = vsel %vm1126, 1, 0
  %v1191 = vsel %vm1127, 1, 0
  %v1192 = vsel %vm1128, 1, 0
  %v1193 = vsel %vm1129, 1, 0
  %v1194 = vsel %vm1130, 1, 0
  %v1195 = vsel %vm1131, 1, 0
  %v1196 = vsel %vm1132, 1, 0
  %v1197 = vsel %vm1133, 1, 0
  %v1198 = vsel %vm1134, 1, 0
  %v1199 = vsel %vm1135, 1, 0
  %v1200 = vsel %vm1136, 1, 0
  %v1201 = vsel %vm1137, 1, 0
  %v1202 = vsel %vm1138, 1, 0
  %v1203 = vsel %vm1139, 1, 0
  %v1204 = vsel %vm1140, 1, 0
  %v1205 = vsel %vm1141, 1, 0
  %v1206 = vsel %vm1142, 1, 0
  %v1207 = vsel %vm1143, 1, 0
  %v1208 = vsel %vm1144, 1, 0
  %v1209 = vsel %vm1145, 1, 0
  %v1210 = vsel %vm1146, 1, 0
  %v1211 = vsel %vm1147, 1, 0
  %v1212 = vsel %vm1148, 1, 0
  %v1213 = vsel %vm1149, 1, 0
  %v1214 = vsel %vm1150, 1, 0
  %v1215 = vsel %vm1151, 1, 0
  %v1216 = vsel %vm1152, 1, 0
  %v1217 = vsel %vm1153, 1, 0
  %v1218 = vsel %vm1154, 1, 0
  %v1219 = vsel %vm1155, 1, 0
  %v1220 = vsel %vm1156, 1, 0
  %v1221 = vsel %vm1157, 1, 0
  %v1222 = vsel %vm1158, 1, 0
  %v1223 = vsel %vm1159, 1, 0
  %v1224 = vsel %vm1160, 1, 0
  %v1225 = vsel %vm1161, 1, 0
  %v1226 = vsel %vm1162, 1, 0
  %v1227 = vsel %vm1163, 1, 0
  %vm1228 = vcmp.eq.s32.totalorder %v1164, 1
  %vm1229 = vcmp.eq.s32.totalorder %v1165, 1
  %vm1230 = vcmp.eq.s32.totalorder %v1166, 1
  %vm1231 = vcmp.eq.s32.totalorder %v1167, 1
  %vm1232 = vcmp.eq.s32.totalorder %v1168, 1
  %vm1233 = vcmp.eq.s32.totalorder %v1169, 1
  %vm1234 = vcmp.eq.s32.totalorder %v1170, 1
  %vm1235 = vcmp.eq.s32.totalorder %v1171, 1
  %vm1236 = vcmp.eq.s32.totalorder %v1172, 1
  %vm1237 = vcmp.eq.s32.totalorder %v1173, 1
  %vm1238 = vcmp.eq.s32.totalorder %v1174, 1
  %vm1239 = vcmp.eq.s32.totalorder %v1175, 1
  %vm1240 = vcmp.eq.s32.totalorder %v1176, 1
  %vm1241 = vcmp.eq.s32.totalorder %v1177, 1
  %vm1242 = vcmp.eq.s32.totalorder %v1178, 1
  %vm1243 = vcmp.eq.s32.totalorder %v1179, 1
  %vm1244 = vcmp.eq.s32.totalorder %v1180, 1
  %vm1245 = vcmp.eq.s32.totalorder %v1181, 1
  %vm1246 = vcmp.eq.s32.totalorder %v1182, 1
  %vm1247 = vcmp.eq.s32.totalorder %v1183, 1
  %vm1248 = vcmp.eq.s32.totalorder %v1184, 1
  %vm1249 = vcmp.eq.s32.totalorder %v1185, 1
  %vm1250 = vcmp.eq.s32.totalorder %v1186, 1
  %vm1251 = vcmp.eq.s32.totalorder %v1187, 1
  %vm1252 = vcmp.eq.s32.totalorder %v1188, 1
  %vm1253 = vcmp.eq.s32.totalorder %v1189, 1
  %vm1254 = vcmp.eq.s32.totalorder %v1190, 1
  %vm1255 = vcmp.eq.s32.totalorder %v1191, 1
  %vm1256 = vcmp.eq.s32.totalorder %v1192, 1
  %vm1257 = vcmp.eq.s32.totalorder %v1193, 1
  %vm1258 = vcmp.eq.s32.totalorder %v1194, 1
  %vm1259 = vcmp.eq.s32.totalorder %v1195, 1
  %vm1260 = vcmp.eq.s32.totalorder %v1196, 1
  %vm1261 = vcmp.eq.s32.totalorder %v1197, 1
  %vm1262 = vcmp.eq.s32.totalorder %v1198, 1
  %vm1263 = vcmp.eq.s32.totalorder %v1199, 1
  %vm1264 = vcmp.eq.s32.totalorder %v1200, 1
  %vm1265 = vcmp.eq.s32.totalorder %v1201, 1
  %vm1266 = vcmp.eq.s32.totalorder %v1202, 1
  %vm1267 = vcmp.eq.s32.totalorder %v1203, 1
  %vm1268 = vcmp.eq.s32.totalorder %v1204, 1
  %vm1269 = vcmp.eq.s32.totalorder %v1205, 1
  %vm1270 = vcmp.eq.s32.totalorder %v1206, 1
  %vm1271 = vcmp.eq.s32.totalorder %v1207, 1
  %vm1272 = vcmp.eq.s32.totalorder %v1208, 1
  %vm1273 = vcmp.eq.s32.totalorder %v1209, 1
  %vm1274 = vcmp.eq.s32.totalorder %v1210, 1
  %vm1275 = vcmp.eq.s32.totalorder %v1211, 1
  %vm1276 = vcmp.eq.s32.totalorder %v1212, 1
  %vm1277 = vcmp.eq.s32.totalorder %v1213, 1
  %vm1278 = vcmp.eq.s32.totalorder %v1214, 1
  %vm1279 = vcmp.eq.s32.totalorder %v1215, 1
  %vm1280 = vcmp.eq.s32.totalorder %v1216, 1
  %vm1281 = vcmp.eq.s32.totalorder %v1217, 1
  %vm1282 = vcmp.eq.s32.totalorder %v1218, 1
  %vm1283 = vcmp.eq.s32.totalorder %v1219, 1
  %vm1284 = vcmp.eq.s32.totalorder %v1220, 1
  %vm1285 = vcmp.eq.s32.totalorder %v1221, 1
  %vm1286 = vcmp.eq.s32.totalorder %v1222, 1
  %vm1287 = vcmp.eq.s32.totalorder %v1223, 1
  %vm1288 = vcmp.eq.s32.totalorder %v1224, 1
  %vm1289 = vcmp.eq.s32.totalorder %v1225, 1
  %vm1290 = vcmp.eq.s32.totalorder %v1226, 1
  %vm1291 = vcmp.eq.s32.totalorder %v1227, 1
  %v1292 = vsel %vm1228, %v651, 0.0
  %v1293 = vsel %vm1229, %v656, 0.0
  %v1294 = vsel %vm1230, %v661, 0.0
  %v1295 = vsel %vm1231, %v666, 0.0
  %v1296 = vsel %vm1232, %v671, 0.0
  %v1297 = vsel %vm1233, %v676, 0.0
  %v1298 = vsel %vm1234, %v681, 0.0
  %v1299 = vsel %vm1235, %v686, 0.0
  %v1300 = vsel %vm1236, %v691, 0.0
  %v1301 = vsel %vm1237, %v696, 0.0
  %v1302 = vsel %vm1238, %v701, 0.0
  %v1303 = vsel %vm1239, %v706, 0.0
  %v1304 = vsel %vm1240, %v711, 0.0
  %v1305 = vsel %vm1241, %v716, 0.0
  %v1306 = vsel %vm1242, %v721, 0.0
  %v1307 = vsel %vm1243, %v726, 0.0
  %v1308 = vsel %vm1244, %v731, 0.0
  %v1309 = vsel %vm1245, %v736, 0.0
  %v1310 = vsel %vm1246, %v741, 0.0
  %v1311 = vsel %vm1247, %v746, 0.0
  %v1312 = vsel %vm1248, %v751, 0.0
  %v1313 = vsel %vm1249, %v756, 0.0
  %v1314 = vsel %vm1250, %v761, 0.0
  %v1315 = vsel %vm1251, %v766, 0.0
  %v1316 = vsel %vm1252, %v771, 0.0
  %v1317 = vsel %vm1253, %v776, 0.0
  %v1318 = vsel %vm1254, %v781, 0.0
  %v1319 = vsel %vm1255, %v786, 0.0
  %v1320 = vsel %vm1256, %v791, 0.0
  %v1321 = vsel %vm1257, %v796, 0.0
  %v1322 = vsel %vm1258, %v801, 0.0
  %v1323 = vsel %vm1259, %v806, 0.0
  %v1324 = vsel %vm1260, %v811, 0.0
  %v1325 = vsel %vm1261, %v816, 0.0
  %v1326 = vsel %vm1262, %v821, 0.0
  %v1327 = vsel %vm1263, %v826, 0.0
  %v1328 = vsel %vm1264, %v831, 0.0
  %v1329 = vsel %vm1265, %v836, 0.0
  %v1330 = vsel %vm1266, %v841, 0.0
  %v1331 = vsel %vm1267, %v846, 0.0
  %v1332 = vsel %vm1268, %v851, 0.0
  %v1333 = vsel %vm1269, %v856, 0.0
  %v1334 = vsel %vm1270, %v861, 0.0
  %v1335 = vsel %vm1271, %v866, 0.0
  %v1336 = vsel %vm1272, %v871, 0.0
  %v1337 = vsel %vm1273, %v876, 0.0
  %v1338 = vsel %vm1274, %v881, 0.0
  %v1339 = vsel %vm1275, %v886, 0.0
  %v1340 = vsel %vm1276, %v891, 0.0
  %v1341 = vsel %vm1277, %v896, 0.0
  %v1342 = vsel %vm1278, %v901, 0.0
  %v1343 = vsel %vm1279, %v906, 0.0
  %v1344 = vsel %vm1280, %v911, 0.0
  %v1345 = vsel %vm1281, %v916, 0.0
  %v1346 = vsel %vm1282, %v921, 0.0
  %v1347 = vsel %vm1283, %v926, 0.0
  %v1348 = vsel %vm1284, %v931, 0.0
  %v1349 = vsel %vm1285, %v936, 0.0
  %v1350 = vsel %vm1286, %v941, 0.0
  %v1351 = vsel %vm1287, %v946, 0.0
  %v1352 = vsel %vm1288, %v951, 0.0
  %v1353 = vsel %vm1289, %v956, 0.0
  %v1354 = vsel %vm1290, %v961, 0.0
  %v1355 = vsel %vm1291, %v966, 0.0
  %v1356 = vld [vmem:[%s5] sm:$0x1]
  %v1358 = vlaneseq
  %v1359 = vshrl.u32 %v1358, 7
  %v1360 = vsub.s32 0, %v1359
  %v1361 = vrot.slane %v1356, %v1360
  %v1363 = vmul.f32 %v1292, %v1361
  %v1364 = vmul.f32 %v1293, %v1361
  %v1365 = vmul.f32 %v1294, %v1361
  %v1366 = vmul.f32 %v1295, %v1361
  %v1367 = vmul.f32 %v1296, %v1361
  %v1368 = vmul.f32 %v1297, %v1361
  %v1369 = vmul.f32 %v1298, %v1361
  %v1370 = vmul.f32 %v1299, %v1361
  %v1371 = vmul.f32 %v1300, %v1361
  %v1372 = vmul.f32 %v1301, %v1361
  %v1373 = vmul.f32 %v1302, %v1361
  %v1374 = vmul.f32 %v1303, %v1361
  %v1375 = vmul.f32 %v1304, %v1361
  %v1376 = vmul.f32 %v1305, %v1361
  %v1377 = vmul.f32 %v1306, %v1361
  %v1378 = vmul.f32 %v1307, %v1361
  %v1379 = vmul.f32 %v1308, %v1361
  %v1380 = vmul.f32 %v1309, %v1361
  %v1381 = vmul.f32 %v1310, %v1361
  %v1382 = vmul.f32 %v1311, %v1361
  %v1383 = vmul.f32 %v1312, %v1361
  %v1384 = vmul.f32 %v1313, %v1361
  %v1385 = vmul.f32 %v1314, %v1361
  %v1386 = vmul.f32 %v1315, %v1361
  %v1387 = vmul.f32 %v1316, %v1361
  %v1388 = vmul.f32 %v1317, %v1361
  %v1389 = vmul.f32 %v1318, %v1361
  %v1390 = vmul.f32 %v1319, %v1361
  %v1391 = vmul.f32 %v1320, %v1361
  %v1392 = vmul.f32 %v1321, %v1361
  %v1393 = vmul.f32 %v1322, %v1361
  %v1394 = vmul.f32 %v1323, %v1361
  %v1395 = vmul.f32 %v1324, %v1361
  %v1396 = vmul.f32 %v1325, %v1361
  %v1397 = vmul.f32 %v1326, %v1361
  %v1398 = vmul.f32 %v1327, %v1361
  %v1399 = vmul.f32 %v1328, %v1361
  %v1400 = vmul.f32 %v1329, %v1361
  %v1401 = vmul.f32 %v1330, %v1361
  %v1402 = vmul.f32 %v1331, %v1361
  %v1403 = vmul.f32 %v1332, %v1361
  %v1404 = vmul.f32 %v1333, %v1361
  %v1405 = vmul.f32 %v1334, %v1361
  %v1406 = vmul.f32 %v1335, %v1361
  %v1407 = vmul.f32 %v1336, %v1361
  %v1408 = vmul.f32 %v1337, %v1361
  %v1409 = vmul.f32 %v1338, %v1361
  %v1410 = vmul.f32 %v1339, %v1361
  %v1411 = vmul.f32 %v1340, %v1361
  %v1412 = vmul.f32 %v1341, %v1361
  %v1413 = vmul.f32 %v1342, %v1361
  %v1414 = vmul.f32 %v1343, %v1361
  %v1415 = vmul.f32 %v1344, %v1361
  %v1416 = vmul.f32 %v1345, %v1361
  %v1417 = vmul.f32 %v1346, %v1361
  %v1418 = vmul.f32 %v1347, %v1361
  %v1419 = vmul.f32 %v1348, %v1361
  %v1420 = vmul.f32 %v1349, %v1361
  %v1421 = vmul.f32 %v1350, %v1361
  %v1422 = vmul.f32 %v1351, %v1361
  %v1423 = vmul.f32 %v1352, %v1361
  %v1424 = vmul.f32 %v1353, %v1361
  %v1425 = vmul.f32 %v1354, %v1361
  %v1426 = vmul.f32 %v1355, %v1361
  %1427 = vadd.xlane.f32.xlu0 %v1363
  %v1428 = vpop.xlane.xlu0 %1427
  %1429 = vadd.xlane.f32.xlu0 %v1364
  %v1430 = vpop.xlane.xlu0 %1429
  %1431 = vadd.xlane.f32.xlu0 %v1365
  %v1432 = vpop.xlane.xlu0 %1431
  %1433 = vadd.xlane.f32.xlu0 %v1366
  %v1434 = vpop.xlane.xlu0 %1433
  %1435 = vadd.xlane.f32.xlu0 %v1367
  %v1436 = vpop.xlane.xlu0 %1435
  %1437 = vadd.xlane.f32.xlu0 %v1368
  %v1438 = vpop.xlane.xlu0 %1437
  %1439 = vadd.xlane.f32.xlu0 %v1369
  %v1440 = vpop.xlane.xlu0 %1439
  %1441 = vadd.xlane.f32.xlu0 %v1370
  %v1442 = vpop.xlane.xlu0 %1441
  %1443 = vadd.xlane.f32.xlu0 %v1371
  %v1444 = vpop.xlane.xlu0 %1443
  %1445 = vadd.xlane.f32.xlu0 %v1372
  %v1446 = vpop.xlane.xlu0 %1445
  %1447 = vadd.xlane.f32.xlu0 %v1373
  %v1448 = vpop.xlane.xlu0 %1447
  %1449 = vadd.xlane.f32.xlu0 %v1374
  %v1450 = vpop.xlane.xlu0 %1449
  %1451 = vadd.xlane.f32.xlu0 %v1375
  %v1452 = vpop.xlane.xlu0 %1451
  %1453 = vadd.xlane.f32.xlu0 %v1376
  %v1454 = vpop.xlane.xlu0 %1453
  %1455 = vadd.xlane.f32.xlu0 %v1377
  %v1456 = vpop.xlane.xlu0 %1455
  %1457 = vadd.xlane.f32.xlu0 %v1378
  %v1458 = vpop.xlane.xlu0 %1457
  %1459 = vadd.xlane.f32.xlu0 %v1379
  %v1460 = vpop.xlane.xlu0 %1459
  %1461 = vadd.xlane.f32.xlu0 %v1380
  %v1462 = vpop.xlane.xlu0 %1461
  %1463 = vadd.xlane.f32.xlu0 %v1381
  %v1464 = vpop.xlane.xlu0 %1463
  %1465 = vadd.xlane.f32.xlu0 %v1382
  %v1466 = vpop.xlane.xlu0 %1465
  %1467 = vadd.xlane.f32.xlu0 %v1383
  %v1468 = vpop.xlane.xlu0 %1467
  %1469 = vadd.xlane.f32.xlu0 %v1384
  %v1470 = vpop.xlane.xlu0 %1469
  %1471 = vadd.xlane.f32.xlu0 %v1385
  %v1472 = vpop.xlane.xlu0 %1471
  %1473 = vadd.xlane.f32.xlu0 %v1386
  %v1474 = vpop.xlane.xlu0 %1473
  %1475 = vadd.xlane.f32.xlu0 %v1387
  %v1476 = vpop.xlane.xlu0 %1475
  %1477 = vadd.xlane.f32.xlu0 %v1388
  %v1478 = vpop.xlane.xlu0 %1477
  %1479 = vadd.xlane.f32.xlu0 %v1389
  %v1480 = vpop.xlane.xlu0 %1479
  %1481 = vadd.xlane.f32.xlu0 %v1390
  %v1482 = vpop.xlane.xlu0 %1481
  %1483 = vadd.xlane.f32.xlu0 %v1391
  %v1484 = vpop.xlane.xlu0 %1483
  %1485 = vadd.xlane.f32.xlu0 %v1392
  %v1486 = vpop.xlane.xlu0 %1485
  %1487 = vadd.xlane.f32.xlu0 %v1393
  %v1488 = vpop.xlane.xlu0 %1487
  %1489 = vadd.xlane.f32.xlu0 %v1394
  %v1490 = vpop.xlane.xlu0 %1489
  %1491 = vadd.xlane.f32.xlu0 %v1395
  %v1492 = vpop.xlane.xlu0 %1491
  %1493 = vadd.xlane.f32.xlu0 %v1396
  %v1494 = vpop.xlane.xlu0 %1493
  %1495 = vadd.xlane.f32.xlu0 %v1397
  %v1496 = vpop.xlane.xlu0 %1495
  %1497 = vadd.xlane.f32.xlu0 %v1398
  %v1498 = vpop.xlane.xlu0 %1497
  %1499 = vadd.xlane.f32.xlu0 %v1399
  %v1500 = vpop.xlane.xlu0 %1499
  %1501 = vadd.xlane.f32.xlu0 %v1400
  %v1502 = vpop.xlane.xlu0 %1501
  %1503 = vadd.xlane.f32.xlu0 %v1401
  %v1504 = vpop.xlane.xlu0 %1503
  %1505 = vadd.xlane.f32.xlu0 %v1402
  %v1506 = vpop.xlane.xlu0 %1505
  %1507 = vadd.xlane.f32.xlu0 %v1403
  %v1508 = vpop.xlane.xlu0 %1507
  %1509 = vadd.xlane.f32.xlu0 %v1404
  %v1510 = vpop.xlane.xlu0 %1509
  %1511 = vadd.xlane.f32.xlu0 %v1405
  %v1512 = vpop.xlane.xlu0 %1511
  %1513 = vadd.xlane.f32.xlu0 %v1406
  %v1514 = vpop.xlane.xlu0 %1513
  %1515 = vadd.xlane.f32.xlu0 %v1407
  %v1516 = vpop.xlane.xlu0 %1515
  %1517 = vadd.xlane.f32.xlu0 %v1408
  %v1518 = vpop.xlane.xlu0 %1517
  %1519 = vadd.xlane.f32.xlu0 %v1409
  %v1520 = vpop.xlane.xlu0 %1519
  %1521 = vadd.xlane.f32.xlu0 %v1410
  %v1522 = vpop.xlane.xlu0 %1521
  %1523 = vadd.xlane.f32.xlu0 %v1411
  %v1524 = vpop.xlane.xlu0 %1523
  %1525 = vadd.xlane.f32.xlu0 %v1412
  %v1526 = vpop.xlane.xlu0 %1525
  %1527 = vadd.xlane.f32.xlu0 %v1413
  %v1528 = vpop.xlane.xlu0 %1527
  %1529 = vadd.xlane.f32.xlu0 %v1414
  %v1530 = vpop.xlane.xlu0 %1529
  %1531 = vadd.xlane.f32.xlu0 %v1415
  %v1532 = vpop.xlane.xlu0 %1531
  %1533 = vadd.xlane.f32.xlu0 %v1416
  %v1534 = vpop.xlane.xlu0 %1533
  %1535 = vadd.xlane.f32.xlu0 %v1417
  %v1536 = vpop.xlane.xlu0 %1535
  %1537 = vadd.xlane.f32.xlu0 %v1418
  %v1538 = vpop.xlane.xlu0 %1537
  %1539 = vadd.xlane.f32.xlu0 %v1419
  %v1540 = vpop.xlane.xlu0 %1539
  %1541 = vadd.xlane.f32.xlu0 %v1420
  %v1542 = vpop.xlane.xlu0 %1541
  %1543 = vadd.xlane.f32.xlu0 %v1421
  %v1544 = vpop.xlane.xlu0 %1543
  %1545 = vadd.xlane.f32.xlu0 %v1422
  %v1546 = vpop.xlane.xlu0 %1545
  %1547 = vadd.xlane.f32.xlu0 %v1423
  %v1548 = vpop.xlane.xlu0 %1547
  %1549 = vadd.xlane.f32.xlu0 %v1424
  %v1550 = vpop.xlane.xlu0 %1549
  %1551 = vadd.xlane.f32.xlu0 %v1425
  %v1552 = vpop.xlane.xlu0 %1551
  %1553 = vadd.xlane.f32.xlu0 %v1426
  %v1554 = vpop.xlane.xlu0 %1553
  %v1555 = vxor.u32 %v1428, 2147483648
  %v1556 = vxor.u32 %v1430, 2147483648
  %v1557 = vxor.u32 %v1432, 2147483648
  %v1558 = vxor.u32 %v1434, 2147483648
  %v1559 = vxor.u32 %v1436, 2147483648
  %v1560 = vxor.u32 %v1438, 2147483648
  %v1561 = vxor.u32 %v1440, 2147483648
  %v1562 = vxor.u32 %v1442, 2147483648
  %v1563 = vxor.u32 %v1444, 2147483648
  %v1564 = vxor.u32 %v1446, 2147483648
  %v1565 = vxor.u32 %v1448, 2147483648
  %v1566 = vxor.u32 %v1450, 2147483648
  %v1567 = vxor.u32 %v1452, 2147483648
  %v1568 = vxor.u32 %v1454, 2147483648
  %v1569 = vxor.u32 %v1456, 2147483648
  %v1570 = vxor.u32 %v1458, 2147483648
  %v1571 = vxor.u32 %v1460, 2147483648
  %v1572 = vxor.u32 %v1462, 2147483648
  %v1573 = vxor.u32 %v1464, 2147483648
  %v1574 = vxor.u32 %v1466, 2147483648
  %v1575 = vxor.u32 %v1468, 2147483648
  %v1576 = vxor.u32 %v1470, 2147483648
  %v1577 = vxor.u32 %v1472, 2147483648
  %v1578 = vxor.u32 %v1474, 2147483648
  %v1579 = vxor.u32 %v1476, 2147483648
  %v1580 = vxor.u32 %v1478, 2147483648
  %v1581 = vxor.u32 %v1480, 2147483648
  %v1582 = vxor.u32 %v1482, 2147483648
  %v1583 = vxor.u32 %v1484, 2147483648
  %v1584 = vxor.u32 %v1486, 2147483648
  %v1585 = vxor.u32 %v1488, 2147483648
  %v1586 = vxor.u32 %v1490, 2147483648
  %v1587 = vxor.u32 %v1492, 2147483648
  %v1588 = vxor.u32 %v1494, 2147483648
  %v1589 = vxor.u32 %v1496, 2147483648
  %v1590 = vxor.u32 %v1498, 2147483648
  %v1591 = vxor.u32 %v1500, 2147483648
  %v1592 = vxor.u32 %v1502, 2147483648
  %v1593 = vxor.u32 %v1504, 2147483648
  %v1594 = vxor.u32 %v1506, 2147483648
  %v1595 = vxor.u32 %v1508, 2147483648
  %v1596 = vxor.u32 %v1510, 2147483648
  %v1597 = vxor.u32 %v1512, 2147483648
  %v1598 = vxor.u32 %v1514, 2147483648
  %v1599 = vxor.u32 %v1516, 2147483648
  %v1600 = vxor.u32 %v1518, 2147483648
  %v1601 = vxor.u32 %v1520, 2147483648
  %v1602 = vxor.u32 %v1522, 2147483648
  %v1603 = vxor.u32 %v1524, 2147483648
  %v1604 = vxor.u32 %v1526, 2147483648
  %v1605 = vxor.u32 %v1528, 2147483648
  %v1606 = vxor.u32 %v1530, 2147483648
  %v1607 = vxor.u32 %v1532, 2147483648
  %v1608 = vxor.u32 %v1534, 2147483648
  %v1609 = vxor.u32 %v1536, 2147483648
  %v1610 = vxor.u32 %v1538, 2147483648
  %v1611 = vxor.u32 %v1540, 2147483648
  %v1612 = vxor.u32 %v1542, 2147483648
  %v1613 = vxor.u32 %v1544, 2147483648
  %v1614 = vxor.u32 %v1546, 2147483648
  %v1615 = vxor.u32 %v1548, 2147483648
  %v1616 = vxor.u32 %v1550, 2147483648
  %v1617 = vxor.u32 %v1552, 2147483648
  %v1618 = vxor.u32 %v1554, 2147483648
  %v1619 = vmul.f32 %v1555, 1.442695
  %v1620 = vpow.pop %v1619
  %v1621 = vmul.f32 %v1556, 1.442695
  %v1622 = vpow.pop %v1621
  %v1623 = vmul.f32 %v1557, 1.442695
  %v1624 = vpow.pop %v1623
  %v1625 = vmul.f32 %v1558, 1.442695
  %v1626 = vpow.pop %v1625
  %v1627 = vmul.f32 %v1559, 1.442695
  %v1628 = vpow.pop %v1627
  %v1629 = vmul.f32 %v1560, 1.442695
  %v1630 = vpow.pop %v1629
  %v1631 = vmul.f32 %v1561, 1.442695
  %v1632 = vpow.pop %v1631
  %v1633 = vmul.f32 %v1562, 1.442695
  %v1634 = vpow.pop %v1633
  %v1635 = vmul.f32 %v1563, 1.442695
  %v1636 = vpow.pop %v1635
  %v1637 = vmul.f32 %v1564, 1.442695
  %v1638 = vpow.pop %v1637
  %v1639 = vmul.f32 %v1565, 1.442695
  %v1640 = vpow.pop %v1639
  %v1641 = vmul.f32 %v1566, 1.442695
  %v1642 = vpow.pop %v1641
  %v1643 = vmul.f32 %v1567, 1.442695
  %v1644 = vpow.pop %v1643
  %v1645 = vmul.f32 %v1568, 1.442695
  %v1646 = vpow.pop %v1645
  %v1647 = vmul.f32 %v1569, 1.442695
  %v1648 = vpow.pop %v1647
  %v1649 = vmul.f32 %v1570, 1.442695
  %v1650 = vpow.pop %v1649
  %v1651 = vmul.f32 %v1571, 1.442695
  %v1652 = vpow.pop %v1651
  %v1653 = vmul.f32 %v1572, 1.442695
  %v1654 = vpow.pop %v1653
  %v1655 = vmul.f32 %v1573, 1.442695
  %v1656 = vpow.pop %v1655
  %v1657 = vmul.f32 %v1574, 1.442695
  %v1658 = vpow.pop %v1657
  %v1659 = vmul.f32 %v1575, 1.442695
  %v1660 = vpow.pop %v1659
  %v1661 = vmul.f32 %v1576, 1.442695
  %v1662 = vpow.pop %v1661
  %v1663 = vmul.f32 %v1577, 1.442695
  %v1664 = vpow.pop %v1663
  %v1665 = vmul.f32 %v1578, 1.442695
  %v1666 = vpow.pop %v1665
  %v1667 = vmul.f32 %v1579, 1.442695
  %v1668 = vpow.pop %v1667
  %v1669 = vmul.f32 %v1580, 1.442695
  %v1670 = vpow.pop %v1669
  %v1671 = vmul.f32 %v1581, 1.442695
  %v1672 = vpow.pop %v1671
  %v1673 = vmul.f32 %v1582, 1.442695
  %v1674 = vpow.pop %v1673
  %v1675 = vmul.f32 %v1583, 1.442695
  %v1676 = vpow.pop %v1675
  %v1677 = vmul.f32 %v1584, 1.442695
  %v1678 = vpow.pop %v1677
  %v1679 = vmul.f32 %v1585, 1.442695
  %v1680 = vpow.pop %v1679
  %v1681 = vmul.f32 %v1586, 1.442695
  %v1682 = vpow.pop %v1681
  %v1683 = vmul.f32 %v1587, 1.442695
  %v1684 = vpow.pop %v1683
  %v1685 = vmul.f32 %v1588, 1.442695
  %v1686 = vpow.pop %v1685
  %v1687 = vmul.f32 %v1589, 1.442695
  %v1688 = vpow.pop %v1687
  %v1689 = vmul.f32 %v1590, 1.442695
  %v1690 = vpow.pop %v1689
  %v1691 = vmul.f32 %v1591, 1.442695
  %v1692 = vpow.pop %v1691
  %v1693 = vmul.f32 %v1592, 1.442695
  %v1694 = vpow.pop %v1693
  %v1695 = vmul.f32 %v1593, 1.442695
  %v1696 = vpow.pop %v1695
  %v1697 = vmul.f32 %v1594, 1.442695
  %v1698 = vpow.pop %v1697
  %v1699 = vmul.f32 %v1595, 1.442695
  %v1700 = vpow.pop %v1699
  %v1701 = vmul.f32 %v1596, 1.442695
  %v1702 = vpow.pop %v1701
  %v1703 = vmul.f32 %v1597, 1.442695
  %v1704 = vpow.pop %v1703
  %v1705 = vmul.f32 %v1598, 1.442695
  %v1706 = vpow.pop %v1705
  %v1707 = vmul.f32 %v1599, 1.442695
  %v1708 = vpow.pop %v1707
  %v1709 = vmul.f32 %v1600, 1.442695
  %v1710 = vpow.pop %v1709
  %v1711 = vmul.f32 %v1601, 1.442695
  %v1712 = vpow.pop %v1711
  %v1713 = vmul.f32 %v1602, 1.442695
  %v1714 = vpow.pop %v1713
  %v1715 = vmul.f32 %v1603, 1.442695
  %v1716 = vpow.pop %v1715
  %v1717 = vmul.f32 %v1604, 1.442695
  %v1718 = vpow.pop %v1717
  %v1719 = vmul.f32 %v1605, 1.442695
  %v1720 = vpow.pop %v1719
  %v1721 = vmul.f32 %v1606, 1.442695
  %v1722 = vpow.pop %v1721
  %v1723 = vmul.f32 %v1607, 1.442695
  %v1724 = vpow.pop %v1723
  %v1725 = vmul.f32 %v1608, 1.442695
  %v1726 = vpow.pop %v1725
  %v1727 = vmul.f32 %v1609, 1.442695
  %v1728 = vpow.pop %v1727
  %v1729 = vmul.f32 %v1610, 1.442695
  %v1730 = vpow.pop %v1729
  %v1731 = vmul.f32 %v1611, 1.442695
  %v1732 = vpow.pop %v1731
  %v1733 = vmul.f32 %v1612, 1.442695
  %v1734 = vpow.pop %v1733
  %v1735 = vmul.f32 %v1613, 1.442695
  %v1736 = vpow.pop %v1735
  %v1737 = vmul.f32 %v1614, 1.442695
  %v1738 = vpow.pop %v1737
  %v1739 = vmul.f32 %v1615, 1.442695
  %v1740 = vpow.pop %v1739
  %v1741 = vmul.f32 %v1616, 1.442695
  %v1742 = vpow.pop %v1741
  %v1743 = vmul.f32 %v1617, 1.442695
  %v1744 = vpow.pop %v1743
  %v1745 = vmul.f32 %v1618, 1.442695
  %v1746 = vpow.pop %v1745
  %v1747 = vadd.f32 %v1620, 1.0
  %v1748 = vadd.f32 %v1622, 1.0
  %v1749 = vadd.f32 %v1624, 1.0
  %v1750 = vadd.f32 %v1626, 1.0
  %v1751 = vadd.f32 %v1628, 1.0
  %v1752 = vadd.f32 %v1630, 1.0
  %v1753 = vadd.f32 %v1632, 1.0
  %v1754 = vadd.f32 %v1634, 1.0
  %v1755 = vadd.f32 %v1636, 1.0
  %v1756 = vadd.f32 %v1638, 1.0
  %v1757 = vadd.f32 %v1640, 1.0
  %v1758 = vadd.f32 %v1642, 1.0
  %v1759 = vadd.f32 %v1644, 1.0
  %v1760 = vadd.f32 %v1646, 1.0
  %v1761 = vadd.f32 %v1648, 1.0
  %v1762 = vadd.f32 %v1650, 1.0
  %v1763 = vadd.f32 %v1652, 1.0
  %v1764 = vadd.f32 %v1654, 1.0
  %v1765 = vadd.f32 %v1656, 1.0
  %v1766 = vadd.f32 %v1658, 1.0
  %v1767 = vadd.f32 %v1660, 1.0
  %v1768 = vadd.f32 %v1662, 1.0
  %v1769 = vadd.f32 %v1664, 1.0
  %v1770 = vadd.f32 %v1666, 1.0
  %v1771 = vadd.f32 %v1668, 1.0
  %v1772 = vadd.f32 %v1670, 1.0
  %v1773 = vadd.f32 %v1672, 1.0
  %v1774 = vadd.f32 %v1674, 1.0
  %v1775 = vadd.f32 %v1676, 1.0
  %v1776 = vadd.f32 %v1678, 1.0
  %v1777 = vadd.f32 %v1680, 1.0
  %v1778 = vadd.f32 %v1682, 1.0
  %v1779 = vadd.f32 %v1684, 1.0
  %v1780 = vadd.f32 %v1686, 1.0
  %v1781 = vadd.f32 %v1688, 1.0
  %v1782 = vadd.f32 %v1690, 1.0
  %v1783 = vadd.f32 %v1692, 1.0
  %v1784 = vadd.f32 %v1694, 1.0
  %v1785 = vadd.f32 %v1696, 1.0
  %v1786 = vadd.f32 %v1698, 1.0
  %v1787 = vadd.f32 %v1700, 1.0
  %v1788 = vadd.f32 %v1702, 1.0
  %v1789 = vadd.f32 %v1704, 1.0
  %v1790 = vadd.f32 %v1706, 1.0
  %v1791 = vadd.f32 %v1708, 1.0
  %v1792 = vadd.f32 %v1710, 1.0
  %v1793 = vadd.f32 %v1712, 1.0
  %v1794 = vadd.f32 %v1714, 1.0
  %v1795 = vadd.f32 %v1716, 1.0
  %v1796 = vadd.f32 %v1718, 1.0
  %v1797 = vadd.f32 %v1720, 1.0
  %v1798 = vadd.f32 %v1722, 1.0
  %v1799 = vadd.f32 %v1724, 1.0
  %v1800 = vadd.f32 %v1726, 1.0
  %v1801 = vadd.f32 %v1728, 1.0
  %v1802 = vadd.f32 %v1730, 1.0
  %v1803 = vadd.f32 %v1732, 1.0
  %v1804 = vadd.f32 %v1734, 1.0
  %v1805 = vadd.f32 %v1736, 1.0
  %v1806 = vadd.f32 %v1738, 1.0
  %v1807 = vadd.f32 %v1740, 1.0
  %v1808 = vadd.f32 %v1742, 1.0
  %v1809 = vadd.f32 %v1744, 1.0
  %v1810 = vadd.f32 %v1746, 1.0
  %v1811 = vrcp.pop %v1747
  %v1812 = vmul.f32 1.0, %v1811
  %v1813 = vrcp.pop %v1748
  %v1814 = vmul.f32 1.0, %v1813
  %v1815 = vrcp.pop %v1749
  %v1816 = vmul.f32 1.0, %v1815
  %v1817 = vrcp.pop %v1750
  %v1818 = vmul.f32 1.0, %v1817
  %v1819 = vrcp.pop %v1751
  %v1820 = vmul.f32 1.0, %v1819
  %v1821 = vrcp.pop %v1752
  %v1822 = vmul.f32 1.0, %v1821
  %v1823 = vrcp.pop %v1753
  %v1824 = vmul.f32 1.0, %v1823
  %v1825 = vrcp.pop %v1754
  %v1826 = vmul.f32 1.0, %v1825
  %v1827 = vrcp.pop %v1755
  %v1828 = vmul.f32 1.0, %v1827
  %v1829 = vrcp.pop %v1756
  %v1830 = vmul.f32 1.0, %v1829
  %v1831 = vrcp.pop %v1757
  %v1832 = vmul.f32 1.0, %v1831
  %v1833 = vrcp.pop %v1758
  %v1834 = vmul.f32 1.0, %v1833
  %v1835 = vrcp.pop %v1759
  %v1836 = vmul.f32 1.0, %v1835
  %v1837 = vrcp.pop %v1760
  %v1838 = vmul.f32 1.0, %v1837
  %v1839 = vrcp.pop %v1761
  %v1840 = vmul.f32 1.0, %v1839
  %v1841 = vrcp.pop %v1762
  %v1842 = vmul.f32 1.0, %v1841
  %v1843 = vrcp.pop %v1763
  %v1844 = vmul.f32 1.0, %v1843
  %v1845 = vrcp.pop %v1764
  %v1846 = vmul.f32 1.0, %v1845
  %v1847 = vrcp.pop %v1765
  %v1848 = vmul.f32 1.0, %v1847
  %v1849 = vrcp.pop %v1766
  %v1850 = vmul.f32 1.0, %v1849
  %v1851 = vrcp.pop %v1767
  %v1852 = vmul.f32 1.0, %v1851
  %v1853 = vrcp.pop %v1768
  %v1854 = vmul.f32 1.0, %v1853
  %v1855 = vrcp.pop %v1769
  %v1856 = vmul.f32 1.0, %v1855
  %v1857 = vrcp.pop %v1770
  %v1858 = vmul.f32 1.0, %v1857
  %v1859 = vrcp.pop %v1771
  %v1860 = vmul.f32 1.0, %v1859
  %v1861 = vrcp.pop %v1772
  %v1862 = vmul.f32 1.0, %v1861
  %v1863 = vrcp.pop %v1773
  %v1864 = vmul.f32 1.0, %v1863
  %v1865 = vrcp.pop %v1774
  %v1866 = vmul.f32 1.0, %v1865
  %v1867 = vrcp.pop %v1775
  %v1868 = vmul.f32 1.0, %v1867
  %v1869 = vrcp.pop %v1776
  %v1870 = vmul.f32 1.0, %v1869
  %v1871 = vrcp.pop %v1777
  %v1872 = vmul.f32 1.0, %v1871
  %v1873 = vrcp.pop %v1778
  %v1874 = vmul.f32 1.0, %v1873
  %v1875 = vrcp.pop %v1779
  %v1876 = vmul.f32 1.0, %v1875
  %v1877 = vrcp.pop %v1780
  %v1878 = vmul.f32 1.0, %v1877
  %v1879 = vrcp.pop %v1781
  %v1880 = vmul.f32 1.0, %v1879
  %v1881 = vrcp.pop %v1782
  %v1882 = vmul.f32 1.0, %v1881
  %v1883 = vrcp.pop %v1783
  %v1884 = vmul.f32 1.0, %v1883
  %v1885 = vrcp.pop %v1784
  %v1886 = vmul.f32 1.0, %v1885
  %v1887 = vrcp.pop %v1785
  %v1888 = vmul.f32 1.0, %v1887
  %v1889 = vrcp.pop %v1786
  %v1890 = vmul.f32 1.0, %v1889
  %v1891 = vrcp.pop %v1787
  %v1892 = vmul.f32 1.0, %v1891
  %v1893 = vrcp.pop %v1788
  %v1894 = vmul.f32 1.0, %v1893
  %v1895 = vrcp.pop %v1789
  %v1896 = vmul.f32 1.0, %v1895
  %v1897 = vrcp.pop %v1790
  %v1898 = vmul.f32 1.0, %v1897
  %v1899 = vrcp.pop %v1791
  %v1900 = vmul.f32 1.0, %v1899
  %v1901 = vrcp.pop %v1792
  %v1902 = vmul.f32 1.0, %v1901
  %v1903 = vrcp.pop %v1793
  %v1904 = vmul.f32 1.0, %v1903
  %v1905 = vrcp.pop %v1794
  %v1906 = vmul.f32 1.0, %v1905
  %v1907 = vrcp.pop %v1795
  %v1908 = vmul.f32 1.0, %v1907
  %v1909 = vrcp.pop %v1796
  %v1910 = vmul.f32 1.0, %v1909
  %v1911 = vrcp.pop %v1797
  %v1912 = vmul.f32 1.0, %v1911
  %v1913 = vrcp.pop %v1798
  %v1914 = vmul.f32 1.0, %v1913
  %v1915 = vrcp.pop %v1799
  %v1916 = vmul.f32 1.0, %v1915
  %v1917 = vrcp.pop %v1800
  %v1918 = vmul.f32 1.0, %v1917
  %v1919 = vrcp.pop %v1801
  %v1920 = vmul.f32 1.0, %v1919
  %v1921 = vrcp.pop %v1802
  %v1922 = vmul.f32 1.0, %v1921
  %v1923 = vrcp.pop %v1803
  %v1924 = vmul.f32 1.0, %v1923
  %v1925 = vrcp.pop %v1804
  %v1926 = vmul.f32 1.0, %v1925
  %v1927 = vrcp.pop %v1805
  %v1928 = vmul.f32 1.0, %v1927
  %v1929 = vrcp.pop %v1806
  %v1930 = vmul.f32 1.0, %v1929
  %v1931 = vrcp.pop %v1807
  %v1932 = vmul.f32 1.0, %v1931
  %v1933 = vrcp.pop %v1808
  %v1934 = vmul.f32 1.0, %v1933
  %v1935 = vrcp.pop %v1809
  %v1936 = vmul.f32 1.0, %v1935
  %v1937 = vrcp.pop %v1810
  %v1938 = vmul.f32 1.0, %v1937
  %v1939 = vpack.c.bf16 %v1293, %v1292
  %v1940 = vpack.c.bf16 %v1295, %v1294
  %v1941 = vpack.c.bf16 %v1297, %v1296
  %v1942 = vpack.c.bf16 %v1299, %v1298
  %v1943 = vpack.c.bf16 %v1301, %v1300
  %v1944 = vpack.c.bf16 %v1303, %v1302
  %v1945 = vpack.c.bf16 %v1305, %v1304
  %v1946 = vpack.c.bf16 %v1307, %v1306
  %v1947 = vpack.c.bf16 %v1309, %v1308
  %v1948 = vpack.c.bf16 %v1311, %v1310
  %v1949 = vpack.c.bf16 %v1313, %v1312
  %v1950 = vpack.c.bf16 %v1315, %v1314
  %v1951 = vpack.c.bf16 %v1317, %v1316
  %v1952 = vpack.c.bf16 %v1319, %v1318
  %v1953 = vpack.c.bf16 %v1321, %v1320
  %v1954 = vpack.c.bf16 %v1323, %v1322
  %v1955 = vpack.c.bf16 %v1325, %v1324
  %v1956 = vpack.c.bf16 %v1327, %v1326
  %v1957 = vpack.c.bf16 %v1329, %v1328
  %v1958 = vpack.c.bf16 %v1331, %v1330
  %v1959 = vpack.c.bf16 %v1333, %v1332
  %v1960 = vpack.c.bf16 %v1335, %v1334
  %v1961 = vpack.c.bf16 %v1337, %v1336
  %v1962 = vpack.c.bf16 %v1339, %v1338
  %v1963 = vpack.c.bf16 %v1341, %v1340
  %v1964 = vpack.c.bf16 %v1343, %v1342
  %v1965 = vpack.c.bf16 %v1345, %v1344
  %v1966 = vpack.c.bf16 %v1347, %v1346
  %v1967 = vpack.c.bf16 %v1349, %v1348
  %v1968 = vpack.c.bf16 %v1351, %v1350
  %v1969 = vpack.c.bf16 %v1353, %v1352
  %v1970 = vpack.c.bf16 %v1355, %v1354
  %v2003 = vunpack.c.l.b16 %v1939
  %v2004 = vunpack.c.h.b16 %v1939
  %v2005 = vunpack.c.l.b16 %v1940
  %v2006 = vunpack.c.h.b16 %v1940
  %v2007 = vunpack.c.l.b16 %v1941
  %v2008 = vunpack.c.h.b16 %v1941
  %v2009 = vunpack.c.l.b16 %v1942
  %v2010 = vunpack.c.h.b16 %v1942
  %v2011 = vunpack.c.l.b16 %v1943
  %v2012 = vunpack.c.h.b16 %v1943
  %v2013 = vunpack.c.l.b16 %v1944
  %v2014 = vunpack.c.h.b16 %v1944
  %v2015 = vunpack.c.l.b16 %v1945
  %v2016 = vunpack.c.h.b16 %v1945
  %v2017 = vunpack.c.l.b16 %v1946
  %v2018 = vunpack.c.h.b16 %v1946
  %v2019 = vunpack.c.l.b16 %v1947
  %v2020 = vunpack.c.h.b16 %v1947
  %v2021 = vunpack.c.l.b16 %v1948
  %v2022 = vunpack.c.h.b16 %v1948
  %v2023 = vunpack.c.l.b16 %v1949
  %v2024 = vunpack.c.h.b16 %v1949
  %v2025 = vunpack.c.l.b16 %v1950
  %v2026 = vunpack.c.h.b16 %v1950
  %v2027 = vunpack.c.l.b16 %v1951
  %v2028 = vunpack.c.h.b16 %v1951
  %v2029 = vunpack.c.l.b16 %v1952
  %v2030 = vunpack.c.h.b16 %v1952
  %v2031 = vunpack.c.l.b16 %v1953
  %v2032 = vunpack.c.h.b16 %v1953
  %v2033 = vunpack.c.l.b16 %v1954
  %v2034 = vunpack.c.h.b16 %v1954
  %v2035 = vunpack.c.l.b16 %v1955
  %v2036 = vunpack.c.h.b16 %v1955
  %v2037 = vunpack.c.l.b16 %v1956
  %v2038 = vunpack.c.h.b16 %v1956
  %v2039 = vunpack.c.l.b16 %v1957
  %v2040 = vunpack.c.h.b16 %v1957
  %v2041 = vunpack.c.l.b16 %v1958
  %v2042 = vunpack.c.h.b16 %v1958
  %v2043 = vunpack.c.l.b16 %v1959
  %v2044 = vunpack.c.h.b16 %v1959
  %v2045 = vunpack.c.l.b16 %v1960
  %v2046 = vunpack.c.h.b16 %v1960
  %v2047 = vunpack.c.l.b16 %v1961
  %v2048 = vunpack.c.h.b16 %v1961
  %v2049 = vunpack.c.l.b16 %v1962
  %v2050 = vunpack.c.h.b16 %v1962
  %v2051 = vunpack.c.l.b16 %v1963
  %v2052 = vunpack.c.h.b16 %v1963
  %v2053 = vunpack.c.l.b16 %v1964
  %v2054 = vunpack.c.h.b16 %v1964
  %v2055 = vunpack.c.l.b16 %v1965
  %v2056 = vunpack.c.h.b16 %v1965
  %v2057 = vunpack.c.l.b16 %v1966
  %v2058 = vunpack.c.h.b16 %v1966
  %v2059 = vunpack.c.l.b16 %v1967
  %v2060 = vunpack.c.h.b16 %v1967
  %v2061 = vunpack.c.l.b16 %v1968
  %v2062 = vunpack.c.h.b16 %v1968
  %v2063 = vunpack.c.l.b16 %v1969
  %v2064 = vunpack.c.h.b16 %v1969
  %v2065 = vunpack.c.l.b16 %v1970
  %v2066 = vunpack.c.h.b16 %v1970
  %v2067 = vpack.c.b16 %v2003, %v2003
  %v2068 = vpack.c.b16 %v2004, %v2004
  %v2069 = vpack.c.b16 %v2005, %v2005
  %v2070 = vpack.c.b16 %v2006, %v2006
  %v2071 = vpack.c.b16 %v2007, %v2007
  %v2072 = vpack.c.b16 %v2008, %v2008
  %v2073 = vpack.c.b16 %v2009, %v2009
  %v2074 = vpack.c.b16 %v2010, %v2010
  %v2075 = vpack.c.b16 %v2011, %v2011
  %v2076 = vpack.c.b16 %v2012, %v2012
  %v2077 = vpack.c.b16 %v2013, %v2013
  %v2078 = vpack.c.b16 %v2014, %v2014
  %v2079 = vpack.c.b16 %v2015, %v2015
  %v2080 = vpack.c.b16 %v2016, %v2016
  %v2081 = vpack.c.b16 %v2017, %v2017
  %v2082 = vpack.c.b16 %v2018, %v2018
  %v2083 = vpack.c.b16 %v2019, %v2019
  %v2084 = vpack.c.b16 %v2020, %v2020
  %v2085 = vpack.c.b16 %v2021, %v2021
  %v2086 = vpack.c.b16 %v2022, %v2022
  %v2087 = vpack.c.b16 %v2023, %v2023
  %v2088 = vpack.c.b16 %v2024, %v2024
  %v2089 = vpack.c.b16 %v2025, %v2025
  %v2090 = vpack.c.b16 %v2026, %v2026
  %v2091 = vpack.c.b16 %v2027, %v2027
  %v2092 = vpack.c.b16 %v2028, %v2028
  %v2093 = vpack.c.b16 %v2029, %v2029
  %v2094 = vpack.c.b16 %v2030, %v2030
  %v2095 = vpack.c.b16 %v2031, %v2031
  %v2096 = vpack.c.b16 %v2032, %v2032
  %v2097 = vpack.c.b16 %v2033, %v2033
  %v2098 = vpack.c.b16 %v2034, %v2034
  %v2099 = vpack.c.b16 %v2035, %v2035
  %v2100 = vpack.c.b16 %v2036, %v2036
  %v2101 = vpack.c.b16 %v2037, %v2037
  %v2102 = vpack.c.b16 %v2038, %v2038
  %v2103 = vpack.c.b16 %v2039, %v2039
  %v2104 = vpack.c.b16 %v2040, %v2040
  %v2105 = vpack.c.b16 %v2041, %v2041
  %v2106 = vpack.c.b16 %v2042, %v2042
  %v2107 = vpack.c.b16 %v2043, %v2043
  %v2108 = vpack.c.b16 %v2044, %v2044
  %v2109 = vpack.c.b16 %v2045, %v2045
  %v2110 = vpack.c.b16 %v2046, %v2046
  %v2111 = vpack.c.b16 %v2047, %v2047
  %v2112 = vpack.c.b16 %v2048, %v2048
  %v2113 = vpack.c.b16 %v2049, %v2049
  %v2114 = vpack.c.b16 %v2050, %v2050
  %v2115 = vpack.c.b16 %v2051, %v2051
  %v2116 = vpack.c.b16 %v2052, %v2052
  %v2117 = vpack.c.b16 %v2053, %v2053
  %v2118 = vpack.c.b16 %v2054, %v2054
  %v2119 = vpack.c.b16 %v2055, %v2055
  %v2120 = vpack.c.b16 %v2056, %v2056
  %v2121 = vpack.c.b16 %v2057, %v2057
  %v2122 = vpack.c.b16 %v2058, %v2058
  %v2123 = vpack.c.b16 %v2059, %v2059
  %v2124 = vpack.c.b16 %v2060, %v2060
  %v2125 = vpack.c.b16 %v2061, %v2061
  %v2126 = vpack.c.b16 %v2062, %v2062
  %v2127 = vpack.c.b16 %v2063, %v2063
  %v2128 = vpack.c.b16 %v2064, %v2064
  %v2129 = vpack.c.b16 %v2065, %v2065
  %v2130 = vpack.c.b16 %v2066, %v2066
  %2195 = vst [vmem:[%s6] sm:$0xf] %v2067
  %2196 = vst [vmem:[%s6 + $0x4] sm:$0xf] %v2068
  %2197 = vst [vmem:[%s6 + $0x8] sm:$0xf] %v2069
  %2198 = vst [vmem:[%s6 + $0xc] sm:$0xf] %v2070
  %2199 = vst [vmem:[%s6 + $0x10] sm:$0xf] %v2071
  %2200 = vst [vmem:[%s6 + $0x14] sm:$0xf] %v2072
  %2201 = vst [vmem:[%s6 + $0x18] sm:$0xf] %v2073
  %2202 = vst [vmem:[%s6 + $0x1c] sm:$0xf] %v2074
  %2203 = vst [vmem:[%s6 + $0x20] sm:$0xf] %v2075
  %2204 = vst [vmem:[%s6 + $0x24] sm:$0xf] %v2076
  %2205 = vst [vmem:[%s6 + $0x28] sm:$0xf] %v2077
  %2206 = vst [vmem:[%s6 + $0x2c] sm:$0xf] %v2078
  %2207 = vst [vmem:[%s6 + $0x30] sm:$0xf] %v2079
  %2208 = vst [vmem:[%s6 + $0x34] sm:$0xf] %v2080
  %2209 = vst [vmem:[%s6 + $0x38] sm:$0xf] %v2081
  %2210 = vst [vmem:[%s6 + $0x3c] sm:$0xf] %v2082
  %2211 = vst [vmem:[%s6 + $0x40] sm:$0xf] %v2083
  %2212 = vst [vmem:[%s6 + $0x44] sm:$0xf] %v2084
  %2213 = vst [vmem:[%s6 + $0x48] sm:$0xf] %v2085
  %2214 = vst [vmem:[%s6 + $0x4c] sm:$0xf] %v2086
  %2215 = vst [vmem:[%s6 + $0x50] sm:$0xf] %v2087
  %2216 = vst [vmem:[%s6 + $0x54] sm:$0xf] %v2088
  %2217 = vst [vmem:[%s6 + $0x58] sm:$0xf] %v2089
  %2218 = vst [vmem:[%s6 + $0x5c] sm:$0xf] %v2090
  %2219 = vst [vmem:[%s6 + $0x60] sm:$0xf] %v2091
  %2220 = vst [vmem:[%s6 + $0x64] sm:$0xf] %v2092
  %2221 = vst [vmem:[%s6 + $0x68] sm:$0xf] %v2093
  %2222 = vst [vmem:[%s6 + $0x6c] sm:$0xf] %v2094
  %2223 = vst [vmem:[%s6 + $0x70] sm:$0xf] %v2095
  %2224 = vst [vmem:[%s6 + $0x74] sm:$0xf] %v2096
  %2225 = vst [vmem:[%s6 + $0x78] sm:$0xf] %v2097
  %2226 = vst [vmem:[%s6 + $0x7c] sm:$0xf] %v2098
  %2227 = vst [vmem:[%s6 + $0x80] sm:$0xf] %v2099
  %2228 = vst [vmem:[%s6 + $0x84] sm:$0xf] %v2100
  %2229 = vst [vmem:[%s6 + $0x88] sm:$0xf] %v2101
  %2230 = vst [vmem:[%s6 + $0x8c] sm:$0xf] %v2102
  %2231 = vst [vmem:[%s6 + $0x90] sm:$0xf] %v2103
  %2232 = vst [vmem:[%s6 + $0x94] sm:$0xf] %v2104
  %2233 = vst [vmem:[%s6 + $0x98] sm:$0xf] %v2105
  %2234 = vst [vmem:[%s6 + $0x9c] sm:$0xf] %v2106
  %2235 = vst [vmem:[%s6 + $0xa0] sm:$0xf] %v2107
  %2236 = vst [vmem:[%s6 + $0xa4] sm:$0xf] %v2108
  %2237 = vst [vmem:[%s6 + $0xa8] sm:$0xf] %v2109
  %2238 = vst [vmem:[%s6 + $0xac] sm:$0xf] %v2110
  %2239 = vst [vmem:[%s6 + $0xb0] sm:$0xf] %v2111
  %2240 = vst [vmem:[%s6 + $0xb4] sm:$0xf] %v2112
  %2241 = vst [vmem:[%s6 + $0xb8] sm:$0xf] %v2113
  %2242 = vst [vmem:[%s6 + $0xbc] sm:$0xf] %v2114
  %2243 = vst [vmem:[%s6 + $0xc0] sm:$0xf] %v2115
  %2244 = vst [vmem:[%s6 + $0xc4] sm:$0xf] %v2116
  %2245 = vst [vmem:[%s6 + $0xc8] sm:$0xf] %v2117
  %2246 = vst [vmem:[%s6 + $0xcc] sm:$0xf] %v2118
  %2247 = vst [vmem:[%s6 + $0xd0] sm:$0xf] %v2119
  %2248 = vst [vmem:[%s6 + $0xd4] sm:$0xf] %v2120
  %2249 = vst [vmem:[%s6 + $0xd8] sm:$0xf] %v2121
  %2250 = vst [vmem:[%s6 + $0xdc] sm:$0xf] %v2122
  %2251 = vst [vmem:[%s6 + $0xe0] sm:$0xf] %v2123
  %2252 = vst [vmem:[%s6 + $0xe4] sm:$0xf] %v2124
  %2253 = vst [vmem:[%s6 + $0xe8] sm:$0xf] %v2125
  %2254 = vst [vmem:[%s6 + $0xec] sm:$0xf] %v2126
  %2255 = vst [vmem:[%s6 + $0xf0] sm:$0xf] %v2127
  %2256 = vst [vmem:[%s6 + $0xf4] sm:$0xf] %v2128
  %2257 = vst [vmem:[%s6 + $0xf8] sm:$0xf] %v2129
  %2258 = vst [vmem:[%s6 + $0xfc] sm:$0xf] %v2130
  %v2259 = vmul.f32 %v1812, %v1292
  %v2260 = vmul.f32 %v1814, %v1293
  %v2261 = vmul.f32 %v1816, %v1294
  %v2262 = vmul.f32 %v1818, %v1295
  %v2263 = vmul.f32 %v1820, %v1296
  %v2264 = vmul.f32 %v1822, %v1297
  %v2265 = vmul.f32 %v1824, %v1298
  %v2266 = vmul.f32 %v1826, %v1299
  %v2267 = vmul.f32 %v1828, %v1300
  %v2268 = vmul.f32 %v1830, %v1301
  %v2269 = vmul.f32 %v1832, %v1302
  %v2270 = vmul.f32 %v1834, %v1303
  %v2271 = vmul.f32 %v1836, %v1304
  %v2272 = vmul.f32 %v1838, %v1305
  %v2273 = vmul.f32 %v1840, %v1306
  %v2274 = vmul.f32 %v1842, %v1307
  %v2275 = vmul.f32 %v1844, %v1308
  %v2276 = vmul.f32 %v1846, %v1309
  %v2277 = vmul.f32 %v1848, %v1310
  %v2278 = vmul.f32 %v1850, %v1311
  %v2279 = vmul.f32 %v1852, %v1312
  %v2280 = vmul.f32 %v1854, %v1313
  %v2281 = vmul.f32 %v1856, %v1314
  %v2282 = vmul.f32 %v1858, %v1315
  %v2283 = vmul.f32 %v1860, %v1316
  %v2284 = vmul.f32 %v1862, %v1317
  %v2285 = vmul.f32 %v1864, %v1318
  %v2286 = vmul.f32 %v1866, %v1319
  %v2287 = vmul.f32 %v1868, %v1320
  %v2288 = vmul.f32 %v1870, %v1321
  %v2289 = vmul.f32 %v1872, %v1322
  %v2290 = vmul.f32 %v1874, %v1323
  %v2291 = vmul.f32 %v1876, %v1324
  %v2292 = vmul.f32 %v1878, %v1325
  %v2293 = vmul.f32 %v1880, %v1326
  %v2294 = vmul.f32 %v1882, %v1327
  %v2295 = vmul.f32 %v1884, %v1328
  %v2296 = vmul.f32 %v1886, %v1329
  %v2297 = vmul.f32 %v1888, %v1330
  %v2298 = vmul.f32 %v1890, %v1331
  %v2299 = vmul.f32 %v1892, %v1332
  %v2300 = vmul.f32 %v1894, %v1333
  %v2301 = vmul.f32 %v1896, %v1334
  %v2302 = vmul.f32 %v1898, %v1335
  %v2303 = vmul.f32 %v1900, %v1336
  %v2304 = vmul.f32 %v1902, %v1337
  %v2305 = vmul.f32 %v1904, %v1338
  %v2306 = vmul.f32 %v1906, %v1339
  %v2307 = vmul.f32 %v1908, %v1340
  %v2308 = vmul.f32 %v1910, %v1341
  %v2309 = vmul.f32 %v1912, %v1342
  %v2310 = vmul.f32 %v1914, %v1343
  %v2311 = vmul.f32 %v1916, %v1344
  %v2312 = vmul.f32 %v1918, %v1345
  %v2313 = vmul.f32 %v1920, %v1346
  %v2314 = vmul.f32 %v1922, %v1347
  %v2315 = vmul.f32 %v1924, %v1348
  %v2316 = vmul.f32 %v1926, %v1349
  %v2317 = vmul.f32 %v1928, %v1350
  %v2318 = vmul.f32 %v1930, %v1351
  %v2319 = vmul.f32 %v1932, %v1352
  %v2320 = vmul.f32 %v1934, %v1353
  %v2321 = vmul.f32 %v1936, %v1354
  %v2322 = vmul.f32 %v1938, %v1355
  %2323 = vst [vmem:[%s7] sm:$0xff] %v2259
  %2324 = vst [vmem:[%s7 + $0x8] sm:$0xff] %v2260
  %2325 = vst [vmem:[%s7 + $0x10] sm:$0xff] %v2261
  %2326 = vst [vmem:[%s7 + $0x18] sm:$0xff] %v2262
  %2327 = vst [vmem:[%s7 + $0x20] sm:$0xff] %v2263
  %2328 = vst [vmem:[%s7 + $0x28] sm:$0xff] %v2264
  %2329 = vst [vmem:[%s7 + $0x30] sm:$0xff] %v2265
  %2330 = vst [vmem:[%s7 + $0x38] sm:$0xff] %v2266
  %2331 = vst [vmem:[%s7 + $0x40] sm:$0xff] %v2267
  %2332 = vst [vmem:[%s7 + $0x48] sm:$0xff] %v2268
  %2333 = vst [vmem:[%s7 + $0x50] sm:$0xff] %v2269
  %2334 = vst [vmem:[%s7 + $0x58] sm:$0xff] %v2270
  %2335 = vst [vmem:[%s7 + $0x60] sm:$0xff] %v2271
  %2336 = vst [vmem:[%s7 + $0x68] sm:$0xff] %v2272
  %2337 = vst [vmem:[%s7 + $0x70] sm:$0xff] %v2273
  %2338 = vst [vmem:[%s7 + $0x78] sm:$0xff] %v2274
  %2339 = vst [vmem:[%s7 + $0x80] sm:$0xff] %v2275
  %2340 = vst [vmem:[%s7 + $0x88] sm:$0xff] %v2276
  %2341 = vst [vmem:[%s7 + $0x90] sm:$0xff] %v2277
  %2342 = vst [vmem:[%s7 + $0x98] sm:$0xff] %v2278
  %2343 = vst [vmem:[%s7 + $0xa0] sm:$0xff] %v2279
  %2344 = vst [vmem:[%s7 + $0xa8] sm:$0xff] %v2280
  %2345 = vst [vmem:[%s7 + $0xb0] sm:$0xff] %v2281
  %2346 = vst [vmem:[%s7 + $0xb8] sm:$0xff] %v2282
  %2347 = vst [vmem:[%s7 + $0xc0] sm:$0xff] %v2283
  %2348 = vst [vmem:[%s7 + $0xc8] sm:$0xff] %v2284
  %2349 = vst [vmem:[%s7 + $0xd0] sm:$0xff] %v2285
  %2350 = vst [vmem:[%s7 + $0xd8] sm:$0xff] %v2286
  %2351 = vst [vmem:[%s7 + $0xe0] sm:$0xff] %v2287
  %2352 = vst [vmem:[%s7 + $0xe8] sm:$0xff] %v2288
  %2353 = vst [vmem:[%s7 + $0xf0] sm:$0xff] %v2289
  %2354 = vst [vmem:[%s7 + $0xf8] sm:$0xff] %v2290
  %2355 = vst [vmem:[%s7 + $0x100] sm:$0xff] %v2291
  %2356 = vst [vmem:[%s7 + $0x108] sm:$0xff] %v2292
  %2357 = vst [vmem:[%s7 + $0x110] sm:$0xff] %v2293
  %2358 = vst [vmem:[%s7 + $0x118] sm:$0xff] %v2294
  %2359 = vst [vmem:[%s7 + $0x120] sm:$0xff] %v2295
  %2360 = vst [vmem:[%s7 + $0x128] sm:$0xff] %v2296
  %2361 = vst [vmem:[%s7 + $0x130] sm:$0xff] %v2297
  %2362 = vst [vmem:[%s7 + $0x138] sm:$0xff] %v2298
  %2363 = vst [vmem:[%s7 + $0x140] sm:$0xff] %v2299
  %2364 = vst [vmem:[%s7 + $0x148] sm:$0xff] %v2300
  %2365 = vst [vmem:[%s7 + $0x150] sm:$0xff] %v2301
  %2366 = vst [vmem:[%s7 + $0x158] sm:$0xff] %v2302
  %2367 = vst [vmem:[%s7 + $0x160] sm:$0xff] %v2303
  %2368 = vst [vmem:[%s7 + $0x168] sm:$0xff] %v2304
  %2369 = vst [vmem:[%s7 + $0x170] sm:$0xff] %v2305
  %2370 = vst [vmem:[%s7 + $0x178] sm:$0xff] %v2306
  %2371 = vst [vmem:[%s7 + $0x180] sm:$0xff] %v2307
  %2372 = vst [vmem:[%s7 + $0x188] sm:$0xff] %v2308
  %2373 = vst [vmem:[%s7 + $0x190] sm:$0xff] %v2309
  %2374 = vst [vmem:[%s7 + $0x198] sm:$0xff] %v2310
  %2375 = vst [vmem:[%s7 + $0x1a0] sm:$0xff] %v2311
  %2376 = vst [vmem:[%s7 + $0x1a8] sm:$0xff] %v2312
  %2377 = vst [vmem:[%s7 + $0x1b0] sm:$0xff] %v2313
  %2378 = vst [vmem:[%s7 + $0x1b8] sm:$0xff] %v2314
  %2379 = vst [vmem:[%s7 + $0x1c0] sm:$0xff] %v2315
  %2380 = vst [vmem:[%s7 + $0x1c8] sm:$0xff] %v2316
  %2381 = vst [vmem:[%s7 + $0x1d0] sm:$0xff] %v2317
  %2382 = vst [vmem:[%s7 + $0x1d8] sm:$0xff] %v2318
  %2383 = vst [vmem:[%s7 + $0x1e0] sm:$0xff] %v2319
  %2384 = vst [vmem:[%s7 + $0x1e8] sm:$0xff] %v2320
  %2385 = vst [vmem:[%s7 + $0x1f0] sm:$0xff] %v2321
  %2386 = vst [vmem:[%s7 + $0x1f8] sm:$0xff] %v2322
  // Predicated region
  $region26: #{_lambda_.2} parent=0 // pred_check
    _
  $region27: #{_lambda_.2} parent=0 // pred_check_branch
    %2388 = sbr.rel (0) target = $region29
  $region28: #{_lambda_.2} parent=0 // pred_region
    _
  $region29: #{_lambda_.2} parent=0 // pred_fallthru
    _
  // Predicated region
  $region30: #{_lambda_.2} parent=0 // pred_check
    _
  $region31: #{_lambda_.2} parent=0 // pred_check_branch
    %2390 = sbr.rel (0) target = $region33
  $region32: #{_lambda_.2} parent=0 // pred_region
    _
  $region33: #{_lambda_.2} parent=0 // pred_fallthru
    _
  // Predicated region
  $region34: #{_lambda_.2} parent=0 // pred_check
    _
  $region35: #{_lambda_.2} parent=0 // pred_check_branch
    %2392 = sbr.rel (0) target = $region37
  $region36: #{_lambda_.2} parent=0 // pred_region
    _
  $region37: #{_lambda_.2} parent=0 // pred_fallthru
    _
  // Predicated region
  $region38: #{_lambda_.2} parent=0 // pred_check
    _
  $region39: #{_lambda_.2} parent=0 // pred_check_branch
    %2394 = sbr.rel (0) target = $region41
  $region40: #{_lambda_.2} parent=0 // pred_region
    _
  $region41: #{_lambda_.2} parent=0 // pred_fallthru
    _

// kernel: _lambda_.3
$region0: #{_lambda_.3}
  #allocation0 [shape = 'u32[]', space=smem, size = 0x4, offset = 0x4, fixed_abs, tag = 'smem constant byte address 0x4 - core index']
  #allocation1 [shape = 'u32[144,128]{1,0:T(1,128)}', space=vmem, size = 0x12000, scoped, tag = 'internal scratch']
  #allocation2 [shape = 'bf16[1024,128]{1,0:T(16,128)(2,1)}', space=vmem, size = 0x40000, scoped, tag = 'scratch operand']
  #allocation3 [shape = 'f32[256,128]{1,0:T(8,128)}', space=vmem, size = 0x20000, scoped, tag = 'scratch operand']
  %s0 = inlined_call_operand.vmem [shape: bf16[512,512], index: 0, kind: input, shape index: {}]
  %s1 = inlined_call_operand.vmem [shape: bf16[512,128], index: 1, kind: input, shape index: {}]
  %s2 = inlined_call_operand.vmem [shape: f32[512,128], index: 2, kind: input, shape index: {}]
  %s3 = inlined_call_operand.vmem [shape: f32[1,128], index: 3, kind: input, shape index: {}]
  %s4 = inlined_call_operand.vmem [shape: f32[512,128], index: 4, kind: output, shape index: {}]
  %s5 = sld [smem:[#allocation0]]
  $region65: #{_lambda_.3} parent=0
    _
  %s7 = ssub.s32 1, %s5
  %s8 = scalar_select 0, %s7, %s5
  loop: start=0, step=1, limit=10
  $region2: #{_lambda_.3} parent=0 // loop_pre_header
    _
  $region3: #{_lambda_.3} parent=0 // loop_header
    %s10 = sphi 0, %s14
    %p11 = scmp.ge.s32.totalorder %s10, 10
    %s17 = sphi 0, %s36
    %s18 = sphi 0, %s32
    %s19 = sphi 0, %s28
    %s20 = sphi 0, %s17
    %s21 = sphi 0, %s18
    %s22 = sphi 0, %s19
    %s23 = sphi 0, %s20
    %s24 = sphi 0, %s21
    %s25 = sphi 0, %s22
    %s37 = sphi 0, %s37
    %s39 = sphi 0, %s37
    %s40 = sphi 0, %s39
    %s54 = sphi 0, %s40
    %s58 = sphi 0, %s58
    %s60 = sphi 0, %s58
    %s61 = sphi 0, %s60
    %s75 = sphi 0, %s61
    %s79 = sphi 0, %s79
    %s81 = sphi 0, %s79
    %s82 = sphi 0, %s81
    %s96 = sphi 0, %s82
    %s100 = sphi 0, %s100
    %s102 = sphi 0, %s100
    %s103 = sphi 0, %s102
    %s117 = sphi 0, %s103
    %s121 = sphi 0, %s121
    %s123 = sphi 0, %s121
    %s124 = sphi 0, %s123
    %s138 = sphi 0, %s124
  $region4: #{_lambda_.3} parent=0 // loop_header_branch
    %13 = sbr.rel (%p11) target = $region8
  $region5: #{_lambda_.3} parent=0 // loop_body
    %s15 = ssub.s32 %s10, 1
    %s16 = ssub.s32 %s10, 2
    %s26 = sadd.s32 1, %s19
    %p27 = scmp.ge.s32.totalorder %s26, 1
    %s28 = scalar_select %p27, 0, %s26
    %s29 = sadd.s32 1, %s18
    %s30 = scalar_select %p27, %s29, %s18
    %p31 = scmp.ge.s32.totalorder %s30, 2
    %s32 = scalar_select %p31, 0, %s30
    %s33 = sadd.s32 1, %s17
    %s34 = scalar_select %p31, %s33, %s17
    %p35 = scmp.ge.s32.totalorder %s34, 4
    %s36 = scalar_select %p35, 0, %s34
    %s38 = sadd.s32 %s37, 1
    %p41 = scmp.eq.s32.totalorder %s10, 7
    %p42 = scmp.ne.s32.totalorder %s37, %s39
    %p43 = scmp.eq.s32.totalorder %s10, 0
    %p44 = por %p42, %p43
    %p45 = scmp.ne.s32.totalorder %s37, %s39
    %p46 = scmp.eq.s32.totalorder %s15, 7
    %p47 = por %p45, %p46
    %p48 = scmp.ne.s32.totalorder %s39, %s40
    %p49 = scmp.eq.s32.totalorder %s15, 0
    %p50 = por %p48, %p49
    %p51 = scmp.ne.s32.totalorder %s39, %s40
    %p52 = scmp.eq.s32.totalorder %s16, 7
    %p53 = por %p51, %p52
    %p55 = scmp.ne.s32.totalorder %s40, %s54
    %p56 = scmp.eq.s32.totalorder %s16, 0
    %p57 = por %p55, %p56
    %s59 = sadd.s32 %s58, 1
    %p62 = scmp.eq.s32.totalorder %s10, 7
    %p63 = scmp.ne.s32.totalorder %s58, %s60
    %p64 = scmp.eq.s32.totalorder %s10, 0
    %p65 = por %p63, %p64
    %p66 = scmp.ne.s32.totalorder %s58, %s60
    %p67 = scmp.eq.s32.totalorder %s15, 7
    %p68 = por %p66, %p67
    %p69 = scmp.ne.s32.totalorder %s60, %s61
    %p70 = scmp.eq.s32.totalorder %s15, 0
    %p71 = por %p69, %p70
    %p72 = scmp.ne.s32.totalorder %s60, %s61
    %p73 = scmp.eq.s32.totalorder %s16, 7
    %p74 = por %p72, %p73
    %p76 = scmp.ne.s32.totalorder %s61, %s75
    %p77 = scmp.eq.s32.totalorder %s16, 0
    %p78 = por %p76, %p77
    %s80 = sadd.s32 %s79, 1
    %p83 = scmp.eq.s32.totalorder %s10, 7
    %p84 = scmp.ne.s32.totalorder %s79, %s81
    %p85 = scmp.eq.s32.totalorder %s10, 0
    %p86 = por %p84, %p85
    %p87 = scmp.ne.s32.totalorder %s79, %s81
    %p88 = scmp.eq.s32.totalorder %s15, 7
    %p89 = por %p87, %p88
    %p90 = scmp.ne.s32.totalorder %s81, %s82
    %p91 = scmp.eq.s32.totalorder %s15, 0
    %p92 = por %p90, %p91
    %p93 = scmp.ne.s32.totalorder %s81, %s82
    %p94 = scmp.eq.s32.totalorder %s16, 7
    %p95 = por %p93, %p94
    %p97 = scmp.ne.s32.totalorder %s82, %s96
    %p98 = scmp.eq.s32.totalorder %s16, 0
    %p99 = por %p97, %p98
    %s101 = sadd.s32 %s100, 1
    %p104 = scmp.eq.s32.totalorder %s10, 7
    %p105 = scmp.ne.s32.totalorder %s100, %s102
    %p106 = scmp.eq.s32.totalorder %s10, 0
    %p107 = por %p105, %p106
    %p108 = scmp.ne.s32.totalorder %s100, %s102
    %p109 = scmp.eq.s32.totalorder %s15, 7
    %p110 = por %p108, %p109
    %p111 = scmp.ne.s32.totalorder %s102, %s103
    %p112 = scmp.eq.s32.totalorder %s15, 0
    %p113 = por %p111, %p112
    %p114 = scmp.ne.s32.totalorder %s102, %s103
    %p115 = scmp.eq.s32.totalorder %s16, 7
    %p116 = por %p114, %p115
    %p118 = scmp.ne.s32.totalorder %s103, %s117
    %p119 = scmp.eq.s32.totalorder %s16, 0
    %p120 = por %p118, %p119
    %s122 = sadd.s32 %s121, 1
    %p125 = scmp.eq.s32.totalorder %s10, 7
    %p126 = scmp.ne.s32.totalorder %s121, %s123
    %p127 = scmp.eq.s32.totalorder %s10, 0
    %p128 = por %p126, %p127
    %p129 = scmp.ne.s32.totalorder %s121, %s123
    %p130 = scmp.eq.s32.totalorder %s15, 7
    %p131 = por %p129, %p130
    %p132 = scmp.ne.s32.totalorder %s123, %s124
    %p133 = scmp.eq.s32.totalorder %s15, 0
    %p134 = por %p132, %p133
    %p135 = scmp.ne.s32.totalorder %s123, %s124
    %p136 = scmp.eq.s32.totalorder %s16, 7
    %p137 = por %p135, %p136
    %p139 = scmp.ne.s32.totalorder %s124, %s138
    %p140 = scmp.eq.s32.totalorder %s16, 0
    %p141 = por %p139, %p140
    %p142 = scmp.le.s32.totalorder 1, %s10
    %p143 = scmp.lt.s32.totalorder %s10, 9
    %p144 = pnand %p142, %p143
    %p145 = pneg %p144
    // Predicated region
    $region9: #{_lambda_.3} parent=5 // pred_check
      _
    $region10: #{_lambda_.3} parent=5 // pred_check_branch
      %147 = sbr.rel (%p144) target = $region12
    $region11: #{_lambda_.3} parent=5 // pred_region
      %s148 = ssub.s32 %s10, 1
      // Predicated region
      $region13: #{_lambda_.3} parent=11 // pred_check
        %p149 = pneg %p50
      $region14: #{_lambda_.3} parent=11 // pred_check_branch
        %151 = sbr.rel (%p149) target = $region16
      $region15: #{_lambda_.3} parent=11 // pred_region
        _
      $region16: #{_lambda_.3} parent=11 // pred_fallthru
        _
      // Predicated region
      $region17: #{_lambda_.3} parent=11 // pred_check
        %p152 = pneg %p71
      $region18: #{_lambda_.3} parent=11 // pred_check_branch
        %154 = sbr.rel (%p152) target = $region20
      $region19: #{_lambda_.3} parent=11 // pred_region
        _
      $region20: #{_lambda_.3} parent=11 // pred_fallthru
        _
      // Predicated region
      $region21: #{_lambda_.3} parent=11 // pred_check
        %p155 = pneg %p92
      $region22: #{_lambda_.3} parent=11 // pred_check_branch
        %157 = sbr.rel (%p155) target = $region24
      $region23: #{_lambda_.3} parent=11 // pred_region
        _
      $region24: #{_lambda_.3} parent=11 // pred_fallthru
        _
      // Predicated region
      $region25: #{_lambda_.3} parent=11 // pred_check
        %p158 = pneg %p113
      $region26: #{_lambda_.3} parent=11 // pred_check_branch
        %160 = sbr.rel (%p158) target = $region28
      $region27: #{_lambda_.3} parent=11 // pred_region
        _
      $region28: #{_lambda_.3} parent=11 // pred_fallthru
        _
    $region12: #{_lambda_.3} parent=5 // pred_fallthru
      _
    %p161 = scmp.lt.s32.totalorder %s10, 8
    // Predicated region
    $region29: #{_lambda_.3} parent=5 // pred_check
      %p162 = pneg %p161
    $region30: #{_lambda_.3} parent=5 // pred_check_branch
      %164 = sbr.rel (%p162) target = $region32
    $region31: #{_lambda_.3} parent=5 // pred_region
      _
    $region32: #{_lambda_.3} parent=5 // pred_fallthru
      _
    %p165 = scmp.le.s32.totalorder 1, %s10
    %p166 = scmp.lt.s32.totalorder %s10, 9
    %p167 = pnand %p165, %p166
    %p168 = pneg %p167
    // Predicated region
    $region33: #{_lambda_.3} parent=5 // pred_check
      _
    $region34: #{_lambda_.3} parent=5 // pred_check_branch
      %170 = sbr.rel (%p167) target = $region36
    $region35: #{_lambda_.3} parent=5 // pred_region
      %s171 = ssub.s32 %s10, 1
      %p172 = pneg %p50
      %p173 = pneg %p47
      %p174 = pneg %p71
      %p175 = pneg %p68
      %p176 = pneg %p92
      %p177 = pneg %p89
      %p178 = pneg %p113
      %p179 = pneg %p110
      %p180 = pneg %p134
      %p181 = pneg %p131
      %p183 = scmp.eq.s32.totalorder %s20, 0
      %p184 = scmp.eq.s32.totalorder %s21, 0
      %p185 = pnand %p183, %p184
      %p186 = pneg %p185
      %p187 = scmp.eq.s32.totalorder %s22, 0
      %p188 = pnand %p186, %p187
      %p189 = pneg %p188
      // Predicated region
      $region37: #{_lambda_.3} parent=35 // pred_check
        _
      $region38: #{_lambda_.3} parent=35 // pred_check_branch
        %191 = sbr.rel (%p188) target = $region40
      $region39: #{_lambda_.3} parent=35 // pred_region
        %v192 = vld [vmem:[%s1] sm:$0xf]
        %v193 = vld [vmem:[%s1 + $0x4] sm:$0xf]
        %v194 = vld [vmem:[%s1 + $0x8] sm:$0xf]
        %v195 = vld [vmem:[%s1 + $0xc] sm:$0xf]
        %v196 = vld [vmem:[%s1 + $0x10] sm:$0xf]
        %v197 = vld [vmem:[%s1 + $0x14] sm:$0xf]
        %v198 = vld [vmem:[%s1 + $0x18] sm:$0xf]
        %v199 = vld [vmem:[%s1 + $0x1c] sm:$0xf]
        %v200 = vld [vmem:[%s1 + $0x20] sm:$0xf]
        %v201 = vld [vmem:[%s1 + $0x24] sm:$0xf]
        %v202 = vld [vmem:[%s1 + $0x28] sm:$0xf]
        %v203 = vld [vmem:[%s1 + $0x2c] sm:$0xf]
        %v204 = vld [vmem:[%s1 + $0x30] sm:$0xf]
        %v205 = vld [vmem:[%s1 + $0x34] sm:$0xf]
        %v206 = vld [vmem:[%s1 + $0x38] sm:$0xf]
        %v207 = vld [vmem:[%s1 + $0x3c] sm:$0xf]
        %v208 = vld [vmem:[%s1 + $0x40] sm:$0xf]
        %v209 = vld [vmem:[%s1 + $0x44] sm:$0xf]
        %v210 = vld [vmem:[%s1 + $0x48] sm:$0xf]
        %v211 = vld [vmem:[%s1 + $0x4c] sm:$0xf]
        %v212 = vld [vmem:[%s1 + $0x50] sm:$0xf]
        %v213 = vld [vmem:[%s1 + $0x54] sm:$0xf]
        %v214 = vld [vmem:[%s1 + $0x58] sm:$0xf]
        %v215 = vld [vmem:[%s1 + $0x5c] sm:$0xf]
        %v216 = vld [vmem:[%s1 + $0x60] sm:$0xf]
        %v217 = vld [vmem:[%s1 + $0x64] sm:$0xf]
        %v218 = vld [vmem:[%s1 + $0x68] sm:$0xf]
        %v219 = vld [vmem:[%s1 + $0x6c] sm:$0xf]
        %v220 = vld [vmem:[%s1 + $0x70] sm:$0xf]
        %v221 = vld [vmem:[%s1 + $0x74] sm:$0xf]
        %v222 = vld [vmem:[%s1 + $0x78] sm:$0xf]
        %v223 = vld [vmem:[%s1 + $0x7c] sm:$0xf]
        %v224 = vld [vmem:[%s1 + $0x80] sm:$0xf]
        %v225 = vld [vmem:[%s1 + $0x84] sm:$0xf]
        %v226 = vld [vmem:[%s1 + $0x88] sm:$0xf]
        %v227 = vld [vmem:[%s1 + $0x8c] sm:$0xf]
        %v228 = vld [vmem:[%s1 + $0x90] sm:$0xf]
        %v229 = vld [vmem:[%s1 + $0x94] sm:$0xf]
        %v230 = vld [vmem:[%s1 + $0x98] sm:$0xf]
        %v231 = vld [vmem:[%s1 + $0x9c] sm:$0xf]
        %v232 = vld [vmem:[%s1 + $0xa0] sm:$0xf]
        %v233 = vld [vmem:[%s1 + $0xa4] sm:$0xf]
        %v234 = vld [vmem:[%s1 + $0xa8] sm:$0xf]
        %v235 = vld [vmem:[%s1 + $0xac] sm:$0xf]
        %v236 = vld [vmem:[%s1 + $0xb0] sm:$0xf]
        %v237 = vld [vmem:[%s1 + $0xb4] sm:$0xf]
        %v238 = vld [vmem:[%s1 + $0xb8] sm:$0xf]
        %v239 = vld [vmem:[%s1 + $0xbc] sm:$0xf]
        %v240 = vld [vmem:[%s1 + $0xc0] sm:$0xf]
        %v241 = vld [vmem:[%s1 + $0xc4] sm:$0xf]
        %v242 = vld [vmem:[%s1 + $0xc8] sm:$0xf]
        %v243 = vld [vmem:[%s1 + $0xcc] sm:$0xf]
        %v244 = vld [vmem:[%s1 + $0xd0] sm:$0xf]
        %v245 = vld [vmem:[%s1 + $0xd4] sm:$0xf]
        %v246 = vld [vmem:[%s1 + $0xd8] sm:$0xf]
        %v247 = vld [vmem:[%s1 + $0xdc] sm:$0xf]
        %v248 = vld [vmem:[%s1 + $0xe0] sm:$0xf]
        %v249 = vld [vmem:[%s1 + $0xe4] sm:$0xf]
        %v250 = vld [vmem:[%s1 + $0xe8] sm:$0xf]
        %v251 = vld [vmem:[%s1 + $0xec] sm:$0xf]
        %v252 = vld [vmem:[%s1 + $0xf0] sm:$0xf]
        %v253 = vld [vmem:[%s1 + $0xf4] sm:$0xf]
        %v254 = vld [vmem:[%s1 + $0xf8] sm:$0xf]
        %v255 = vld [vmem:[%s1 + $0xfc] sm:$0xf]
        %v320 = vunpack.c.l.b16 %v192
        %v321 = vunpack.c.l.b16 %v193
        %v322 = vunpack.c.l.b16 %v194
        %v323 = vunpack.c.l.b16 %v195
        %v324 = vunpack.c.l.b16 %v196
        %v325 = vunpack.c.l.b16 %v197
        %v326 = vunpack.c.l.b16 %v198
        %v327 = vunpack.c.l.b16 %v199
        %v328 = vunpack.c.l.b16 %v200
        %v329 = vunpack.c.l.b16 %v201
        %v330 = vunpack.c.l.b16 %v202
        %v331 = vunpack.c.l.b16 %v203
        %v332 = vunpack.c.l.b16 %v204
        %v333 = vunpack.c.l.b16 %v205
        %v334 = vunpack.c.l.b16 %v206
        %v335 = vunpack.c.l.b16 %v207
        %v336 = vunpack.c.l.b16 %v208
        %v337 = vunpack.c.l.b16 %v209
        %v338 = vunpack.c.l.b16 %v210
        %v339 = vunpack.c.l.b16 %v211
        %v340 = vunpack.c.l.b16 %v212
        %v341 = vunpack.c.l.b16 %v213
        %v342 = vunpack.c.l.b16 %v214
        %v343 = vunpack.c.l.b16 %v215
        %v344 = vunpack.c.l.b16 %v216
        %v345 = vunpack.c.l.b16 %v217
        %v346 = vunpack.c.l.b16 %v218
        %v347 = vunpack.c.l.b16 %v219
        %v348 = vunpack.c.l.b16 %v220
        %v349 = vunpack.c.l.b16 %v221
        %v350 = vunpack.c.l.b16 %v222
        %v351 = vunpack.c.l.b16 %v223
        %v352 = vunpack.c.l.b16 %v224
        %v353 = vunpack.c.l.b16 %v225
        %v354 = vunpack.c.l.b16 %v226
        %v355 = vunpack.c.l.b16 %v227
        %v356 = vunpack.c.l.b16 %v228
        %v357 = vunpack.c.l.b16 %v229
        %v358 = vunpack.c.l.b16 %v230
        %v359 = vunpack.c.l.b16 %v231
        %v360 = vunpack.c.l.b16 %v232
        %v361 = vunpack.c.l.b16 %v233
        %v362 = vunpack.c.l.b16 %v234
        %v363 = vunpack.c.l.b16 %v235
        %v364 = vunpack.c.l.b16 %v236
        %v365 = vunpack.c.l.b16 %v237
        %v366 = vunpack.c.l.b16 %v238
        %v367 = vunpack.c.l.b16 %v239
        %v368 = vunpack.c.l.b16 %v240
        %v369 = vunpack.c.l.b16 %v241
        %v370 = vunpack.c.l.b16 %v242
        %v371 = vunpack.c.l.b16 %v243
        %v372 = vunpack.c.l.b16 %v244
        %v373 = vunpack.c.l.b16 %v245
        %v374 = vunpack.c.l.b16 %v246
        %v375 = vunpack.c.l.b16 %v247
        %v376 = vunpack.c.l.b16 %v248
        %v377 = vunpack.c.l.b16 %v249
        %v378 = vunpack.c.l.b16 %v250
        %v379 = vunpack.c.l.b16 %v251
        %v380 = vunpack.c.l.b16 %v252
        %v381 = vunpack.c.l.b16 %v253
        %v382 = vunpack.c.l.b16 %v254
        %v383 = vunpack.c.l.b16 %v255
        %v384 = vpack.c.b16 %v321, %v320
        %v385 = vpack.c.b16 %v323, %v322
        %v386 = vpack.c.b16 %v325, %v324
        %v387 = vpack.c.b16 %v327, %v326
        %v388 = vpack.c.b16 %v329, %v328
        %v389 = vpack.c.b16 %v331, %v330
        %v390 = vpack.c.b16 %v333, %v332
        %v391 = vpack.c.b16 %v335, %v334
        %v392 = vpack.c.b16 %v337, %v336
        %v393 = vpack.c.b16 %v339, %v338
        %v394 = vpack.c.b16 %v341, %v340
        %v395 = vpack.c.b16 %v343, %v342
        %v396 = vpack.c.b16 %v345, %v344
        %v397 = vpack.c.b16 %v347, %v346
        %v398 = vpack.c.b16 %v349, %v348
        %v399 = vpack.c.b16 %v351, %v350
        %v400 = vpack.c.b16 %v353, %v352
        %v401 = vpack.c.b16 %v355, %v354
        %v402 = vpack.c.b16 %v357, %v356
        %v403 = vpack.c.b16 %v359, %v358
        %v404 = vpack.c.b16 %v361, %v360
        %v405 = vpack.c.b16 %v363, %v362
        %v406 = vpack.c.b16 %v365, %v364
        %v407 = vpack.c.b16 %v367, %v366
        %v408 = vpack.c.b16 %v369, %v368
        %v409 = vpack.c.b16 %v371, %v370
        %v410 = vpack.c.b16 %v373, %v372
        %v411 = vpack.c.b16 %v375, %v374
        %v412 = vpack.c.b16 %v377, %v376
        %v413 = vpack.c.b16 %v379, %v378
        %v414 = vpack.c.b16 %v381, %v380
        %v415 = vpack.c.b16 %v383, %v382
        %448 = vst [vmem:[#allocation2] sm:$0xff] %v384
        %449 = vst [vmem:[#allocation2 + $0x8] sm:$0xff] %v385
        %450 = vst [vmem:[#allocation2 + $0x10] sm:$0xff] %v386
        %451 = vst [vmem:[#allocation2 + $0x18] sm:$0xff] %v387
        %452 = vst [vmem:[#allocation2 + $0x20] sm:$0xff] %v388
        %453 = vst [vmem:[#allocation2 + $0x28] sm:$0xff] %v389
        %454 = vst [vmem:[#allocation2 + $0x30] sm:$0xff] %v390
        %455 = vst [vmem:[#allocation2 + $0x38] sm:$0xff] %v391
        %456 = vst [vmem:[#allocation2 + $0x40] sm:$0xff] %v392
        %457 = vst [vmem:[#allocation2 + $0x48] sm:$0xff] %v393
        %458 = vst [vmem:[#allocation2 + $0x50] sm:$0xff] %v394
        %459 = vst [vmem:[#allocation2 + $0x58] sm:$0xff] %v395
        %460 = vst [vmem:[#allocation2 + $0x60] sm:$0xff] %v396
        %461 = vst [vmem:[#allocation2 + $0x68] sm:$0xff] %v397
        %462 = vst [vmem:[#allocation2 + $0x70] sm:$0xff] %v398
        %463 = vst [vmem:[#allocation2 + $0x78] sm:$0xff] %v399
        %464 = vst [vmem:[#allocation2 + $0x80] sm:$0xff] %v400
        %465 = vst [vmem:[#allocation2 + $0x88] sm:$0xff] %v401
        %466 = vst [vmem:[#allocation2 + $0x90] sm:$0xff] %v402
        %467 = vst [vmem:[#allocation2 + $0x98] sm:$0xff] %v403
        %468 = vst [vmem:[#allocation2 + $0xa0] sm:$0xff] %v404
        %469 = vst [vmem:[#allocation2 + $0xa8] sm:$0xff] %v405
        %470 = vst [vmem:[#allocation2 + $0xb0] sm:$0xff] %v406
        %471 = vst [vmem:[#allocation2 + $0xb8] sm:$0xff] %v407
        %472 = vst [vmem:[#allocation2 + $0xc0] sm:$0xff] %v408
        %473 = vst [vmem:[#allocation2 + $0xc8] sm:$0xff] %v409
        %474 = vst [vmem:[#allocation2 + $0xd0] sm:$0xff] %v410
        %475 = vst [vmem:[#allocation2 + $0xd8] sm:$0xff] %v411
        %476 = vst [vmem:[#allocation2 + $0xe0] sm:$0xff] %v412
        %477 = vst [vmem:[#allocation2 + $0xe8] sm:$0xff] %v413
        %478 = vst [vmem:[#allocation2 + $0xf0] sm:$0xff] %v414
        %479 = vst [vmem:[#allocation2 + $0xf8] sm:$0xff] %v415
        %v480 = vld [vmem:[%s2] sm:$0xff]
        %v481 = vld [vmem:[%s2 + $0x8] sm:$0xff]
        %v482 = vld [vmem:[%s2 + $0x10] sm:$0xff]
        %v483 = vld [vmem:[%s2 + $0x18] sm:$0xff]
        %v484 = vld [vmem:[%s2 + $0x20] sm:$0xff]
        %v485 = vld [vmem:[%s2 + $0x28] sm:$0xff]
        %v486 = vld [vmem:[%s2 + $0x30] sm:$0xff]
        %v487 = vld [vmem:[%s2 + $0x38] sm:$0xff]
        %v488 = vld [vmem:[%s2 + $0x40] sm:$0xff]
        %v489 = vld [vmem:[%s2 + $0x48] sm:$0xff]
        %v490 = vld [vmem:[%s2 + $0x50] sm:$0xff]
        %v491 = vld [vmem:[%s2 + $0x58] sm:$0xff]
        %v492 = vld [vmem:[%s2 + $0x60] sm:$0xff]
        %v493 = vld [vmem:[%s2 + $0x68] sm:$0xff]
        %v494 = vld [vmem:[%s2 + $0x70] sm:$0xff]
        %v495 = vld [vmem:[%s2 + $0x78] sm:$0xff]
        %v496 = vld [vmem:[%s2 + $0x80] sm:$0xff]
        %v497 = vld [vmem:[%s2 + $0x88] sm:$0xff]
        %v498 = vld [vmem:[%s2 + $0x90] sm:$0xff]
        %v499 = vld [vmem:[%s2 + $0x98] sm:$0xff]
        %v500 = vld [vmem:[%s2 + $0xa0] sm:$0xff]
        %v501 = vld [vmem:[%s2 + $0xa8] sm:$0xff]
        %v502 = vld [vmem:[%s2 + $0xb0] sm:$0xff]
        %v503 = vld [vmem:[%s2 + $0xb8] sm:$0xff]
        %v504 = vld [vmem:[%s2 + $0xc0] sm:$0xff]
        %v505 = vld [vmem:[%s2 + $0xc8] sm:$0xff]
        %v506 = vld [vmem:[%s2 + $0xd0] sm:$0xff]
        %v507 = vld [vmem:[%s2 + $0xd8] sm:$0xff]
        %v508 = vld [vmem:[%s2 + $0xe0] sm:$0xff]
        %v509 = vld [vmem:[%s2 + $0xe8] sm:$0xff]
        %v510 = vld [vmem:[%s2 + $0xf0] sm:$0xff]
        %v511 = vld [vmem:[%s2 + $0xf8] sm:$0xff]
        %v512 = vld [vmem:[%s2 + $0x100] sm:$0xff]
        %v513 = vld [vmem:[%s2 + $0x108] sm:$0xff]
        %v514 = vld [vmem:[%s2 + $0x110] sm:$0xff]
        %v515 = vld [vmem:[%s2 + $0x118] sm:$0xff]
        %v516 = vld [vmem:[%s2 + $0x120] sm:$0xff]
        %v517 = vld [vmem:[%s2 + $0x128] sm:$0xff]
        %v518 = vld [vmem:[%s2 + $0x130] sm:$0xff]
        %v519 = vld [vmem:[%s2 + $0x138] sm:$0xff]
        %v520 = vld [vmem:[%s2 + $0x140] sm:$0xff]
        %v521 = vld [vmem:[%s2 + $0x148] sm:$0xff]
        %v522 = vld [vmem:[%s2 + $0x150] sm:$0xff]
        %v523 = vld [vmem:[%s2 + $0x158] sm:$0xff]
        %v524 = vld [vmem:[%s2 + $0x160] sm:$0xff]
        %v525 = vld [vmem:[%s2 + $0x168] sm:$0xff]
        %v526 = vld [vmem:[%s2 + $0x170] sm:$0xff]
        %v527 = vld [vmem:[%s2 + $0x178] sm:$0xff]
        %v528 = vld [vmem:[%s2 + $0x180] sm:$0xff]
        %v529 = vld [vmem:[%s2 + $0x188] sm:$0xff]
        %v530 = vld [vmem:[%s2 + $0x190] sm:$0xff]
        %v531 = vld [vmem:[%s2 + $0x198] sm:$0xff]
        %v532 = vld [vmem:[%s2 + $0x1a0] sm:$0xff]
        %v533 = vld [vmem:[%s2 + $0x1a8] sm:$0xff]
        %v534 = vld [vmem:[%s2 + $0x1b0] sm:$0xff]
        %v535 = vld [vmem:[%s2 + $0x1b8] sm:$0xff]
        %v536 = vld [vmem:[%s2 + $0x1c0] sm:$0xff]
        %v537 = vld [vmem:[%s2 + $0x1c8] sm:$0xff]
        %v538 = vld [vmem:[%s2 + $0x1d0] sm:$0xff]
        %v539 = vld [vmem:[%s2 + $0x1d8] sm:$0xff]
        %v540 = vld [vmem:[%s2 + $0x1e0] sm:$0xff]
        %v541 = vld [vmem:[%s2 + $0x1e8] sm:$0xff]
        %v542 = vld [vmem:[%s2 + $0x1f0] sm:$0xff]
        %v543 = vld [vmem:[%s2 + $0x1f8] sm:$0xff]
        %544 = vst [vmem:[%s4] sm:$0xff] %v480
        %545 = vst [vmem:[%s4 + $0x8] sm:$0xff] %v481
        %546 = vst [vmem:[%s4 + $0x10] sm:$0xff] %v482
        %547 = vst [vmem:[%s4 + $0x18] sm:$0xff] %v483
        %548 = vst [vmem:[%s4 + $0x20] sm:$0xff] %v484
        %549 = vst [vmem:[%s4 + $0x28] sm:$0xff] %v485
        %550 = vst [vmem:[%s4 + $0x30] sm:$0xff] %v486
        %551 = vst [vmem:[%s4 + $0x38] sm:$0xff] %v487
        %552 = vst [vmem:[%s4 + $0x40] sm:$0xff] %v488
        %553 = vst [vmem:[%s4 + $0x48] sm:$0xff] %v489
        %554 = vst [vmem:[%s4 + $0x50] sm:$0xff] %v490
        %555 = vst [vmem:[%s4 + $0x58] sm:$0xff] %v491
        %556 = vst [vmem:[%s4 + $0x60] sm:$0xff] %v492
        %557 = vst [vmem:[%s4 + $0x68] sm:$0xff] %v493
        %558 = vst [vmem:[%s4 + $0x70] sm:$0xff] %v494
        %559 = vst [vmem:[%s4 + $0x78] sm:$0xff] %v495
        %560 = vst [vmem:[%s4 + $0x80] sm:$0xff] %v496
        %561 = vst [vmem:[%s4 + $0x88] sm:$0xff] %v497
        %562 = vst [vmem:[%s4 + $0x90] sm:$0xff] %v498
        %563 = vst [vmem:[%s4 + $0x98] sm:$0xff] %v499
        %564 = vst [vmem:[%s4 + $0xa0] sm:$0xff] %v500
        %565 = vst [vmem:[%s4 + $0xa8] sm:$0xff] %v501
        %566 = vst [vmem:[%s4 + $0xb0] sm:$0xff] %v502
        %567 = vst [vmem:[%s4 + $0xb8] sm:$0xff] %v503
        %568 = vst [vmem:[%s4 + $0xc0] sm:$0xff] %v504
        %569 = vst [vmem:[%s4 + $0xc8] sm:$0xff] %v505
        %570 = vst [vmem:[%s4 + $0xd0] sm:$0xff] %v506
        %571 = vst [vmem:[%s4 + $0xd8] sm:$0xff] %v507
        %572 = vst [vmem:[%s4 + $0xe0] sm:$0xff] %v508
        %573 = vst [vmem:[%s4 + $0xe8] sm:$0xff] %v509
        %574 = vst [vmem:[%s4 + $0xf0] sm:$0xff] %v510
        %575 = vst [vmem:[%s4 + $0xf8] sm:$0xff] %v511
        %576 = vst [vmem:[%s4 + $0x100] sm:$0xff] %v512
        %577 = vst [vmem:[%s4 + $0x108] sm:$0xff] %v513
        %578 = vst [vmem:[%s4 + $0x110] sm:$0xff] %v514
        %579 = vst [vmem:[%s4 + $0x118] sm:$0xff] %v515
        %580 = vst [vmem:[%s4 + $0x120] sm:$0xff] %v516
        %581 = vst [vmem:[%s4 + $0x128] sm:$0xff] %v517
        %582 = vst [vmem:[%s4 + $0x130] sm:$0xff] %v518
        %583 = vst [vmem:[%s4 + $0x138] sm:$0xff] %v519
        %584 = vst [vmem:[%s4 + $0x140] sm:$0xff] %v520
        %585 = vst [vmem:[%s4 + $0x148] sm:$0xff] %v521
        %586 = vst [vmem:[%s4 + $0x150] sm:$0xff] %v522
        %587 = vst [vmem:[%s4 + $0x158] sm:$0xff] %v523
        %588 = vst [vmem:[%s4 + $0x160] sm:$0xff] %v524
        %589 = vst [vmem:[%s4 + $0x168] sm:$0xff] %v525
        %590 = vst [vmem:[%s4 + $0x170] sm:$0xff] %v526
        %591 = vst [vmem:[%s4 + $0x178] sm:$0xff] %v527
        %592 = vst [vmem:[%s4 + $0x180] sm:$0xff] %v528
        %593 = vst [vmem:[%s4 + $0x188] sm:$0xff] %v529
        %594 = vst [vmem:[%s4 + $0x190] sm:$0xff] %v530
        %595 = vst [vmem:[%s4 + $0x198] sm:$0xff] %v531
        %596 = vst [vmem:[%s4 + $0x1a0] sm:$0xff] %v532
        %597 = vst [vmem:[%s4 + $0x1a8] sm:$0xff] %v533
        %598 = vst [vmem:[%s4 + $0x1b0] sm:$0xff] %v534
        %599 = vst [vmem:[%s4 + $0x1b8] sm:$0xff] %v535
        %600 = vst [vmem:[%s4 + $0x1c0] sm:$0xff] %v536
        %601 = vst [vmem:[%s4 + $0x1c8] sm:$0xff] %v537
        %602 = vst [vmem:[%s4 + $0x1d0] sm:$0xff] %v538
        %603 = vst [vmem:[%s4 + $0x1d8] sm:$0xff] %v539
        %604 = vst [vmem:[%s4 + $0x1e0] sm:$0xff] %v540
        %605 = vst [vmem:[%s4 + $0x1e8] sm:$0xff] %v541
        %606 = vst [vmem:[%s4 + $0x1f0] sm:$0xff] %v542
        %607 = vst [vmem:[%s4 + $0x1f8] sm:$0xff] %v543
      $region40: #{_lambda_.3} parent=35 // pred_fallthru
        _
      // Predicated region
      $region41: #{_lambda_.3} parent=35 // pred_check
        %p608 = pneg %p187
      $region42: #{_lambda_.3} parent=35 // pred_check_branch
        %610 = sbr.rel (%p608) target = $region44
      $region43: #{_lambda_.3} parent=35 // pred_region
        %611 = vst [vmem:[#allocation3] sm:$0xff] 0.0
        %612 = vst [vmem:[#allocation3 + $0x8] sm:$0xff] 0.0
        %613 = vst [vmem:[#allocation3 + $0x10] sm:$0xff] 0.0
        %614 = vst [vmem:[#allocation3 + $0x18] sm:$0xff] 0.0
        %615 = vst [vmem:[#allocation3 + $0x20] sm:$0xff] 0.0
        %616 = vst [vmem:[#allocation3 + $0x28] sm:$0xff] 0.0
        %617 = vst [vmem:[#allocation3 + $0x30] sm:$0xff] 0.0
        %618 = vst [vmem:[#allocation3 + $0x38] sm:$0xff] 0.0
        %619 = vst [vmem:[#allocation3 + $0x40] sm:$0xff] 0.0
        %620 = vst [vmem:[#allocation3 + $0x48] sm:$0xff] 0.0
        %621 = vst [vmem:[#allocation3 + $0x50] sm:$0xff] 0.0
        %622 = vst [vmem:[#allocation3 + $0x58] sm:$0xff] 0.0
        %623 = vst [vmem:[#allocation3 + $0x60] sm:$0xff] 0.0
        %624 = vst [vmem:[#allocation3 + $0x68] sm:$0xff] 0.0
        %625 = vst [vmem:[#allocation3 + $0x70] sm:$0xff] 0.0
        %626 = vst [vmem:[#allocation3 + $0x78] sm:$0xff] 0.0
        %627 = vst [vmem:[#allocation3 + $0x80] sm:$0xff] 0.0
        %628 = vst [vmem:[#allocation3 + $0x88] sm:$0xff] 0.0
        %629 = vst [vmem:[#allocation3 + $0x90] sm:$0xff] 0.0
        %630 = vst [vmem:[#allocation3 + $0x98] sm:$0xff] 0.0
        %631 = vst [vmem:[#allocation3 + $0xa0] sm:$0xff] 0.0
        %632 = vst [vmem:[#allocation3 + $0xa8] sm:$0xff] 0.0
        %633 = vst [vmem:[#allocation3 + $0xb0] sm:$0xff] 0.0
        %634 = vst [vmem:[#allocation3 + $0xb8] sm:$0xff] 0.0
        %635 = vst [vmem:[#allocation3 + $0xc0] sm:$0xff] 0.0
        %636 = vst [vmem:[#allocation3 + $0xc8] sm:$0xff] 0.0
        %637 = vst [vmem:[#allocation3 + $0xd0] sm:$0xff] 0.0
        %638 = vst [vmem:[#allocation3 + $0xd8] sm:$0xff] 0.0
        %639 = vst [vmem:[#allocation3 + $0xe0] sm:$0xff] 0.0
        %640 = vst [vmem:[#allocation3 + $0xe8] sm:$0xff] 0.0
        %641 = vst [vmem:[#allocation3 + $0xf0] sm:$0xff] 0.0
        %642 = vst [vmem:[#allocation3 + $0xf8] sm:$0xff] 0.0
      $region44: #{_lambda_.3} parent=35 // pred_fallthru
        _
      %p643 = scmp.lt.s32.totalorder %s20, 0
      %s644 = ssub.s32 0, %s20
      %s645 = scalar_select %p643, %s644, %s20
      %s646 = sand.u32 %s645, 1
      %s647 = ssub.s32 0, %s646
      %s648 = scalar_select %p643, %s647, %s646
      %s649 = smul.u32 %s648, 512
      %s650 = smul.u32 %s22, 512
      %s651 = sadd.s32 %s649, %s650
      %s652 = sshra.s32 %s651, 4
      %s653 = sand.u32 %s651, 15
      %s654 = smul.addr %s652, 8
      %s655 = scalar_lea.vmem [#allocation2], %s654
      %v656 = vld [vmem:[%s655] sm:$0xff]
      %v657 = vld [vmem:[%s655 + $0x8] sm:$0xff]
      %v658 = vld [vmem:[%s655 + $0x10] sm:$0xff]
      %v659 = vld [vmem:[%s655 + $0x18] sm:$0xff]
      %v660 = vld [vmem:[%s655 + $0x20] sm:$0xff]
      %v661 = vld [vmem:[%s655 + $0x28] sm:$0xff]
      %v662 = vld [vmem:[%s655 + $0x30] sm:$0xff]
      %v663 = vld [vmem:[%s655 + $0x38] sm:$0xff]
      %v664 = vld [vmem:[%s655 + $0x40] sm:$0xff]
      %v665 = vld [vmem:[%s655 + $0x48] sm:$0xff]
      %v666 = vld [vmem:[%s655 + $0x50] sm:$0xff]
      %v667 = vld [vmem:[%s655 + $0x58] sm:$0xff]
      %v668 = vld [vmem:[%s655 + $0x60] sm:$0xff]
      %v669 = vld [vmem:[%s655 + $0x68] sm:$0xff]
      %v670 = vld [vmem:[%s655 + $0x70] sm:$0xff]
      %v671 = vld [vmem:[%s655 + $0x78] sm:$0xff]
      %v672 = vld [vmem:[%s655 + $0x80] sm:$0xff]
      %v673 = vld [vmem:[%s655 + $0x88] sm:$0xff]
      %v674 = vld [vmem:[%s655 + $0x90] sm:$0xff]
      %v675 = vld [vmem:[%s655 + $0x98] sm:$0xff]
      %v676 = vld [vmem:[%s655 + $0xa0] sm:$0xff]
      %v677 = vld [vmem:[%s655 + $0xa8] sm:$0xff]
      %v678 = vld [vmem:[%s655 + $0xb0] sm:$0xff]
      %v679 = vld [vmem:[%s655 + $0xb8] sm:$0xff]
      %v680 = vld [vmem:[%s655 + $0xc0] sm:$0xff]
      %v681 = vld [vmem:[%s655 + $0xc8] sm:$0xff]
      %v682 = vld [vmem:[%s655 + $0xd0] sm:$0xff]
      %v683 = vld [vmem:[%s655 + $0xd8] sm:$0xff]
      %v684 = vld [vmem:[%s655 + $0xe0] sm:$0xff]
      %v685 = vld [vmem:[%s655 + $0xe8] sm:$0xff]
      %v686 = vld [vmem:[%s655 + $0xf0] sm:$0xff]
      %v687 = vld [vmem:[%s655 + $0xf8] sm:$0xff]
      %s688 = smul.u32 %s21, 256
      %s689 = sshra.s32 %s650, 7
      %s690 = sand.u32 %s650, 127
      %s691 = sshra.s32 %s688, 3
      %s692 = sand.u32 %s688, 7
      %s693 = smul.u32 %s691, 4
      %s694 = sadd.s32 %s689, %s693
      %s695 = smul.addr %s694, 4
      %s696 = scalar_lea.vmem %s0, %s695
      %v697 = vld [vmem:[%s696] sm:$0xff]
      %v698 = vld [vmem:[%s696 + $0x8] sm:$0xff]
      %v699 = vld [vmem:[%s696 + $0x10] sm:$0xff]
      %v700 = vld [vmem:[%s696 + $0x18] sm:$0xff]
      %v701 = vld [vmem:[%s696 + $0x20] sm:$0xff]
      %v702 = vld [vmem:[%s696 + $0x28] sm:$0xff]
      %v703 = vld [vmem:[%s696 + $0x30] sm:$0xff]
      %v704 = vld [vmem:[%s696 + $0x38] sm:$0xff]
      %v705 = vld [vmem:[%s696 + $0x40] sm:$0xff]
      %v706 = vld [vmem:[%s696 + $0x48] sm:$0xff]
      %v707 = vld [vmem:[%s696 + $0x50] sm:$0xff]
      %v708 = vld [vmem:[%s696 + $0x58] sm:$0xff]
      %v709 = vld [vmem:[%s696 + $0x60] sm:$0xff]
      %v710 = vld [vmem:[%s696 + $0x68] sm:$0xff]
      %v711 = vld [vmem:[%s696 + $0x70] sm:$0xff]
      %v712 = vld [vmem:[%s696 + $0x78] sm:$0xff]
      %v713 = vld [vmem:[%s696 + $0x80] sm:$0xff]
      %v714 = vld [vmem:[%s696 + $0x88] sm:$0xff]
      %v715 = vld [vmem:[%s696 + $0x90] sm:$0xff]
      %v716 = vld [vmem:[%s696 + $0x98] sm:$0xff]
      %v717 = vld [vmem:[%s696 + $0xa0] sm:$0xff]
      %v718 = vld [vmem:[%s696 + $0xa8] sm:$0xff]
      %v719 = vld [vmem:[%s696 + $0xb0] sm:$0xff]
      %v720 = vld [vmem:[%s696 + $0xb8] sm:$0xff]
      %v721 = vld [vmem:[%s696 + $0xc0] sm:$0xff]
      %v722 = vld [vmem:[%s696 + $0xc8] sm:$0xff]
      %v723 = vld [vmem:[%s696 + $0xd0] sm:$0xff]
      %v724 = vld [vmem:[%s696 + $0xd8] sm:$0xff]
      %v725 = vld [vmem:[%s696 + $0xe0] sm:$0xff]
      %v726 = vld [vmem:[%s696 + $0xe8] sm:$0xff]
      %v727 = vld [vmem:[%s696 + $0xf0] sm:$0xff]
      %v728 = vld [vmem:[%s696 + $0xf8] sm:$0xff]
      %v729 = vld [vmem:[%s696 + $0x100] sm:$0xff]
      %v730 = vld [vmem:[%s696 + $0x108] sm:$0xff]
      %v731 = vld [vmem:[%s696 + $0x110] sm:$0xff]
      %v732 = vld [vmem:[%s696 + $0x118] sm:$0xff]
      %v733 = vld [vmem:[%s696 + $0x120] sm:$0xff]
      %v734 = vld [vmem:[%s696 + $0x128] sm:$0xff]
      %v735 = vld [vmem:[%s696 + $0x130] sm:$0xff]
      %v736 = vld [vmem:[%s696 + $0x138] sm:$0xff]
      %v737 = vld [vmem:[%s696 + $0x140] sm:$0xff]
      %v738 = vld [vmem:[%s696 + $0x148] sm:$0xff]
      %v739 = vld [vmem:[%s696 + $0x150] sm:$0xff]
      %v740 = vld [vmem:[%s696 + $0x158] sm:$0xff]
      %v741 = vld [vmem:[%s696 + $0x160] sm:$0xff]
      %v742 = vld [vmem:[%s696 + $0x168] sm:$0xff]
      %v743 = vld [vmem:[%s696 + $0x170] sm:$0xff]
      %v744 = vld [vmem:[%s696 + $0x178] sm:$0xff]
      %v745 = vld [vmem:[%s696 + $0x180] sm:$0xff]
      %v746 = vld [vmem:[%s696 + $0x188] sm:$0xff]
      %v747 = vld [vmem:[%s696 + $0x190] sm:$0xff]
      %v748 = vld [vmem:[%s696 + $0x198] sm:$0xff]
      %v749 = vld [vmem:[%s696 + $0x1a0] sm:$0xff]
      %v750 = vld [vmem:[%s696 + $0x1a8] sm:$0xff]
      %v751 = vld [vmem:[%s696 + $0x1b0] sm:$0xff]
      %v752 = vld [vmem:[%s696 + $0x1b8] sm:$0xff]
      %v753 = vld [vmem:[%s696 + $0x1c0] sm:$0xff]
      %v754 = vld [vmem:[%s696 + $0x1c8] sm:$0xff]
      %v755 = vld [vmem:[%s696 + $0x1d0] sm:$0xff]
      %v756 = vld [vmem:[%s696 + $0x1d8] sm:$0xff]
      %v757 = vld [vmem:[%s696 + $0x1e0] sm:$0xff]
      %v758 = vld [vmem:[%s696 + $0x1e8] sm:$0xff]
      %v759 = vld [vmem:[%s696 + $0x1f0] sm:$0xff]
      %v760 = vld [vmem:[%s696 + $0x1f8] sm:$0xff]
      %v761 = vld [vmem:[#allocation3] sm:$0xff]
      %v762 = vld [vmem:[#allocation3 + $0x8] sm:$0xff]
      %v763 = vld [vmem:[#allocation3 + $0x10] sm:$0xff]
      %v764 = vld [vmem:[#allocation3 + $0x18] sm:$0xff]
      %v765 = vld [vmem:[#allocation3 + $0x20] sm:$0xff]
      %v766 = vld [vmem:[#allocation3 + $0x28] sm:$0xff]
      %v767 = vld [vmem:[#allocation3 + $0x30] sm:$0xff]
      %v768 = vld [vmem:[#allocation3 + $0x38] sm:$0xff]
      %v769 = vld [vmem:[#allocation3 + $0x40] sm:$0xff]
      %v770 = vld [vmem:[#allocation3 + $0x48] sm:$0xff]
      %v771 = vld [vmem:[#allocation3 + $0x50] sm:$0xff]
      %v772 = vld [vmem:[#allocation3 + $0x58] sm:$0xff]
      %v773 = vld [vmem:[#allocation3 + $0x60] sm:$0xff]
      %v774 = vld [vmem:[#allocation3 + $0x68] sm:$0xff]
      %v775 = vld [vmem:[#allocation3 + $0x70] sm:$0xff]
      %v776 = vld [vmem:[#allocation3 + $0x78] sm:$0xff]
      %v777 = vld [vmem:[#allocation3 + $0x80] sm:$0xff]
      %v778 = vld [vmem:[#allocation3 + $0x88] sm:$0xff]
      %v779 = vld [vmem:[#allocation3 + $0x90] sm:$0xff]
      %v780 = vld [vmem:[#allocation3 + $0x98] sm:$0xff]
      %v781 = vld [vmem:[#allocation3 + $0xa0] sm:$0xff]
      %v782 = vld [vmem:[#allocation3 + $0xa8] sm:$0xff]
      %v783 = vld [vmem:[#allocation3 + $0xb0] sm:$0xff]
      %v784 = vld [vmem:[#allocation3 + $0xb8] sm:$0xff]
      %v785 = vld [vmem:[#allocation3 + $0xc0] sm:$0xff]
      %v786 = vld [vmem:[#allocation3 + $0xc8] sm:$0xff]
      %v787 = vld [vmem:[#allocation3 + $0xd0] sm:$0xff]
      %v788 = vld [vmem:[#allocation3 + $0xd8] sm:$0xff]
      %v789 = vld [vmem:[#allocation3 + $0xe0] sm:$0xff]
      %v790 = vld [vmem:[#allocation3 + $0xe8] sm:$0xff]
      %v791 = vld [vmem:[#allocation3 + $0xf0] sm:$0xff]
      %v792 = vld [vmem:[#allocation3 + $0xf8] sm:$0xff]
      %v857 = vunpack.c.l.b16 %v697
      %v858 = vunpack.c.h.b16 %v697
      %v859 = vunpack.c.l.b16 %v698
      %v860 = vunpack.c.h.b16 %v698
      %v861 = vunpack.c.l.b16 %v699
      %v862 = vunpack.c.h.b16 %v699
      %v863 = vunpack.c.l.b16 %v700
      %v864 = vunpack.c.h.b16 %v700
      %v865 = vunpack.c.l.b16 %v701
      %v866 = vunpack.c.h.b16 %v701
      %v867 = vunpack.c.l.b16 %v702
      %v868 = vunpack.c.h.b16 %v702
      %v869 = vunpack.c.l.b16 %v703
      %v870 = vunpack.c.h.b16 %v703
      %v871 = vunpack.c.l.b16 %v704
      %v872 = vunpack.c.h.b16 %v704
      %v873 = vunpack.c.l.b16 %v705
      %v874 = vunpack.c.h.b16 %v705
      %v875 = vunpack.c.l.b16 %v706
      %v876 = vunpack.c.h.b16 %v706
      %v877 = vunpack.c.l.b16 %v707
      %v878 = vunpack.c.h.b16 %v707
      %v879 = vunpack.c.l.b16 %v708
      %v880 = vunpack.c.h.b16 %v708
      %v881 = vunpack.c.l.b16 %v709
      %v882 = vunpack.c.h.b16 %v709
      %v883 = vunpack.c.l.b16 %v710
      %v884 = vunpack.c.h.b16 %v710
      %v885 = vunpack.c.l.b16 %v711
      %v886 = vunpack.c.h.b16 %v711
      %v887 = vunpack.c.l.b16 %v712
      %v888 = vunpack.c.h.b16 %v712
      %v889 = vunpack.c.l.b16 %v713
      %v890 = vunpack.c.h.b16 %v713
      %v891 = vunpack.c.l.b16 %v714
      %v892 = vunpack.c.h.b16 %v714
      %v893 = vunpack.c.l.b16 %v715
      %v894 = vunpack.c.h.b16 %v715
      %v895 = vunpack.c.l.b16 %v716
      %v896 = vunpack.c.h.b16 %v716
      %v897 = vunpack.c.l.b16 %v717
      %v898 = vunpack.c.h.b16 %v717
      %v899 = vunpack.c.l.b16 %v718
      %v900 = vunpack.c.h.b16 %v718
      %v901 = vunpack.c.l.b16 %v719
      %v902 = vunpack.c.h.b16 %v719
      %v903 = vunpack.c.l.b16 %v720
      %v904 = vunpack.c.h.b16 %v720
      %v905 = vunpack.c.l.b16 %v721
      %v906 = vunpack.c.h.b16 %v721
      %v907 = vunpack.c.l.b16 %v722
      %v908 = vunpack.c.h.b16 %v722
      %v909 = vunpack.c.l.b16 %v723
      %v910 = vunpack.c.h.b16 %v723
      %v911 = vunpack.c.l.b16 %v724
      %v912 = vunpack.c.h.b16 %v724
      %v913 = vunpack.c.l.b16 %v725
      %v914 = vunpack.c.h.b16 %v725
      %v915 = vunpack.c.l.b16 %v726
      %v916 = vunpack.c.h.b16 %v726
      %v917 = vunpack.c.l.b16 %v727
      %v918 = vunpack.c.h.b16 %v727
      %v919 = vunpack.c.l.b16 %v728
      %v920 = vunpack.c.h.b16 %v728
      %v921 = vunpack.c.l.b16 %v729
      %v922 = vunpack.c.h.b16 %v729
      %v923 = vunpack.c.l.b16 %v730
      %v924 = vunpack.c.h.b16 %v730
      %v925 = vunpack.c.l.b16 %v731
      %v926 = vunpack.c.h.b16 %v731
      %v927 = vunpack.c.l.b16 %v732
      %v928 = vunpack.c.h.b16 %v732
      %v929 = vunpack.c.l.b16 %v733
      %v930 = vunpack.c.h.b16 %v733
      %v931 = vunpack.c.l.b16 %v734
      %v932 = vunpack.c.h.b16 %v734
      %v933 = vunpack.c.l.b16 %v735
      %v934 = vunpack.c.h.b16 %v735
      %v935 = vunpack.c.l.b16 %v736
      %v936 = vunpack.c.h.b16 %v736
      %v937 = vunpack.c.l.b16 %v737
      %v938 = vunpack.c.h.b16 %v737
      %v939 = vunpack.c.l.b16 %v738
      %v940 = vunpack.c.h.b16 %v738
      %v941 = vunpack.c.l.b16 %v739
      %v942 = vunpack.c.h.b16 %v739
      %v943 = vunpack.c.l.b16 %v740
      %v944 = vunpack.c.h.b16 %v740
      %v945 = vunpack.c.l.b16 %v741
      %v946 = vunpack.c.h.b16 %v741
      %v947 = vunpack.c.l.b16 %v742
      %v948 = vunpack.c.h.b16 %v742
      %v949 = vunpack.c.l.b16 %v743
      %v950 = vunpack.c.h.b16 %v743
      %v951 = vunpack.c.l.b16 %v744
      %v952 = vunpack.c.h.b16 %v744
      %v953 = vunpack.c.l.b16 %v745
      %v954 = vunpack.c.h.b16 %v745
      %v955 = vunpack.c.l.b16 %v746
      %v956 = vunpack.c.h.b16 %v746
      %v957 = vunpack.c.l.b16 %v747
      %v958 = vunpack.c.h.b16 %v747
      %v959 = vunpack.c.l.b16 %v748
      %v960 = vunpack.c.h.b16 %v748
      %v961 = vunpack.c.l.b16 %v749
      %v962 = vunpack.c.h.b16 %v749
      %v963 = vunpack.c.l.b16 %v750
      %v964 = vunpack.c.h.b16 %v750
      %v965 = vunpack.c.l.b16 %v751
      %v966 = vunpack.c.h.b16 %v751
      %v967 = vunpack.c.l.b16 %v752
      %v968 = vunpack.c.h.b16 %v752
      %v969 = vunpack.c.l.b16 %v753
      %v970 = vunpack.c.h.b16 %v753
      %v971 = vunpack.c.l.b16 %v754
      %v972 = vunpack.c.h.b16 %v754
      %v973 = vunpack.c.l.b16 %v755
      %v974 = vunpack.c.h.b16 %v755
      %v975 = vunpack.c.l.b16 %v756
      %v976 = vunpack.c.h.b16 %v756
      %v977 = vunpack.c.l.b16 %v757
      %v978 = vunpack.c.h.b16 %v757
      %v979 = vunpack.c.l.b16 %v758
      %v980 = vunpack.c.h.b16 %v758
      %v981 = vunpack.c.l.b16 %v759
      %v982 = vunpack.c.h.b16 %v759
      %v983 = vunpack.c.l.b16 %v760
      %v984 = vunpack.c.h.b16 %v760
      %v985 = vpack.c.b16 %v861, %v857
      %v986 = vpack.c.b16 %v862, %v858
      %v987 = vpack.c.b16 %v863, %v859
      %v988 = vpack.c.b16 %v864, %v860
      %v989 = vpack.c.b16 %v869, %v865
      %v990 = vpack.c.b16 %v870, %v866
      %v991 = vpack.c.b16 %v871, %v867
      %v992 = vpack.c.b16 %v872, %v868
      %v993 = vpack.c.b16 %v877, %v873
      %v994 = vpack.c.b16 %v878, %v874
      %v995 = vpack.c.b16 %v879, %v875
      %v996 = vpack.c.b16 %v880, %v876
      %v997 = vpack.c.b16 %v885, %v881
      %v998 = vpack.c.b16 %v886, %v882
      %v999 = vpack.c.b16 %v887, %v883
      %v1000 = vpack.c.b16 %v888, %v884
      %v1001 = vpack.c.b16 %v893, %v889
      %v1002 = vpack.c.b16 %v894, %v890
      %v1003 = vpack.c.b16 %v895, %v891
      %v1004 = vpack.c.b16 %v896, %v892
      %v1005 = vpack.c.b16 %v901, %v897
      %v1006 = vpack.c.b16 %v902, %v898
      %v1007 = vpack.c.b16 %v903, %v899
      %v1008 = vpack.c.b16 %v904, %v900
      %v1009 = vpack.c.b16 %v909, %v905
      %v1010 = vpack.c.b16 %v910, %v906
      %v1011 = vpack.c.b16 %v911, %v907
      %v1012 = vpack.c.b16 %v912, %v908
      %v1013 = vpack.c.b16 %v917, %v913
      %v1014 = vpack.c.b16 %v918, %v914
      %v1015 = vpack.c.b16 %v919, %v915
      %v1016 = vpack.c.b16 %v920, %v916
      %v1017 = vpack.c.b16 %v925, %v921
      %v1018 = vpack.c.b16 %v926, %v922
      %v1019 = vpack.c.b16 %v927, %v923
      %v1020 = vpack.c.b16 %v928, %v924
      %v1021 = vpack.c.b16 %v933, %v929
      %v1022 = vpack.c.b16 %v934, %v930
      %v1023 = vpack.c.b16 %v935, %v931
      %v1024 = vpack.c.b16 %v936, %v932
      %v1025 = vpack.c.b16 %v941, %v937
      %v1026 = vpack.c.b16 %v942, %v938
      %v1027 = vpack.c.b16 %v943, %v939
      %v1028 = vpack.c.b16 %v944, %v940
      %v1029 = vpack.c.b16 %v949, %v945
      %v1030 = vpack.c.b16 %v950, %v946
      %v1031 = vpack.c.b16 %v951, %v947
      %v1032 = vpack.c.b16 %v952, %v948
      %v1033 = vpack.c.b16 %v957, %v953
      %v1034 = vpack.c.b16 %v958, %v954
      %v1035 = vpack.c.b16 %v959, %v955
      %v1036 = vpack.c.b16 %v960, %v956
      %v1037 = vpack.c.b16 %v965, %v961
      %v1038 = vpack.c.b16 %v966, %v962
      %v1039 = vpack.c.b16 %v967, %v963
      %v1040 = vpack.c.b16 %v968, %v964
      %v1041 = vpack.c.b16 %v973, %v969
      %v1042 = vpack.c.b16 %v974, %v970
      %v1043 = vpack.c.b16 %v975, %v971
      %v1044 = vpack.c.b16 %v976, %v972
      %v1045 = vpack.c.b16 %v981, %v977
      %v1046 = vpack.c.b16 %v982, %v978
      %v1047 = vpack.c.b16 %v983, %v979
      %v1048 = vpack.c.b16 %v984, %v980
      %1113 = vmatprep.subr.bf16.mxu0 0
      %1114 = vmatpush1.bf16.msra.mxu0 %v656
      %1115 = vmatprep.subr.bf16.mxu0 0
      %1116 = vmatpush1.bf16.msra.mxu0 %v657
      %1117 = vmatprep.subr.bf16.mxu0 0
      %1118 = vmatpush1.bf16.msra.mxu0 %v658
      %1119 = vmatprep.subr.bf16.mxu0 0
      %1120 = vmatpush1.bf16.msra.mxu0 %v659
      %1121 = vmatprep.subr.bf16.mxu0 0
      %1122 = vmatpush1.bf16.msra.mxu0 %v660
      %1123 = vmatprep.subr.bf16.mxu0 0
      %1124 = vmatpush1.bf16.msra.mxu0 %v661
      %1125 = vmatprep.subr.bf16.mxu0 0
      %1126 = vmatpush1.bf16.msra.mxu0 %v662
      %1127 = vmatprep.subr.bf16.mxu0 0
      %1128 = vmatpush1.bf16.msra.mxu0 %v663
      %1129 = vmatprep.subr.bf16.mxu0 0
      %1130 = vmatpush1.bf16.msra.mxu0 %v664
      %1131 = vmatprep.subr.bf16.mxu0 0
      %1132 = vmatpush1.bf16.msra.mxu0 %v665
      %1133 = vmatprep.subr.bf16.mxu0 0
      %1134 = vmatpush1.bf16.msra.mxu0 %v666
      %1135 = vmatprep.subr.bf16.mxu0 0
      %1136 = vmatpush1.bf16.msra.mxu0 %v667
      %1137 = vmatprep.subr.bf16.mxu0 0
      %1138 = vmatpush1.bf16.msra.mxu0 %v668
      %1139 = vmatprep.subr.bf16.mxu0 0
      %1140 = vmatpush1.bf16.msra.mxu0 %v669
      %1141 = vmatprep.subr.bf16.mxu0 0
      %1142 = vmatpush1.bf16.msra.mxu0 %v670
      %1143 = vmatprep.subr.bf16.mxu0 0
      %1144 = vmatpush1.bf16.msra.mxu0 %v671
      %1145 = vmatprep.mubr.bf16.mxu0 %v986
      %1146 = vmatmul.mubr.bf16.gmra.mrb[0].mxu0 %v985
      %v1147 = vpop.f32.mrb[0].mxu0
      %v1148 = vadd.f32 0.0, %v1147
      %v1149 = vpop.f32.mrb[0].mxu0
      %v1150 = vpop.f32.mrb[0].mxu0
      %v1151 = vadd.f32 0.0, %v1150
      %v1152 = vpop.f32.mrb[0].mxu0
      %1153 = vmatprep.mubr.bf16.mxu0 %v990
      %1154 = vmatmul.mubr.bf16.gmra.mrb[0].mxu0 %v989
      %v1155 = vpop.f32.mrb[0].mxu0
      %v1156 = vadd.f32 0.0, %v1155
      %v1157 = vpop.f32.mrb[0].mxu0
      %v1158 = vpop.f32.mrb[0].mxu0
      %v1159 = vadd.f32 0.0, %v1158
      %v1160 = vpop.f32.mrb[0].mxu0
      %1161 = vmatprep.mubr.bf16.mxu0 %v994
      %1162 = vmatmul.mubr.bf16.gmra.mrb[0].mxu0 %v993
      %v1163 = vpop.f32.mrb[0].mxu0
      %v1164 = vadd.f32 0.0, %v1163
      %v1165 = vpop.f32.mrb[0].mxu0
      %v1166 = vpop.f32.mrb[0].mxu0
      %v1167 = vadd.f32 0.0, %v1166
      %v1168 = vpop.f32.mrb[0].mxu0
      %1169 = vmatprep.mubr.bf16.mxu0 %v998
      %1170 = vmatmul.mubr.bf16.gmra.mrb[0].mxu0 %v997
      %v1171 = vpop.f32.mrb[0].mxu0
      %v1172 = vadd.f32 0.0, %v1171
      %v1173 = vpop.f32.mrb[0].mxu0
      %v1174 = vpop.f32.mrb[0].mxu0
      %v1175 = vadd.f32 0.0, %v1174
      %v1176 = vpop.f32.mrb[0].mxu0
      %1177 = vmatprep.mubr.bf16.mxu0 %v1002
      %1178 = vmatmul.mubr.bf16.gmra.mrb[0].mxu0 %v1001
      %v1179 = vpop.f32.mrb[0].mxu0
      %v1180 = vadd.f32 0.0, %v1179
      %v1181 = vpop.f32.mrb[0].mxu0
      %v1182 = vpop.f32.mrb[0].mxu0
      %v1183 = vadd.f32 0.0, %v1182
      %v1184 = vpop.f32.mrb[0].mxu0
      %1185 = vmatprep.mubr.bf16.mxu0 %v1006
      %1186 = vmatmul.mubr.bf16.gmra.mrb[0].mxu0 %v1005
      %v1187 = vpop.f32.mrb[0].mxu0
      %v1188 = vadd.f32 0.0, %v1187
      %v1189 = vpop.f32.mrb[0].mxu0
      %v1190 = vpop.f32.mrb[0].mxu0
      %v1191 = vadd.f32 0.0, %v1190
      %v1192 = vpop.f32.mrb[0].mxu0
      %1193 = vmatprep.mubr.bf16.mxu0 %v1010
      %1194 = vmatmul.mubr.bf16.gmra.mrb[0].mxu0 %v1009
      %v1195 = vpop.f32.mrb[0].mxu0
      %v1196 = vadd.f32 0.0, %v1195
      %v1197 = vpop.f32.mrb[0].mxu0
      %v1198 = vpop.f32.mrb[0].mxu0
      %v1199 = vadd.f32 0.0, %v1198
      %v1200 = vpop.f32.mrb[0].mxu0
      %1201 = vmatprep.mubr.bf16.mxu0 %v1014
      %1202 = vmatmul.mubr.bf16.gmra.mrb[0].mxu0 %v1013
      %v1203 = vpop.f32.mrb[0].mxu0
      %v1204 = vadd.f32 0.0, %v1203
      %v1205 = vpop.f32.mrb[0].mxu0
      %v1206 = vpop.f32.mrb[0].mxu0
      %v1207 = vadd.f32 0.0, %v1206
      %v1208 = vpop.f32.mrb[0].mxu0
      %1209 = vmatprep.mubr.bf16.mxu0 %v1018
      %1210 = vmatmul.mubr.bf16.gmra.mrb[0].mxu0 %v1017
      %v1211 = vpop.f32.mrb[0].mxu0
      %v1212 = vadd.f32 0.0, %v1211
      %v1213 = vpop.f32.mrb[0].mxu0
      %v1214 = vpop.f32.mrb[0].mxu0
      %v1215 = vadd.f32 0.0, %v1214
      %v1216 = vpop.f32.mrb[0].mxu0
      %1217 = vmatprep.mubr.bf16.mxu0 %v1022
      %1218 = vmatmul.mubr.bf16.gmra.mrb[0].mxu0 %v1021
      %v1219 = vpop.f32.mrb[0].mxu0
      %v1220 = vadd.f32 0.0, %v1219
      %v1221 = vpop.f32.mrb[0].mxu0
      %v1222 = vpop.f32.mrb[0].mxu0
      %v1223 = vadd.f32 0.0, %v1222
      %v1224 = vpop.f32.mrb[0].mxu0
      %1225 = vmatprep.mubr.bf16.mxu0 %v1026
      %1226 = vmatmul.mubr.bf16.gmra.mrb[0].mxu0 %v1025
      %v1227 = vpop.f32.mrb[0].mxu0
      %v1228 = vadd.f32 0.0, %v1227
      %v1229 = vpop.f32.mrb[0].mxu0
      %v1230 = vpop.f32.mrb[0].mxu0
      %v1231 = vadd.f32 0.0, %v1230
      %v1232 = vpop.f32.mrb[0].mxu0
      %1233 = vmatprep.mubr.bf16.mxu0 %v1030
      %1234 = vmatmul.mubr.bf16.gmra.mrb[0].mxu0 %v1029
      %v1235 = vpop.f32.mrb[0].mxu0
      %v1236 = vadd.f32 0.0, %v1235
      %v1237 = vpop.f32.mrb[0].mxu0
      %v1238 = vpop.f32.mrb[0].mxu0
      %v1239 = vadd.f32 0.0, %v1238
      %v1240 = vpop.f32.mrb[0].mxu0
      %1241 = vmatprep.mubr.bf16.mxu0 %v1034
      %1242 = vmatmul.mubr.bf16.gmra.mrb[0].mxu0 %v1033
      %v1243 = vpop.f32.mrb[0].mxu0
      %v1244 = vadd.f32 0.0, %v1243
      %v1245 = vpop.f32.mrb[0].mxu0
      %v1246 = vpop.f32.mrb[0].mxu0
      %v1247 = vadd.f32 0.0, %v1246
      %v1248 = vpop.f32.mrb[0].mxu0
      %1249 = vmatprep.mubr.bf16.mxu0 %v1038
      %1250 = vmatmul.mubr.bf16.gmra.mrb[0].mxu0 %v1037
      %v1251 = vpop.f32.mrb[0].mxu0
      %v1252 = vadd.f32 0.0, %v1251
      %v1253 = vpop.f32.mrb[0].mxu0
      %v1254 = vpop.f32.mrb[0].mxu0
      %v1255 = vadd.f32 0.0, %v1254
      %v1256 = vpop.f32.mrb[0].mxu0
      %1257 = vmatprep.mubr.bf16.mxu0 %v1042
      %1258 = vmatmul.mubr.bf16.gmra.mrb[0].mxu0 %v1041
      %v1259 = vpop.f32.mrb[0].mxu0
      %v1260 = vadd.f32 0.0, %v1259
      %v1261 = vpop.f32.mrb[0].mxu0
      %v1262 = vpop.f32.mrb[0].mxu0
      %v1263 = vadd.f32 0.0, %v1262
      %v1264 = vpop.f32.mrb[0].mxu0
      %1265 = vmatprep.mubr.bf16.mxu0 %v1046
      %1266 = vmatmul.mubr.bf16.gmra.mrb[0].mxu0 %v1045
      %v1267 = vpop.f32.mrb[0].mxu0
      %v1268 = vadd.f32 0.0, %v1267
      %v1269 = vpop.f32.mrb[0].mxu0
      %v1270 = vpop.f32.mrb[0].mxu0
      %v1271 = vadd.f32 0.0, %v1270
      %v1272 = vpop.f32.mrb[0].mxu0
      %1273 = vdwg.mxu0
      %1274 = vmatprep.subr.bf16.mxu0 0
      %1275 = vmatpush1.bf16.msra.mxu0 %v672
      %1276 = vmatprep.subr.bf16.mxu0 0
      %1277 = vmatpush1.bf16.msra.mxu0 %v673
      %1278 = vmatprep.subr.bf16.mxu0 0
      %1279 = vmatpush1.bf16.msra.mxu0 %v674
      %1280 = vmatprep.subr.bf16.mxu0 0
      %1281 = vmatpush1.bf16.msra.mxu0 %v675
      %1282 = vmatprep.subr.bf16.mxu0 0
      %1283 = vmatpush1.bf16.msra.mxu0 %v676
      %1284 = vmatprep.subr.bf16.mxu0 0
      %1285 = vmatpush1.bf16.msra.mxu0 %v677
      %1286 = vmatprep.subr.bf16.mxu0 0
      %1287 = vmatpush1.bf16.msra.mxu0 %v678
      %1288 = vmatprep.subr.bf16.mxu0 0
      %1289 = vmatpush1.bf16.msra.mxu0 %v679
      %1290 = vmatprep.subr.bf16.mxu0 0
      %1291 = vmatpush1.bf16.msra.mxu0 %v680
      %1292 = vmatprep.subr.bf16.mxu0 0
      %1293 = vmatpush1.bf16.msra.mxu0 %v681
      %1294 = vmatprep.subr.bf16.mxu0 0
      %1295 = vmatpush1.bf16.msra.mxu0 %v682
      %1296 = vmatprep.subr.bf16.mxu0 0
      %1297 = vmatpush1.bf16.msra.mxu0 %v683
      %1298 = vmatprep.subr.bf16.mxu0 0
      %1299 = vmatpush1.bf16.msra.mxu0 %v684
      %1300 = vmatprep.subr.bf16.mxu0 0
      %1301 = vmatpush1.bf16.msra.mxu0 %v685
      %1302 = vmatprep.subr.bf16.mxu0 0
      %1303 = vmatpush1.bf16.msra.mxu0 %v686
      %1304 = vmatprep.subr.bf16.mxu0 0
      %1305 = vmatpush1.bf16.msra.mxu0 %v687
      %1306 = vmatprep.mubr.bf16.mxu0 %v988
      %1307 = vmatmul.mubr.bf16.gmra.mrb[0].mxu0 %v987
      %v1308 = vpop.f32.mrb[0].mxu0
      %v1309 = vadd.f32 %v1148, %v1308
      %v1310 = vpop.f32.mrb[0].mxu0
      %v1311 = vpop.f32.mrb[0].mxu0
      %v1312 = vadd.f32 %v1151, %v1311
      %v1313 = vpop.f32.mrb[0].mxu0
      %1314 = vmatprep.mubr.bf16.mxu0 %v992
      %1315 = vmatmul.mubr.bf16.gmra.mrb[0].mxu0 %v991
      %v1316 = vpop.f32.mrb[0].mxu0
      %v1317 = vadd.f32 %v1156, %v1316
      %v1318 = vpop.f32.mrb[0].mxu0
      %v1319 = vpop.f32.mrb[0].mxu0
      %v1320 = vadd.f32 %v1159, %v1319
      %v1321 = vpop.f32.mrb[0].mxu0
      %1322 = vmatprep.mubr.bf16.mxu0 %v996
      %1323 = vmatmul.mubr.bf16.gmra.mrb[0].mxu0 %v995
      %v1324 = vpop.f32.mrb[0].mxu0
      %v1325 = vadd.f32 %v1164, %v1324
      %v1326 = vpop.f32.mrb[0].mxu0
      %v1327 = vpop.f32.mrb[0].mxu0
      %v1328 = vadd.f32 %v1167, %v1327
      %v1329 = vpop.f32.mrb[0].mxu0
      %1330 = vmatprep.mubr.bf16.mxu0 %v1000
      %1331 = vmatmul.mubr.bf16.gmra.mrb[0].mxu0 %v999
      %v1332 = vpop.f32.mrb[0].mxu0
      %v1333 = vadd.f32 %v1172, %v1332
      %v1334 = vpop.f32.mrb[0].mxu0
      %v1335 = vpop.f32.mrb[0].mxu0
      %v1336 = vadd.f32 %v1175, %v1335
      %v1337 = vpop.f32.mrb[0].mxu0
      %1338 = vmatprep.mubr.bf16.mxu0 %v1004
      %1339 = vmatmul.mubr.bf16.gmra.mrb[0].mxu0 %v1003
      %v1340 = vpop.f32.mrb[0].mxu0
      %v1341 = vadd.f32 %v1180, %v1340
      %v1342 = vpop.f32.mrb[0].mxu0
      %v1343 = vpop.f32.mrb[0].mxu0
      %v1344 = vadd.f32 %v1183, %v1343
      %v1345 = vpop.f32.mrb[0].mxu0
      %1346 = vmatprep.mubr.bf16.mxu0 %v1008
      %1347 = vmatmul.mubr.bf16.gmra.mrb[0].mxu0 %v1007
      %v1348 = vpop.f32.mrb[0].mxu0
      %v1349 = vadd.f32 %v1188, %v1348
      %v1350 = vpop.f32.mrb[0].mxu0
      %v1351 = vpop.f32.mrb[0].mxu0
      %v1352 = vadd.f32 %v1191, %v1351
      %v1353 = vpop.f32.mrb[0].mxu0
      %1354 = vmatprep.mubr.bf16.mxu0 %v1012
      %1355 = vmatmul.mubr.bf16.gmra.mrb[0].mxu0 %v1011
      %v1356 = vpop.f32.mrb[0].mxu0
      %v1357 = vadd.f32 %v1196, %v1356
      %v1358 = vpop.f32.mrb[0].mxu0
      %v1359 = vpop.f32.mrb[0].mxu0
      %v1360 = vadd.f32 %v1199, %v1359
      %v1361 = vpop.f32.mrb[0].mxu0
      %1362 = vmatprep.mubr.bf16.mxu0 %v1016
      %1363 = vmatmul.mubr.bf16.gmra.mrb[0].mxu0 %v1015
      %v1364 = vpop.f32.mrb[0].mxu0
      %v1365 = vadd.f32 %v1204, %v1364
      %v1366 = vpop.f32.mrb[0].mxu0
      %v1367 = vpop.f32.mrb[0].mxu0
      %v1368 = vadd.f32 %v1207, %v1367
      %v1369 = vpop.f32.mrb[0].mxu0
      %1370 = vmatprep.mubr.bf16.mxu0 %v1020
      %1371 = vmatmul.mubr.bf16.gmra.mrb[0].mxu0 %v1019
      %v1372 = vpop.f32.mrb[0].mxu0
      %v1373 = vadd.f32 %v1212, %v1372
      %v1374 = vpop.f32.mrb[0].mxu0
      %v1375 = vpop.f32.mrb[0].mxu0
      %v1376 = vadd.f32 %v1215, %v1375
      %v1377 = vpop.f32.mrb[0].mxu0
      %1378 = vmatprep.mubr.bf16.mxu0 %v1024
      %1379 = vmatmul.mubr.bf16.gmra.mrb[0].mxu0 %v1023
      %v1380 = vpop.f32.mrb[0].mxu0
      %v1381 = vadd.f32 %v1220, %v1380
      %v1382 = vpop.f32.mrb[0].mxu0
      %v1383 = vpop.f32.mrb[0].mxu0
      %v1384 = vadd.f32 %v1223, %v1383
      %v1385 = vpop.f32.mrb[0].mxu0
      %1386 = vmatprep.mubr.bf16.mxu0 %v1028
      %1387 = vmatmul.mubr.bf16.gmra.mrb[0].mxu0 %v1027
      %v1388 = vpop.f32.mrb[0].mxu0
      %v1389 = vadd.f32 %v1228, %v1388
      %v1390 = vpop.f32.mrb[0].mxu0
      %v1391 = vpop.f32.mrb[0].mxu0
      %v1392 = vadd.f32 %v1231, %v1391
      %v1393 = vpop.f32.mrb[0].mxu0
      %1394 = vmatprep.mubr.bf16.mxu0 %v1032
      %1395 = vmatmul.mubr.bf16.gmra.mrb[0].mxu0 %v1031
      %v1396 = vpop.f32.mrb[0].mxu0
      %v1397 = vadd.f32 %v1236, %v1396
      %v1398 = vpop.f32.mrb[0].mxu0
      %v1399 = vpop.f32.mrb[0].mxu0
      %v1400 = vadd.f32 %v1239, %v1399
      %v1401 = vpop.f32.mrb[0].mxu0
      %1402 = vmatprep.mubr.bf16.mxu0 %v1036
      %1403 = vmatmul.mubr.bf16.gmra.mrb[0].mxu0 %v1035
      %v1404 = vpop.f32.mrb[0].mxu0
      %v1405 = vadd.f32 %v1244, %v1404
      %v1406 = vpop.f32.mrb[0].mxu0
      %v1407 = vpop.f32.mrb[0].mxu0
      %v1408 = vadd.f32 %v1247, %v1407
      %v1409 = vpop.f32.mrb[0].mxu0
      %1410 = vmatprep.mubr.bf16.mxu0 %v1040
      %1411 = vmatmul.mubr.bf16.gmra.mrb[0].mxu0 %v1039
      %v1412 = vpop.f32.mrb[0].mxu0
      %v1413 = vadd.f32 %v1252, %v1412
      %v1414 = vpop.f32.mrb[0].mxu0
      %v1415 = vpop.f32.mrb[0].mxu0
      %v1416 = vadd.f32 %v1255, %v1415
      %v1417 = vpop.f32.mrb[0].mxu0
      %1418 = vmatprep.mubr.bf16.mxu0 %v1044
      %1419 = vmatmul.mubr.bf16.gmra.mrb[0].mxu0 %v1043
      %v1420 = vpop.f32.mrb[0].mxu0
      %v1421 = vadd.f32 %v1260, %v1420
      %v1422 = vpop.f32.mrb[0].mxu0
      %v1423 = vpop.f32.mrb[0].mxu0
      %v1424 = vadd.f32 %v1263, %v1423
      %v1425 = vpop.f32.mrb[0].mxu0
      %1426 = vmatprep.mubr.bf16.mxu0 %v1048
      %1427 = vmatmul.mubr.bf16.gmra.mrb[0].mxu0 %v1047
      %v1428 = vpop.f32.mrb[0].mxu0
      %v1429 = vadd.f32 %v1268, %v1428
      %v1430 = vpop.f32.mrb[0].mxu0
      %v1431 = vpop.f32.mrb[0].mxu0
      %v1432 = vadd.f32 %v1271, %v1431
      %v1433 = vpop.f32.mrb[0].mxu0
      %1434 = vdwg.mxu0
      %v1435 = vadd.f32 %v761, %v1309
      %v1436 = vadd.f32 %v762, %v1312
      %v1437 = vadd.f32 %v763, %v1317
      %v1438 = vadd.f32 %v764, %v1320
      %v1439 = vadd.f32 %v765, %v1325
      %v1440 = vadd.f32 %v766, %v1328
      %v1441 = vadd.f32 %v767, %v1333
      %v1442 = vadd.f32 %v768, %v1336
      %v1443 = vadd.f32 %v769, %v1341
      %v1444 = vadd.f32 %v770, %v1344
      %v1445 = vadd.f32 %v771, %v1349
      %v1446 = vadd.f32 %v772, %v1352
      %v1447 = vadd.f32 %v773, %v1357
      %v1448 = vadd.f32 %v774, %v1360
      %v1449 = vadd.f32 %v775, %v1365
      %v1450 = vadd.f32 %v776, %v1368
      %v1451 = vadd.f32 %v777, %v1373
      %v1452 = vadd.f32 %v778, %v1376
      %v1453 = vadd.f32 %v779, %v1381
      %v1454 = vadd.f32 %v780, %v1384
      %v1455 = vadd.f32 %v781, %v1389
      %v1456 = vadd.f32 %v782, %v1392
      %v1457 = vadd.f32 %v783, %v1397
      %v1458 = vadd.f32 %v784, %v1400
      %v1459 = vadd.f32 %v785, %v1405
      %v1460 = vadd.f32 %v786, %v1408
      %v1461 = vadd.f32 %v787, %v1413
      %v1462 = vadd.f32 %v788, %v1416
      %v1463 = vadd.f32 %v789, %v1421
      %v1464 = vadd.f32 %v790, %v1424
      %v1465 = vadd.f32 %v791, %v1429
      %v1466 = vadd.f32 %v792, %v1432
      %1467 = vst [vmem:[#allocation3] sm:$0xff] %v1435
      %1468 = vst [vmem:[#allocation3 + $0x8] sm:$0xff] %v1436
      %1469 = vst [vmem:[#allocation3 + $0x10] sm:$0xff] %v1437
      %1470 = vst [vmem:[#allocation3 + $0x18] sm:$0xff] %v1438
      %1471 = vst [vmem:[#allocation3 + $0x20] sm:$0xff] %v1439
      %1472 = vst [vmem:[#allocation3 + $0x28] sm:$0xff] %v1440
      %1473 = vst [vmem:[#allocation3 + $0x30] sm:$0xff] %v1441
      %1474 = vst [vmem:[#allocation3 + $0x38] sm:$0xff] %v1442
      %1475 = vst [vmem:[#allocation3 + $0x40] sm:$0xff] %v1443
      %1476 = vst [vmem:[#allocation3 + $0x48] sm:$0xff] %v1444
      %1477 = vst [vmem:[#allocation3 + $0x50] sm:$0xff] %v1445
      %1478 = vst [vmem:[#allocation3 + $0x58] sm:$0xff] %v1446
      %1479 = vst [vmem:[#allocation3 + $0x60] sm:$0xff] %v1447
      %1480 = vst [vmem:[#allocation3 + $0x68] sm:$0xff] %v1448
      %1481 = vst [vmem:[#allocation3 + $0x70] sm:$0xff] %v1449
      %1482 = vst [vmem:[#allocation3 + $0x78] sm:$0xff] %v1450
      %1483 = vst [vmem:[#allocation3 + $0x80] sm:$0xff] %v1451
      %1484 = vst [vmem:[#allocation3 + $0x88] sm:$0xff] %v1452
      %1485 = vst [vmem:[#allocation3 + $0x90] sm:$0xff] %v1453
      %1486 = vst [vmem:[#allocation3 + $0x98] sm:$0xff] %v1454
      %1487 = vst [vmem:[#allocation3 + $0xa0] sm:$0xff] %v1455
      %1488 = vst [vmem:[#allocation3 + $0xa8] sm:$0xff] %v1456
      %1489 = vst [vmem:[#allocation3 + $0xb0] sm:$0xff] %v1457
      %1490 = vst [vmem:[#allocation3 + $0xb8] sm:$0xff] %v1458
      %1491 = vst [vmem:[#allocation3 + $0xc0] sm:$0xff] %v1459
      %1492 = vst [vmem:[#allocation3 + $0xc8] sm:$0xff] %v1460
      %1493 = vst [vmem:[#allocation3 + $0xd0] sm:$0xff] %v1461
      %1494 = vst [vmem:[#allocation3 + $0xd8] sm:$0xff] %v1462
      %1495 = vst [vmem:[#allocation3 + $0xe0] sm:$0xff] %v1463
      %1496 = vst [vmem:[#allocation3 + $0xe8] sm:$0xff] %v1464
      %1497 = vst [vmem:[#allocation3 + $0xf0] sm:$0xff] %v1465
      %1498 = vst [vmem:[#allocation3 + $0xf8] sm:$0xff] %v1466
      // Predicated region
      $region45: #{_lambda_.3} parent=35 // pred_check
        %p1499 = pneg %p187
      $region46: #{_lambda_.3} parent=35 // pred_check_branch
        %1501 = sbr.rel (%p1499) target = $region48
      $region47: #{_lambda_.3} parent=35 // pred_region
        %v1502 = vld [vmem:[#allocation3] sm:$0xff]
        %v1503 = vld [vmem:[#allocation3 + $0x8] sm:$0xff]
        %v1504 = vld [vmem:[#allocation3 + $0x10] sm:$0xff]
        %v1505 = vld [vmem:[#allocation3 + $0x18] sm:$0xff]
        %v1506 = vld [vmem:[#allocation3 + $0x20] sm:$0xff]
        %v1507 = vld [vmem:[#allocation3 + $0x28] sm:$0xff]
        %v1508 = vld [vmem:[#allocation3 + $0x30] sm:$0xff]
        %v1509 = vld [vmem:[#allocation3 + $0x38] sm:$0xff]
        %v1510 = vld [vmem:[#allocation3 + $0x40] sm:$0xff]
        %v1511 = vld [vmem:[#allocation3 + $0x48] sm:$0xff]
        %v1512 = vld [vmem:[#allocation3 + $0x50] sm:$0xff]
        %v1513 = vld [vmem:[#allocation3 + $0x58] sm:$0xff]
        %v1514 = vld [vmem:[#allocation3 + $0x60] sm:$0xff]
        %v1515 = vld [vmem:[#allocation3 + $0x68] sm:$0xff]
        %v1516 = vld [vmem:[#allocation3 + $0x70] sm:$0xff]
        %v1517 = vld [vmem:[#allocation3 + $0x78] sm:$0xff]
        %v1518 = vld [vmem:[#allocation3 + $0x80] sm:$0xff]
        %v1519 = vld [vmem:[#allocation3 + $0x88] sm:$0xff]
        %v1520 = vld [vmem:[#allocation3 + $0x90] sm:$0xff]
        %v1521 = vld [vmem:[#allocation3 + $0x98] sm:$0xff]
        %v1522 = vld [vmem:[#allocation3 + $0xa0] sm:$0xff]
        %v1523 = vld [vmem:[#allocation3 + $0xa8] sm:$0xff]
        %v1524 = vld [vmem:[#allocation3 + $0xb0] sm:$0xff]
        %v1525 = vld [vmem:[#allocation3 + $0xb8] sm:$0xff]
        %v1526 = vld [vmem:[#allocation3 + $0xc0] sm:$0xff]
        %v1527 = vld [vmem:[#allocation3 + $0xc8] sm:$0xff]
        %v1528 = vld [vmem:[#allocation3 + $0xd0] sm:$0xff]
        %v1529 = vld [vmem:[#allocation3 + $0xd8] sm:$0xff]
        %v1530 = vld [vmem:[#allocation3 + $0xe0] sm:$0xff]
        %v1531 = vld [vmem:[#allocation3 + $0xe8] sm:$0xff]
        %v1532 = vld [vmem:[#allocation3 + $0xf0] sm:$0xff]
        %v1533 = vld [vmem:[#allocation3 + $0xf8] sm:$0xff]
        %v1534 = vld [vmem:[%s3] sm:$0x1]
        %v1536 = vlaneseq
        %v1537 = vshrl.u32 %v1536, 7
        %v1538 = vsub.s32 0, %v1537
        %v1539 = vrot.slane %v1534, %v1538
        %v1541 = vmul.f32 %v1502, %v1539
        %v1542 = vmul.f32 %v1503, %v1539
        %v1543 = vmul.f32 %v1504, %v1539
        %v1544 = vmul.f32 %v1505, %v1539
        %v1545 = vmul.f32 %v1506, %v1539
        %v1546 = vmul.f32 %v1507, %v1539
        %v1547 = vmul.f32 %v1508, %v1539
        %v1548 = vmul.f32 %v1509, %v1539
        %v1549 = vmul.f32 %v1510, %v1539
        %v1550 = vmul.f32 %v1511, %v1539
        %v1551 = vmul.f32 %v1512, %v1539
        %v1552 = vmul.f32 %v1513, %v1539
        %v1553 = vmul.f32 %v1514, %v1539
        %v1554 = vmul.f32 %v1515, %v1539
        %v1555 = vmul.f32 %v1516, %v1539
        %v1556 = vmul.f32 %v1517, %v1539
        %v1557 = vmul.f32 %v1518, %v1539
        %v1558 = vmul.f32 %v1519, %v1539
        %v1559 = vmul.f32 %v1520, %v1539
        %v1560 = vmul.f32 %v1521, %v1539
        %v1561 = vmul.f32 %v1522, %v1539
        %v1562 = vmul.f32 %v1523, %v1539
        %v1563 = vmul.f32 %v1524, %v1539
        %v1564 = vmul.f32 %v1525, %v1539
        %v1565 = vmul.f32 %v1526, %v1539
        %v1566 = vmul.f32 %v1527, %v1539
        %v1567 = vmul.f32 %v1528, %v1539
        %v1568 = vmul.f32 %v1529, %v1539
        %v1569 = vmul.f32 %v1530, %v1539
        %v1570 = vmul.f32 %v1531, %v1539
        %v1571 = vmul.f32 %v1532, %v1539
        %v1572 = vmul.f32 %v1533, %v1539
        %1573 = vadd.xlane.f32.xlu0 %v1541
        %v1574 = vpop.xlane.xlu0 %1573
        %1575 = vadd.xlane.f32.xlu0 %v1542
        %v1576 = vpop.xlane.xlu0 %1575
        %1577 = vadd.xlane.f32.xlu0 %v1543
        %v1578 = vpop.xlane.xlu0 %1577
        %1579 = vadd.xlane.f32.xlu0 %v1544
        %v1580 = vpop.xlane.xlu0 %1579
        %1581 = vadd.xlane.f32.xlu0 %v1545
        %v1582 = vpop.xlane.xlu0 %1581
        %1583 = vadd.xlane.f32.xlu0 %v1546
        %v1584 = vpop.xlane.xlu0 %1583
        %1585 = vadd.xlane.f32.xlu0 %v1547
        %v1586 = vpop.xlane.xlu0 %1585
        %1587 = vadd.xlane.f32.xlu0 %v1548
        %v1588 = vpop.xlane.xlu0 %1587
        %1589 = vadd.xlane.f32.xlu0 %v1549
        %v1590 = vpop.xlane.xlu0 %1589
        %1591 = vadd.xlane.f32.xlu0 %v1550
        %v1592 = vpop.xlane.xlu0 %1591
        %1593 = vadd.xlane.f32.xlu0 %v1551
        %v1594 = vpop.xlane.xlu0 %1593
        %1595 = vadd.xlane.f32.xlu0 %v1552
        %v1596 = vpop.xlane.xlu0 %1595
        %1597 = vadd.xlane.f32.xlu0 %v1553
        %v1598 = vpop.xlane.xlu0 %1597
        %1599 = vadd.xlane.f32.xlu0 %v1554
        %v1600 = vpop.xlane.xlu0 %1599
        %1601 = vadd.xlane.f32.xlu0 %v1555
        %v1602 = vpop.xlane.xlu0 %1601
        %1603 = vadd.xlane.f32.xlu0 %v1556
        %v1604 = vpop.xlane.xlu0 %1603
        %1605 = vadd.xlane.f32.xlu0 %v1557
        %v1606 = vpop.xlane.xlu0 %1605
        %1607 = vadd.xlane.f32.xlu0 %v1558
        %v1608 = vpop.xlane.xlu0 %1607
        %1609 = vadd.xlane.f32.xlu0 %v1559
        %v1610 = vpop.xlane.xlu0 %1609
        %1611 = vadd.xlane.f32.xlu0 %v1560
        %v1612 = vpop.xlane.xlu0 %1611
        %1613 = vadd.xlane.f32.xlu0 %v1561
        %v1614 = vpop.xlane.xlu0 %1613
        %1615 = vadd.xlane.f32.xlu0 %v1562
        %v1616 = vpop.xlane.xlu0 %1615
        %1617 = vadd.xlane.f32.xlu0 %v1563
        %v1618 = vpop.xlane.xlu0 %1617
        %1619 = vadd.xlane.f32.xlu0 %v1564
        %v1620 = vpop.xlane.xlu0 %1619
        %1621 = vadd.xlane.f32.xlu0 %v1565
        %v1622 = vpop.xlane.xlu0 %1621
        %1623 = vadd.xlane.f32.xlu0 %v1566
        %v1624 = vpop.xlane.xlu0 %1623
        %1625 = vadd.xlane.f32.xlu0 %v1567
        %v1626 = vpop.xlane.xlu0 %1625
        %1627 = vadd.xlane.f32.xlu0 %v1568
        %v1628 = vpop.xlane.xlu0 %1627
        %1629 = vadd.xlane.f32.xlu0 %v1569
        %v1630 = vpop.xlane.xlu0 %1629
        %1631 = vadd.xlane.f32.xlu0 %v1570
        %v1632 = vpop.xlane.xlu0 %1631
        %1633 = vadd.xlane.f32.xlu0 %v1571
        %v1634 = vpop.xlane.xlu0 %1633
        %1635 = vadd.xlane.f32.xlu0 %v1572
        %v1636 = vpop.xlane.xlu0 %1635
        %v1637 = vxor.u32 %v1574, 2147483648
        %v1638 = vxor.u32 %v1576, 2147483648
        %v1639 = vxor.u32 %v1578, 2147483648
        %v1640 = vxor.u32 %v1580, 2147483648
        %v1641 = vxor.u32 %v1582, 2147483648
        %v1642 = vxor.u32 %v1584, 2147483648
        %v1643 = vxor.u32 %v1586, 2147483648
        %v1644 = vxor.u32 %v1588, 2147483648
        %v1645 = vxor.u32 %v1590, 2147483648
        %v1646 = vxor.u32 %v1592, 2147483648
        %v1647 = vxor.u32 %v1594, 2147483648
        %v1648 = vxor.u32 %v1596, 2147483648
        %v1649 = vxor.u32 %v1598, 2147483648
        %v1650 = vxor.u32 %v1600, 2147483648
        %v1651 = vxor.u32 %v1602, 2147483648
        %v1652 = vxor.u32 %v1604, 2147483648
        %v1653 = vxor.u32 %v1606, 2147483648
        %v1654 = vxor.u32 %v1608, 2147483648
        %v1655 = vxor.u32 %v1610, 2147483648
        %v1656 = vxor.u32 %v1612, 2147483648
        %v1657 = vxor.u32 %v1614, 2147483648
        %v1658 = vxor.u32 %v1616, 2147483648
        %v1659 = vxor.u32 %v1618, 2147483648
        %v1660 = vxor.u32 %v1620, 2147483648
        %v1661 = vxor.u32 %v1622, 2147483648
        %v1662 = vxor.u32 %v1624, 2147483648
        %v1663 = vxor.u32 %v1626, 2147483648
        %v1664 = vxor.u32 %v1628, 2147483648
        %v1665 = vxor.u32 %v1630, 2147483648
        %v1666 = vxor.u32 %v1632, 2147483648
        %v1667 = vxor.u32 %v1634, 2147483648
        %v1668 = vxor.u32 %v1636, 2147483648
        %v1669 = vmul.f32 %v1637, 1.442695
        %v1670 = vpow.pop %v1669
        %v1671 = vmul.f32 %v1638, 1.442695
        %v1672 = vpow.pop %v1671
        %v1673 = vmul.f32 %v1639, 1.442695
        %v1674 = vpow.pop %v1673
        %v1675 = vmul.f32 %v1640, 1.442695
        %v1676 = vpow.pop %v1675
        %v1677 = vmul.f32 %v1641, 1.442695
        %v1678 = vpow.pop %v1677
        %v1679 = vmul.f32 %v1642, 1.442695
        %v1680 = vpow.pop %v1679
        %v1681 = vmul.f32 %v1643, 1.442695
        %v1682 = vpow.pop %v1681
        %v1683 = vmul.f32 %v1644, 1.442695
        %v1684 = vpow.pop %v1683
        %v1685 = vmul.f32 %v1645, 1.442695
        %v1686 = vpow.pop %v1685
        %v1687 = vmul.f32 %v1646, 1.442695
        %v1688 = vpow.pop %v1687
        %v1689 = vmul.f32 %v1647, 1.442695
        %v1690 = vpow.pop %v1689
        %v1691 = vmul.f32 %v1648, 1.442695
        %v1692 = vpow.pop %v1691
        %v1693 = vmul.f32 %v1649, 1.442695
        %v1694 = vpow.pop %v1693
        %v1695 = vmul.f32 %v1650, 1.442695
        %v1696 = vpow.pop %v1695
        %v1697 = vmul.f32 %v1651, 1.442695
        %v1698 = vpow.pop %v1697
        %v1699 = vmul.f32 %v1652, 1.442695
        %v1700 = vpow.pop %v1699
        %v1701 = vmul.f32 %v1653, 1.442695
        %v1702 = vpow.pop %v1701
        %v1703 = vmul.f32 %v1654, 1.442695
        %v1704 = vpow.pop %v1703
        %v1705 = vmul.f32 %v1655, 1.442695
        %v1706 = vpow.pop %v1705
        %v1707 = vmul.f32 %v1656, 1.442695
        %v1708 = vpow.pop %v1707
        %v1709 = vmul.f32 %v1657, 1.442695
        %v1710 = vpow.pop %v1709
        %v1711 = vmul.f32 %v1658, 1.442695
        %v1712 = vpow.pop %v1711
        %v1713 = vmul.f32 %v1659, 1.442695
        %v1714 = vpow.pop %v1713
        %v1715 = vmul.f32 %v1660, 1.442695
        %v1716 = vpow.pop %v1715
        %v1717 = vmul.f32 %v1661, 1.442695
        %v1718 = vpow.pop %v1717
        %v1719 = vmul.f32 %v1662, 1.442695
        %v1720 = vpow.pop %v1719
        %v1721 = vmul.f32 %v1663, 1.442695
        %v1722 = vpow.pop %v1721
        %v1723 = vmul.f32 %v1664, 1.442695
        %v1724 = vpow.pop %v1723
        %v1725 = vmul.f32 %v1665, 1.442695
        %v1726 = vpow.pop %v1725
        %v1727 = vmul.f32 %v1666, 1.442695
        %v1728 = vpow.pop %v1727
        %v1729 = vmul.f32 %v1667, 1.442695
        %v1730 = vpow.pop %v1729
        %v1731 = vmul.f32 %v1668, 1.442695
        %v1732 = vpow.pop %v1731
        %v1733 = vadd.f32 %v1670, 1.0
        %v1734 = vadd.f32 %v1672, 1.0
        %v1735 = vadd.f32 %v1674, 1.0
        %v1736 = vadd.f32 %v1676, 1.0
        %v1737 = vadd.f32 %v1678, 1.0
        %v1738 = vadd.f32 %v1680, 1.0
        %v1739 = vadd.f32 %v1682, 1.0
        %v1740 = vadd.f32 %v1684, 1.0
        %v1741 = vadd.f32 %v1686, 1.0
        %v1742 = vadd.f32 %v1688, 1.0
        %v1743 = vadd.f32 %v1690, 1.0
        %v1744 = vadd.f32 %v1692, 1.0
        %v1745 = vadd.f32 %v1694, 1.0
        %v1746 = vadd.f32 %v1696, 1.0
        %v1747 = vadd.f32 %v1698, 1.0
        %v1748 = vadd.f32 %v1700, 1.0
        %v1749 = vadd.f32 %v1702, 1.0
        %v1750 = vadd.f32 %v1704, 1.0
        %v1751 = vadd.f32 %v1706, 1.0
        %v1752 = vadd.f32 %v1708, 1.0
        %v1753 = vadd.f32 %v1710, 1.0
        %v1754 = vadd.f32 %v1712, 1.0
        %v1755 = vadd.f32 %v1714, 1.0
        %v1756 = vadd.f32 %v1716, 1.0
        %v1757 = vadd.f32 %v1718, 1.0
        %v1758 = vadd.f32 %v1720, 1.0
        %v1759 = vadd.f32 %v1722, 1.0
        %v1760 = vadd.f32 %v1724, 1.0
        %v1761 = vadd.f32 %v1726, 1.0
        %v1762 = vadd.f32 %v1728, 1.0
        %v1763 = vadd.f32 %v1730, 1.0
        %v1764 = vadd.f32 %v1732, 1.0
        %v1765 = vrcp.pop %v1733
        %v1766 = vmul.f32 1.0, %v1765
        %v1767 = vrcp.pop %v1734
        %v1768 = vmul.f32 1.0, %v1767
        %v1769 = vrcp.pop %v1735
        %v1770 = vmul.f32 1.0, %v1769
        %v1771 = vrcp.pop %v1736
        %v1772 = vmul.f32 1.0, %v1771
        %v1773 = vrcp.pop %v1737
        %v1774 = vmul.f32 1.0, %v1773
        %v1775 = vrcp.pop %v1738
        %v1776 = vmul.f32 1.0, %v1775
        %v1777 = vrcp.pop %v1739
        %v1778 = vmul.f32 1.0, %v1777
        %v1779 = vrcp.pop %v1740
        %v1780 = vmul.f32 1.0, %v1779
        %v1781 = vrcp.pop %v1741
        %v1782 = vmul.f32 1.0, %v1781
        %v1783 = vrcp.pop %v1742
        %v1784 = vmul.f32 1.0, %v1783
        %v1785 = vrcp.pop %v1743
        %v1786 = vmul.f32 1.0, %v1785
        %v1787 = vrcp.pop %v1744
        %v1788 = vmul.f32 1.0, %v1787
        %v1789 = vrcp.pop %v1745
        %v1790 = vmul.f32 1.0, %v1789
        %v1791 = vrcp.pop %v1746
        %v1792 = vmul.f32 1.0, %v1791
        %v1793 = vrcp.pop %v1747
        %v1794 = vmul.f32 1.0, %v1793
        %v1795 = vrcp.pop %v1748
        %v1796 = vmul.f32 1.0, %v1795
        %v1797 = vrcp.pop %v1749
        %v1798 = vmul.f32 1.0, %v1797
        %v1799 = vrcp.pop %v1750
        %v1800 = vmul.f32 1.0, %v1799
        %v1801 = vrcp.pop %v1751
        %v1802 = vmul.f32 1.0, %v1801
        %v1803 = vrcp.pop %v1752
        %v1804 = vmul.f32 1.0, %v1803
        %v1805 = vrcp.pop %v1753
        %v1806 = vmul.f32 1.0, %v1805
        %v1807 = vrcp.pop %v1754
        %v1808 = vmul.f32 1.0, %v1807
        %v1809 = vrcp.pop %v1755
        %v1810 = vmul.f32 1.0, %v1809
        %v1811 = vrcp.pop %v1756
        %v1812 = vmul.f32 1.0, %v1811
        %v1813 = vrcp.pop %v1757
        %v1814 = vmul.f32 1.0, %v1813
        %v1815 = vrcp.pop %v1758
        %v1816 = vmul.f32 1.0, %v1815
        %v1817 = vrcp.pop %v1759
        %v1818 = vmul.f32 1.0, %v1817
        %v1819 = vrcp.pop %v1760
        %v1820 = vmul.f32 1.0, %v1819
        %v1821 = vrcp.pop %v1761
        %v1822 = vmul.f32 1.0, %v1821
        %v1823 = vrcp.pop %v1762
        %v1824 = vmul.f32 1.0, %v1823
        %v1825 = vrcp.pop %v1763
        %v1826 = vmul.f32 1.0, %v1825
        %v1827 = vrcp.pop %v1764
        %v1828 = vmul.f32 1.0, %v1827
        %s1829 = scalar_lea.vmem %s4, %s688
        %v1830 = vld [vmem:[%s1829] sm:$0xff]
        %v1831 = vld [vmem:[%s1829 + $0x8] sm:$0xff]
        %v1832 = vld [vmem:[%s1829 + $0x10] sm:$0xff]
        %v1833 = vld [vmem:[%s1829 + $0x18] sm:$0xff]
        %v1834 = vld [vmem:[%s1829 + $0x20] sm:$0xff]
        %v1835 = vld [vmem:[%s1829 + $0x28] sm:$0xff]
        %v1836 = vld [vmem:[%s1829 + $0x30] sm:$0xff]
        %v1837 = vld [vmem:[%s1829 + $0x38] sm:$0xff]
        %v1838 = vld [vmem:[%s1829 + $0x40] sm:$0xff]
        %v1839 = vld [vmem:[%s1829 + $0x48] sm:$0xff]
        %v1840 = vld [vmem:[%s1829 + $0x50] sm:$0xff]
        %v1841 = vld [vmem:[%s1829 + $0x58] sm:$0xff]
        %v1842 = vld [vmem:[%s1829 + $0x60] sm:$0xff]
        %v1843 = vld [vmem:[%s1829 + $0x68] sm:$0xff]
        %v1844 = vld [vmem:[%s1829 + $0x70] sm:$0xff]
        %v1845 = vld [vmem:[%s1829 + $0x78] sm:$0xff]
        %v1846 = vld [vmem:[%s1829 + $0x80] sm:$0xff]
        %v1847 = vld [vmem:[%s1829 + $0x88] sm:$0xff]
        %v1848 = vld [vmem:[%s1829 + $0x90] sm:$0xff]
        %v1849 = vld [vmem:[%s1829 + $0x98] sm:$0xff]
        %v1850 = vld [vmem:[%s1829 + $0xa0] sm:$0xff]
        %v1851 = vld [vmem:[%s1829 + $0xa8] sm:$0xff]
        %v1852 = vld [vmem:[%s1829 + $0xb0] sm:$0xff]
        %v1853 = vld [vmem:[%s1829 + $0xb8] sm:$0xff]
        %v1854 = vld [vmem:[%s1829 + $0xc0] sm:$0xff]
        %v1855 = vld [vmem:[%s1829 + $0xc8] sm:$0xff]
        %v1856 = vld [vmem:[%s1829 + $0xd0] sm:$0xff]
        %v1857 = vld [vmem:[%s1829 + $0xd8] sm:$0xff]
        %v1858 = vld [vmem:[%s1829 + $0xe0] sm:$0xff]
        %v1859 = vld [vmem:[%s1829 + $0xe8] sm:$0xff]
        %v1860 = vld [vmem:[%s1829 + $0xf0] sm:$0xff]
        %v1861 = vld [vmem:[%s1829 + $0xf8] sm:$0xff]
        %v1862 = vmul.f32 %v1766, %v1502
        %v1863 = vmul.f32 %v1768, %v1503
        %v1864 = vmul.f32 %v1770, %v1504
        %v1865 = vmul.f32 %v1772, %v1505
        %v1866 = vmul.f32 %v1774, %v1506
        %v1867 = vmul.f32 %v1776, %v1507
        %v1868 = vmul.f32 %v1778, %v1508
        %v1869 = vmul.f32 %v1780, %v1509
        %v1870 = vmul.f32 %v1782, %v1510
        %v1871 = vmul.f32 %v1784, %v1511
        %v1872 = vmul.f32 %v1786, %v1512
        %v1873 = vmul.f32 %v1788, %v1513
        %v1874 = vmul.f32 %v1790, %v1514
        %v1875 = vmul.f32 %v1792, %v1515
        %v1876 = vmul.f32 %v1794, %v1516
        %v1877 = vmul.f32 %v1796, %v1517
        %v1878 = vmul.f32 %v1798, %v1518
        %v1879 = vmul.f32 %v1800, %v1519
        %v1880 = vmul.f32 %v1802, %v1520
        %v1881 = vmul.f32 %v1804, %v1521
        %v1882 = vmul.f32 %v1806, %v1522
        %v1883 = vmul.f32 %v1808, %v1523
        %v1884 = vmul.f32 %v1810, %v1524
        %v1885 = vmul.f32 %v1812, %v1525
        %v1886 = vmul.f32 %v1814, %v1526
        %v1887 = vmul.f32 %v1816, %v1527
        %v1888 = vmul.f32 %v1818, %v1528
        %v1889 = vmul.f32 %v1820, %v1529
        %v1890 = vmul.f32 %v1822, %v1530
        %v1891 = vmul.f32 %v1824, %v1531
        %v1892 = vmul.f32 %v1826, %v1532
        %v1893 = vmul.f32 %v1828, %v1533
        %v1894 = vadd.f32 %v1830, %v1862
        %v1895 = vadd.f32 %v1831, %v1863
        %v1896 = vadd.f32 %v1832, %v1864
        %v1897 = vadd.f32 %v1833, %v1865
        %v1898 = vadd.f32 %v1834, %v1866
        %v1899 = vadd.f32 %v1835, %v1867
        %v1900 = vadd.f32 %v1836, %v1868
        %v1901 = vadd.f32 %v1837, %v1869
        %v1902 = vadd.f32 %v1838, %v1870
        %v1903 = vadd.f32 %v1839, %v1871
        %v1904 = vadd.f32 %v1840, %v1872
        %v1905 = vadd.f32 %v1841, %v1873
        %v1906 = vadd.f32 %v1842, %v1874
        %v1907 = vadd.f32 %v1843, %v1875
        %v1908 = vadd.f32 %v1844, %v1876
        %v1909 = vadd.f32 %v1845, %v1877
        %v1910 = vadd.f32 %v1846, %v1878
        %v1911 = vadd.f32 %v1847, %v1879
        %v1912 = vadd.f32 %v1848, %v1880
        %v1913 = vadd.f32 %v1849, %v1881
        %v1914 = vadd.f32 %v1850, %v1882
        %v1915 = vadd.f32 %v1851, %v1883
        %v1916 = vadd.f32 %v1852, %v1884
        %v1917 = vadd.f32 %v1853, %v1885
        %v1918 = vadd.f32 %v1854, %v1886
        %v1919 = vadd.f32 %v1855, %v1887
        %v1920 = vadd.f32 %v1856, %v1888
        %v1921 = vadd.f32 %v1857, %v1889
        %v1922 = vadd.f32 %v1858, %v1890
        %v1923 = vadd.f32 %v1859, %v1891
        %v1924 = vadd.f32 %v1860, %v1892
        %v1925 = vadd.f32 %v1861, %v1893
        %1926 = vst [vmem:[%s1829] sm:$0xff] %v1894
        %1927 = vst [vmem:[%s1829 + $0x8] sm:$0xff] %v1895
        %1928 = vst [vmem:[%s1829 + $0x10] sm:$0xff] %v1896
        %1929 = vst [vmem:[%s1829 + $0x18] sm:$0xff] %v1897
        %1930 = vst [vmem:[%s1829 + $0x20] sm:$0xff] %v1898
        %1931 = vst [vmem:[%s1829 + $0x28] sm:$0xff] %v1899
        %1932 = vst [vmem:[%s1829 + $0x30] sm:$0xff] %v1900
        %1933 = vst [vmem:[%s1829 + $0x38] sm:$0xff] %v1901
        %1934 = vst [vmem:[%s1829 + $0x40] sm:$0xff] %v1902
        %1935 = vst [vmem:[%s1829 + $0x48] sm:$0xff] %v1903
        %1936 = vst [vmem:[%s1829 + $0x50] sm:$0xff] %v1904
        %1937 = vst [vmem:[%s1829 + $0x58] sm:$0xff] %v1905
        %1938 = vst [vmem:[%s1829 + $0x60] sm:$0xff] %v1906
        %1939 = vst [vmem:[%s1829 + $0x68] sm:$0xff] %v1907
        %1940 = vst [vmem:[%s1829 + $0x70] sm:$0xff] %v1908
        %1941 = vst [vmem:[%s1829 + $0x78] sm:$0xff] %v1909
        %1942 = vst [vmem:[%s1829 + $0x80] sm:$0xff] %v1910
        %1943 = vst [vmem:[%s1829 + $0x88] sm:$0xff] %v1911
        %1944 = vst [vmem:[%s1829 + $0x90] sm:$0xff] %v1912
        %1945 = vst [vmem:[%s1829 + $0x98] sm:$0xff] %v1913
        %1946 = vst [vmem:[%s1829 + $0xa0] sm:$0xff] %v1914
        %1947 = vst [vmem:[%s1829 + $0xa8] sm:$0xff] %v1915
        %1948 = vst [vmem:[%s1829 + $0xb0] sm:$0xff] %v1916
        %1949 = vst [vmem:[%s1829 + $0xb8] sm:$0xff] %v1917
        %1950 = vst [vmem:[%s1829 + $0xc0] sm:$0xff] %v1918
        %1951 = vst [vmem:[%s1829 + $0xc8] sm:$0xff] %v1919
        %1952 = vst [vmem:[%s1829 + $0xd0] sm:$0xff] %v1920
        %1953 = vst [vmem:[%s1829 + $0xd8] sm:$0xff] %v1921
        %1954 = vst [vmem:[%s1829 + $0xe0] sm:$0xff] %v1922
        %1955 = vst [vmem:[%s1829 + $0xe8] sm:$0xff] %v1923
        %1956 = vst [vmem:[%s1829 + $0xf0] sm:$0xff] %v1924
        %1957 = vst [vmem:[%s1829 + $0xf8] sm:$0xff] %v1925
        %p1958 = scmp.lt.s32.totalorder %s20, 3
        // Predicated region
        $region49: #{_lambda_.3} parent=47 // pred_check
          %p1959 = pneg %p1958
        $region50: #{_lambda_.3} parent=47 // pred_check_branch
          %1961 = sbr.rel (%p1959) target = $region52
        $region51: #{_lambda_.3} parent=47 // pred_region
          %s1962 = ssub.s32 1, %s648
          %s1963 = smul.u32 %s1962, 512
          %s1964 = sadd.s32 %s1963, %s688
          %v1965 = vpack.c.bf16 %v1503, %v1502
          %v1966 = vpack.c.bf16 %v1505, %v1504
          %v1967 = vpack.c.bf16 %v1507, %v1506
          %v1968 = vpack.c.bf16 %v1509, %v1508
          %v1969 = vpack.c.bf16 %v1511, %v1510
          %v1970 = vpack.c.bf16 %v1513, %v1512
          %v1971 = vpack.c.bf16 %v1515, %v1514
          %v1972 = vpack.c.bf16 %v1517, %v1516
          %v1973 = vpack.c.bf16 %v1519, %v1518
          %v1974 = vpack.c.bf16 %v1521, %v1520
          %v1975 = vpack.c.bf16 %v1523, %v1522
          %v1976 = vpack.c.bf16 %v1525, %v1524
          %v1977 = vpack.c.bf16 %v1527, %v1526
          %v1978 = vpack.c.bf16 %v1529, %v1528
          %v1979 = vpack.c.bf16 %v1531, %v1530
          %v1980 = vpack.c.bf16 %v1533, %v1532
          %s1981 = sshra.s32 %s1964, 4
          %s1982 = sand.u32 %s1964, 15
          %s1983 = smul.addr %s1981, 8
          %s1984 = scalar_lea.vmem [#allocation2], %s1983
          %1985 = vst [vmem:[%s1984] sm:$0xff] %v1965
          %1986 = vst [vmem:[%s1984 + $0x8] sm:$0xff] %v1966
          %1987 = vst [vmem:[%s1984 + $0x10] sm:$0xff] %v1967
          %1988 = vst [vmem:[%s1984 + $0x18] sm:$0xff] %v1968
          %1989 = vst [vmem:[%s1984 + $0x20] sm:$0xff] %v1969
          %1990 = vst [vmem:[%s1984 + $0x28] sm:$0xff] %v1970
          %1991 = vst [vmem:[%s1984 + $0x30] sm:$0xff] %v1971
          %1992 = vst [vmem:[%s1984 + $0x38] sm:$0xff] %v1972
          %1993 = vst [vmem:[%s1984 + $0x40] sm:$0xff] %v1973
          %1994 = vst [vmem:[%s1984 + $0x48] sm:$0xff] %v1974
          %1995 = vst [vmem:[%s1984 + $0x50] sm:$0xff] %v1975
          %1996 = vst [vmem:[%s1984 + $0x58] sm:$0xff] %v1976
          %1997 = vst [vmem:[%s1984 + $0x60] sm:$0xff] %v1977
          %1998 = vst [vmem:[%s1984 + $0x68] sm:$0xff] %v1978
          %1999 = vst [vmem:[%s1984 + $0x70] sm:$0xff] %v1979
          %2000 = vst [vmem:[%s1984 + $0x78] sm:$0xff] %v1980
        $region52: #{_lambda_.3} parent=47 // pred_fallthru
          _
      $region48: #{_lambda_.3} parent=35 // pred_fallthru
        _
      // Predicated region
      $region53: #{_lambda_.3} parent=35 // pred_check
        %p2001 = pneg %p131
      $region54: #{_lambda_.3} parent=35 // pred_check_branch
        %2003 = sbr.rel (%p2001) target = $region56
      $region55: #{_lambda_.3} parent=35 // pred_region
        _
      $region56: #{_lambda_.3} parent=35 // pred_fallthru
        _
      // Predicated region
      $region57: #{_lambda_.3} parent=35 // pred_check
        %p2004 = pneg %p131
      $region58: #{_lambda_.3} parent=35 // pred_check_branch
        %2006 = sbr.rel (%p2004) target = $region60
      $region59: #{_lambda_.3} parent=35 // pred_region
        _
      $region60: #{_lambda_.3} parent=35 // pred_fallthru
        _
    $region36: #{_lambda_.3} parent=5 // pred_fallthru
      _
    %p2007 = scmp.le.s32.totalorder 2, %s10
    // Predicated region
    $region61: #{_lambda_.3} parent=5 // pred_check
      %p2008 = pneg %p2007
    $region62: #{_lambda_.3} parent=5 // pred_check_branch
      %2010 = sbr.rel (%p2008) target = $region64
    $region63: #{_lambda_.3} parent=5 // pred_region
      %s2011 = ssub.s32 %s10, 2
    $region64: #{_lambda_.3} parent=5 // pred_fallthru
      _
  $region6: #{_lambda_.3} parent=0 // loop_footer
    %s14 = sadd.s32 1, %s10
  $region7: #{_lambda_.3} parent=0 // loop_footer_branch
    %9 = sbr.rel target = $region3
  $region8: #{_lambda_.3} parent=0 // loop_exit
    _

</llo_original>
